<compile_context>
chip_gen: v7x
topology: tpu7x:2x2x1
jax: 0.10.0
libtpu: 0.0.40
codegen_flags: <defaults>
</compile_context>

<pallas_src>
import jax
import jax.numpy as jnp
from jax.experimental import pallas as pl
from jax.experimental.pallas import tpu as pltpu


def _ceil_div(a, b):
    return -(-a // b)


def _round_up(a, b):
    return _ceil_div(a, b) * b


def _make_kernel(Qd, Qh, Qw, Td, Ho, Wo_p, Cg_p, Cout_p):
    """Per-tap MXU accumulation over one halo'd D-slab (no im2col buffer)."""
    Mt = Td * Ho * Wo_p

    def kernel(x_ref, w_ref, b_ref, o_ref):
        # x_ref: (1, Td+Qd-1, Hq, Wq, Cg_p)  stride-folded, channels-last slab
        # w_ref: (T, Cg_p, Cout_p)           per-tap weight slices (zero-padded)
        # b_ref: (1, Cout_p)                 f32 bias
        # o_ref: (1, Mt, Cout_p)             lane-dense output tile
        acc = None
        tap = 0
        for qj in range(Qd):
            for qi in range(Qh):
                for qk in range(Qw):
                    patch = x_ref[0, qj:qj + Td, qi:qi + Ho, qk:qk + Wo_p, :]
                    patch = patch.reshape(Mt, Cg_p)
                    contrib = jnp.dot(patch, w_ref[tap],
                                      preferred_element_type=jnp.float32)
                    acc = contrib if acc is None else acc + contrib
                    tap += 1
        o_ref[0] = (acc + b_ref[...]).astype(o_ref.dtype)

    return kernel


def _my_conv3d(x, weight, bias, stride, padding, compute_dtype=jnp.float32):
    """Forward of MyConv3d.

    x:       (N, Cin, D, H, W)
    weight:  (Cout, Cin, kd, kh, kw)
    bias:    (Cout,)
    stride:  (d_stride, h_stride, w_stride)
    padding: (pad_fwd, pad_back, pad_up, pad_down, pad_left, pad_right)
    returns  (N, Cout, Dout, Hout, Wout) float32
    """
    N, Cin, D, H, W = x.shape
    Cout, Cin_w, kd, kh, kw = weight.shape
    assert Cin == Cin_w
    ds, hs, ws = stride
    pf, pb, pu, pdn, plf, prt = padding

    Dp, Hp, Wp = D + pf + pb, H + pu + pdn, W + plf + prt
    Do = (Dp - kd) // ds + 1
    Ho = (Hp - kh) // hs + 1
    Wo = (Wp - kw) // ws + 1

    # Stride-phase decomposition: kernel tap j = ds*qj + rd (qj depth-group,
    # rd phase folded into channels), likewise for h/w.
    Qd, Qh, Qw = _ceil_div(kd, ds), _ceil_div(kh, hs), _ceil_div(kw, ws)
    T = Qd * Qh * Qw
    Cg = ds * hs * ws * Cin
    Cg_p = _round_up(Cg, 128)                       # lane-aligned K slices
    Cout_p = _round_up(Cout, 128) if Cout <= 128 else _round_up(Cout, 256)
    Wo_p = _round_up(Wo, 8)                         # sublane-aligned windows
    M2 = Ho * Wo_p

    itm = jnp.dtype(compute_dtype).itemsize

    Hq = max(_ceil_div(Hp, hs), Ho + Qh - 1)
    Wq = max(_ceil_div(Wp, ws), Wo_p + Qw - 1)

    # ---- Choose the depth-tile Td: ~512 output rows per tile, >=4 grid steps
    # when shapes allow, and a conservative VMEM budget. ----------------------
    Td = max(1, min(Do, max(1, 512 // max(M2, 1))))
    while Td > 1 and N * _ceil_div(Do, Td) < 4:
        Td = max(1, Td // 2)

    def vmem_need(td):
        slab = (td + Qd - 1) * Hq * Wq * Cg_p * itm      # input (x2 buffers)
        otile = td * M2 * Cout_p * 4                     # output (x2) + acc
        wbytes = T * Cg_p * Cout_p * itm                 # single-buffered
        return 2 * slab + 3 * otile + wbytes + Cout_p * 4

    while Td > 1 and vmem_need(Td) > 40 * 1024 * 1024:
        Td = max(1, Td // 2)

    nT = _ceil_div(Do, Td)
    Dq = max(_ceil_div(Dp, ds), nT * Td + Qd - 1)
    slab_d = Td + Qd - 1
    Mt = Td * M2

    # ---- Stride-phase folded, channels-last input: one transpose + one pad
    # (conv padding and alignment padding fused) + the fold reshape. ----------
    xt = jnp.transpose(x.astype(jnp.float32), (0, 2, 3, 4, 1))
    xt = jnp.pad(xt, ((0, 0),
                      (pf, pb + ds * Dq - Dp),
                      (pu, pdn + hs * Hq - Hp),
                      (plf, prt + ws * Wq - Wp),
                      (0, 0)))
    xq = xt.reshape(N, Dq, ds, Hq, hs, Wq, ws, Cin)
    xq = jnp.transpose(xq, (0, 1, 3, 5, 2, 4, 6, 7)).reshape(N, Dq, Hq, Wq, Cg)
    xq = jnp.pad(xq, ((0, 0), (0, 0), (0, 0), (0, 0),
                      (0, Cg_p - Cg))).astype(compute_dtype)

    # Halo'd D-slabs (halo = Qd-1): every grid step sees a dense BlockSpec
    # block; duplication factor is only (Td+Qd-1)/Td.
    if nT == 1:
        xs = xq[:, :slab_d]
    else:
        idx = jnp.arange(nT)[:, None] * Td + jnp.arange(slab_d)[None, :]
        xs = xq[:, idx]                                  # (N, nT, slab_d, ...)
    xs = xs.reshape(N * nT, slab_d, Hq, Wq, Cg_p)

    # ---- Per-tap weight slices (T, Cg_p, Cout_p).  Row order matches the
    # folded channel order (rd, rh, rw, c); zero rows cover phase taps beyond
    # the real kernel extent plus the Cg/Cout padding. ------------------------
    wf = weight.astype(jnp.float32)
    wf = jnp.pad(wf, ((0, 0), (0, 0), (0, Qd * ds - kd),
                      (0, Qh * hs - kh), (0, Qw * ws - kw)))
    wf = wf.reshape(Cout, Cin, Qd, ds, Qh, hs, Qw, ws)
    wf = jnp.transpose(wf, (2, 4, 6, 3, 5, 7, 1, 0)).reshape(T, Cg, Cout)
    w_p = jnp.pad(wf, ((0, 0), (0, Cg_p - Cg),
                       (0, Cout_p - Cout))).astype(compute_dtype)
    b_p = jnp.pad(bias.astype(jnp.float32),
                  (0, Cout_p - Cout)).reshape(1, Cout_p)

    kernel = _make_kernel(Qd, Qh, Qw, Td, Ho, Wo_p, Cg_p, Cout_p)

    # Real work (actual Cout / kernel taps), not the padded sizes.
    cost = pl.CostEstimate(
        flops=int(2 * N * Do * Ho * Wo * Cout * Cin * kd * kh * kw),
        transcendentals=0,
        bytes_accessed=int(x.size * 4 + weight.size * 4 + bias.size * 4
                           + N * Do * Ho * Wo * Cout * 4),
    )

    vmem_limit = int(min(max(vmem_need(Td) + (8 << 20), 32 << 20), 64 << 20))

    out = pl.pallas_call(
        kernel,
        out_shape=jax.ShapeDtypeStruct((N * nT, Mt, Cout_p), jnp.float32),
        grid_spec=pltpu.PrefetchScalarGridSpec(
            num_scalar_prefetch=0,
            grid=(N, nT),
            in_specs=[
                pl.BlockSpec((1, slab_d, Hq, Wq, Cg_p),
                             lambda n, t: (n * nT + t, 0, 0, 0, 0)),
                # Grid-invariant operands: single-buffered to reclaim VMEM.
                pl.BlockSpec((T, Cg_p, Cout_p), lambda n, t: (0, 0, 0),
                             pipeline_mode=pl.Buffered(1)),
                pl.BlockSpec((1, Cout_p), lambda n, t: (0, 0),
                             pipeline_mode=pl.Buffered(1)),
            ],
            out_specs=pl.BlockSpec((1, Mt, Cout_p),
                                   lambda n, t: (n * nT + t, 0, 0)),
        ),
        compiler_params=pltpu.CompilerParams(
            dimension_semantics=("parallel", "parallel"),
            vmem_limit_bytes=vmem_limit),
        cost_estimate=cost,
    )(xs, w_p, b_p)

    out = out.reshape(N, nT * Td, Ho, Wo_p, Cout_p)[:, :Do, :, :Wo, :Cout]
    # TODO(synk): skip this NDHWC->NCDHW transpose when the consumer accepts
    # channels-last output.
    return jnp.transpose(out, (0, 4, 1, 2, 3))


my_conv3d = jax.jit(_my_conv3d, static_argnums=(3, 4, 5))


def _reference(x, weight, bias, stride, padding):
    ref = jax.lax.conv_general_dilated(
        x.astype(jnp.float32), weight.astype(jnp.float32),
        window_strides=stride,
        padding=[(padding[0], padding[1]), (padding[2], padding[3]),
                 (padding[4], padding[5])],
        dimension_numbers=("NCDHW", "OIDHW", "NCDHW"),
    )
    return ref + bias[None, :, None, None, None]


if __name__ == "__main__":
    key = jax.random.PRNGKey(0)
    k_x, k_w, k_b, k_x2, k_w2, k_b2 = jax.random.split(key, 6)

    # --- Config 1: same small shapes as the module's test ------------------
    N, Cin, D, H, W = 2, 3, 8, 8, 8
    Cout, kd, kh, kw = 4, 3, 3, 3
    stride = (2, 1, 1)
    padding = (1, 1, 1, 1, 1, 1)   # (fwd, back, up, down, left, right)

    x = jax.random.normal(k_x, (N, Cin, D, H, W), dtype=jnp.float32)
    weight = jax.random.normal(k_w, (Cout, Cin, kd, kh, kw), dtype=jnp.float32)
    bias = jax.random.normal(k_b, (Cout,), dtype=jnp.float32)

    y = my_conv3d(x, weight, bias, stride, padding, jnp.float32)
    y = jax.block_until_ready(y)
    ref = _reference(x, weight, bias, stride, padding)
    assert y.shape == ref.shape, (y.shape, ref.shape)
    assert jnp.allclose(y, ref, atol=1e-4, rtol=1e-4)

    # --- Config 2: strides in all three dims + asymmetric padding ----------
    N2, Cin2, D2, H2, W2 = 2, 5, 7, 15, 15
    Cout2, kd2, kh2, kw2 = 3, 3, 2, 2
    stride2 = (2, 2, 2)
    padding2 = (1, 1, 0, 1, 1, 0)

    x2 = jax.random.normal(k_x2, (N2, Cin2, D2, H2, W2), dtype=jnp.float32)
    weight2 = jax.random.normal(k_w2, (Cout2, Cin2, kd2, kh2, kw2),
                                dtype=jnp.float32)
    bias2 = jax.random.normal(k_b2, (Cout2,), dtype=jnp.float32)

    y2 = my_conv3d(x2, weight2, bias2, stride2, padding2, jnp.float32)
    y2 = jax.block_until_ready(y2)
    ref2 = _reference(x2, weight2, bias2, stride2, padding2)
    assert y2.shape == ref2.shape, (y2.shape, ref2.shape)
    assert jnp.allclose(y2, ref2, atol=1e-4, rtol=1e-4)

    # --- bf16 compute path (MXU-native on v6e/v7x; f32 accumulate) ----------
    y_bf16 = my_conv3d(x, weight, bias, stride, padding, jnp.bfloat16)
    y_bf16 = jax.block_until_ready(y_bf16)
    assert y_bf16.shape == ref.shape
    assert jnp.allclose(y_bf16, ref, atol=0.5, rtol=0.1)

    print("KERNEL_OK")
</pallas_src>

<mosaic_0001>
module attributes {stable_mosaic.version = 11 : i64} {
  func.func @kernel(%arg0: i32, %arg1: i32, %arg2: memref<1x3x10x10x128xf32, #tpu.memory_space<vmem>>, %arg3: memref<18x128x128xf32, #tpu.memory_space<vmem>>, %arg4: memref<1x128xf32, #tpu.memory_space<vmem>>, %arg5: memref<1x128x128xf32, #tpu.memory_space<vmem>>) attributes {dimension_semantics = [#tpu.dimension_semantics<parallel>, #tpu.dimension_semantics<parallel>], iteration_bounds = array<i64: 2, 2>, scalar_prefetch = 0 : i64, scratch_operands = 0 : i64, tpu.core_type = #tpu.core_type<tc>, window_params = [{transform_indices = @transform_0, window_bounds = array<i64: 1, 3, 10, 10, 128>}, {pipeline_mode = #tpu.pipeline_mode<synchronous>, transform_indices = @transform_1, window_bounds = array<i64: 18, 128, 128>}, {pipeline_mode = #tpu.pipeline_mode<synchronous>, transform_indices = @transform_2, window_bounds = array<i64: 1, 128>}, {transform_indices = @transform_3, window_bounds = array<i64: 1, 128, 128>}]} {
    %c0 = arith.constant 0 : index
    %c0_0 = arith.constant 0 : index
    %c0_1 = arith.constant 0 : index
    %c0_2 = arith.constant 0 : index
    %c0_3 = arith.constant 0 : index
    %0 = vector.load %arg2[%c0, %c0_0, %c0_1, %c0_2, %c0_3] : memref<1x3x10x10x128xf32, #tpu.memory_space<vmem>>, vector<1x2x8x8x128xf32>
    %1 = vector.shape_cast %0 : vector<1x2x8x8x128xf32> to vector<2x8x8x128xf32>
    %2 = vector.shape_cast %1 : vector<2x8x8x128xf32> to vector<128x128xf32>
    %c0_4 = arith.constant 0 : index
    %c0_5 = arith.constant 0 : index
    %c0_6 = arith.constant 0 : index
    %3 = vector.load %arg3[%c0_4, %c0_5, %c0_6] : memref<18x128x128xf32, #tpu.memory_space<vmem>>, vector<1x128x128xf32>
    %4 = vector.shape_cast %3 : vector<1x128x128xf32> to vector<128x128xf32>
    %cst = arith.constant dense<0.000000e+00> : vector<128x128xf32>
    %5 = tpu.matmul %2, %4, %cst {dimension_numbers = #tpu.dot_dimension_numbers<[1], [0], [0], [1], [0, 0, 1, 1], [], []>} : vector<128x128xf32>, vector<128x128xf32>, vector<128x128xf32> -> vector<128x128xf32>
    %c0_7 = arith.constant 0 : index
    %c0_8 = arith.constant 0 : index
    %c0_9 = arith.constant 0 : index
    %c1 = arith.constant 1 : index
    %c0_10 = arith.constant 0 : index
    %6 = vector.load %arg2[%c0_7, %c0_8, %c0_9, %c1, %c0_10] : memref<1x3x10x10x128xf32, #tpu.memory_space<vmem>>, vector<1x2x8x8x128xf32>
    %7 = vector.shape_cast %6 : vector<1x2x8x8x128xf32> to vector<2x8x8x128xf32>
    %8 = vector.shape_cast %7 : vector<2x8x8x128xf32> to vector<128x128xf32>
    %c1_11 = arith.constant 1 : index
    %c0_12 = arith.constant 0 : index
    %c0_13 = arith.constant 0 : index
    %9 = vector.load %arg3[%c1_11, %c0_12, %c0_13] : memref<18x128x128xf32, #tpu.memory_space<vmem>>, vector<1x128x128xf32>
    %10 = vector.shape_cast %9 : vector<1x128x128xf32> to vector<128x128xf32>
    %cst_14 = arith.constant dense<0.000000e+00> : vector<128x128xf32>
    %11 = tpu.matmul %8, %10, %cst_14 {dimension_numbers = #tpu.dot_dimension_numbers<[1], [0], [0], [1], [0, 0, 1, 1], [], []>} : vector<128x128xf32>, vector<128x128xf32>, vector<128x128xf32> -> vector<128x128xf32>
    %12 = arith.addf %5, %11 : vector<128x128xf32>
    %c0_15 = arith.constant 0 : index
    %c0_16 = arith.constant 0 : index
    %c0_17 = arith.constant 0 : index
    %c2 = arith.constant 2 : index
    %c0_18 = arith.constant 0 : index
    %13 = vector.load %arg2[%c0_15, %c0_16, %c0_17, %c2, %c0_18] : memref<1x3x10x10x128xf32, #tpu.memory_space<vmem>>, vector<1x2x8x8x128xf32>
    %14 = vector.shape_cast %13 : vector<1x2x8x8x128xf32> to vector<2x8x8x128xf32>
    %15 = vector.shape_cast %14 : vector<2x8x8x128xf32> to vector<128x128xf32>
    %c2_19 = arith.constant 2 : index
    %c0_20 = arith.constant 0 : index
    %c0_21 = arith.constant 0 : index
    %16 = vector.load %arg3[%c2_19, %c0_20, %c0_21] : memref<18x128x128xf32, #tpu.memory_space<vmem>>, vector<1x128x128xf32>
    %17 = vector.shape_cast %16 : vector<1x128x128xf32> to vector<128x128xf32>
    %cst_22 = arith.constant dense<0.000000e+00> : vector<128x128xf32>
    %18 = tpu.matmul %15, %17, %cst_22 {dimension_numbers = #tpu.dot_dimension_numbers<[1], [0], [0], [1], [0, 0, 1, 1], [], []>} : vector<128x128xf32>, vector<128x128xf32>, vector<128x128xf32> -> vector<128x128xf32>
    %19 = arith.addf %12, %18 : vector<128x128xf32>
    %c0_23 = arith.constant 0 : index
    %c0_24 = arith.constant 0 : index
    %c1_25 = arith.constant 1 : index
    %c0_26 = arith.constant 0 : index
    %c0_27 = arith.constant 0 : index
    %20 = vector.load %arg2[%c0_23, %c0_24, %c1_25, %c0_26, %c0_27] : memref<1x3x10x10x128xf32, #tpu.memory_space<vmem>>, vector<1x2x8x8x128xf32>
    %21 = vector.shape_cast %20 : vector<1x2x8x8x128xf32> to vector<2x8x8x128xf32>
    %22 = vector.shape_cast %21 : vector<2x8x8x128xf32> to vector<128x128xf32>
    %c3 = arith.constant 3 : index
    %c0_28 = arith.constant 0 : index
    %c0_29 = arith.constant 0 : index
    %23 = vector.load %arg3[%c3, %c0_28, %c0_29] : memref<18x128x128xf32, #tpu.memory_space<vmem>>, vector<1x128x128xf32>
    %24 = vector.shape_cast %23 : vector<1x128x128xf32> to vector<128x128xf32>
    %cst_30 = arith.constant dense<0.000000e+00> : vector<128x128xf32>
    %25 = tpu.matmul %22, %24, %cst_30 {dimension_numbers = #tpu.dot_dimension_numbers<[1], [0], [0], [1], [0, 0, 1, 1], [], []>} : vector<128x128xf32>, vector<128x128xf32>, vector<128x128xf32> -> vector<128x128xf32>
    %26 = arith.addf %19, %25 : vector<128x128xf32>
    %c0_31 = arith.constant 0 : index
    %c0_32 = arith.constant 0 : index
    %c1_33 = arith.constant 1 : index
    %c1_34 = arith.constant 1 : index
    %c0_35 = arith.constant 0 : index
    %27 = vector.load %arg2[%c0_31, %c0_32, %c1_33, %c1_34, %c0_35] : memref<1x3x10x10x128xf32, #tpu.memory_space<vmem>>, vector<1x2x8x8x128xf32>
    %28 = vector.shape_cast %27 : vector<1x2x8x8x128xf32> to vector<2x8x8x128xf32>
    %29 = vector.shape_cast %28 : vector<2x8x8x128xf32> to vector<128x128xf32>
    %c4 = arith.constant 4 : index
    %c0_36 = arith.constant 0 : index
    %c0_37 = arith.constant 0 : index
    %30 = vector.load %arg3[%c4, %c0_36, %c0_37] : memref<18x128x128xf32, #tpu.memory_space<vmem>>, vector<1x128x128xf32>
    %31 = vector.shape_cast %30 : vector<1x128x128xf32> to vector<128x128xf32>
    %cst_38 = arith.constant dense<0.000000e+00> : vector<128x128xf32>
    %32 = tpu.matmul %29, %31, %cst_38 {dimension_numbers = #tpu.dot_dimension_numbers<[1], [0], [0], [1], [0, 0, 1, 1], [], []>} : vector<128x128xf32>, vector<128x128xf32>, vector<128x128xf32> -> vector<128x128xf32>
    %33 = arith.addf %26, %32 : vector<128x128xf32>
    %c0_39 = arith.constant 0 : index
    %c0_40 = arith.constant 0 : index
    %c1_41 = arith.constant 1 : index
    %c2_42 = arith.constant 2 : index
    %c0_43 = arith.constant 0 : index
    %34 = vector.load %arg2[%c0_39, %c0_40, %c1_41, %c2_42, %c0_43] : memref<1x3x10x10x128xf32, #tpu.memory_space<vmem>>, vector<1x2x8x8x128xf32>
    %35 = vector.shape_cast %34 : vector<1x2x8x8x128xf32> to vector<2x8x8x128xf32>
    %36 = vector.shape_cast %35 : vector<2x8x8x128xf32> to vector<128x128xf32>
    %c5 = arith.constant 5 : index
    %c0_44 = arith.constant 0 : index
    %c0_45 = arith.constant 0 : index
    %37 = vector.load %arg3[%c5, %c0_44, %c0_45] : memref<18x128x128xf32, #tpu.memory_space<vmem>>, vector<1x128x128xf32>
    %38 = vector.shape_cast %37 : vector<1x128x128xf32> to vector<128x128xf32>
    %cst_46 = arith.constant dense<0.000000e+00> : vector<128x128xf32>
    %39 = tpu.matmul %36, %38, %cst_46 {dimension_numbers = #tpu.dot_dimension_numbers<[1], [0], [0], [1], [0, 0, 1, 1], [], []>} : vector<128x128xf32>, vector<128x128xf32>, vector<128x128xf32> -> vector<128x128xf32>
    %40 = arith.addf %33, %39 : vector<128x128xf32>
    %c0_47 = arith.constant 0 : index
    %c0_48 = arith.constant 0 : index
    %c2_49 = arith.constant 2 : index
    %c0_50 = arith.constant 0 : index
    %c0_51 = arith.constant 0 : index
    %41 = vector.load %arg2[%c0_47, %c0_48, %c2_49, %c0_50, %c0_51] : memref<1x3x10x10x128xf32, #tpu.memory_space<vmem>>, vector<1x2x8x8x128xf32>
    %42 = vector.shape_cast %41 : vector<1x2x8x8x128xf32> to vector<2x8x8x128xf32>
    %43 = vector.shape_cast %42 : vector<2x8x8x128xf32> to vector<128x128xf32>
    %c6 = arith.constant 6 : index
    %c0_52 = arith.constant 0 : index
    %c0_53 = arith.constant 0 : index
    %44 = vector.load %arg3[%c6, %c0_52, %c0_53] : memref<18x128x128xf32, #tpu.memory_space<vmem>>, vector<1x128x128xf32>
    %45 = vector.shape_cast %44 : vector<1x128x128xf32> to vector<128x128xf32>
    %cst_54 = arith.constant dense<0.000000e+00> : vector<128x128xf32>
    %46 = tpu.matmul %43, %45, %cst_54 {dimension_numbers = #tpu.dot_dimension_numbers<[1], [0], [0], [1], [0, 0, 1, 1], [], []>} : vector<128x128xf32>, vector<128x128xf32>, vector<128x128xf32> -> vector<128x128xf32>
    %47 = arith.addf %40, %46 : vector<128x128xf32>
    %c0_55 = arith.constant 0 : index
    %c0_56 = arith.constant 0 : index
    %c2_57 = arith.constant 2 : index
    %c1_58 = arith.constant 1 : index
    %c0_59 = arith.constant 0 : index
    %48 = vector.load %arg2[%c0_55, %c0_56, %c2_57, %c1_58, %c0_59] : memref<1x3x10x10x128xf32, #tpu.memory_space<vmem>>, vector<1x2x8x8x128xf32>
    %49 = vector.shape_cast %48 : vector<1x2x8x8x128xf32> to vector<2x8x8x128xf32>
    %50 = vector.shape_cast %49 : vector<2x8x8x128xf32> to vector<128x128xf32>
    %c7 = arith.constant 7 : index
    %c0_60 = arith.constant 0 : index
    %c0_61 = arith.constant 0 : index
    %51 = vector.load %arg3[%c7, %c0_60, %c0_61] : memref<18x128x128xf32, #tpu.memory_space<vmem>>, vector<1x128x128xf32>
    %52 = vector.shape_cast %51 : vector<1x128x128xf32> to vector<128x128xf32>
    %cst_62 = arith.constant dense<0.000000e+00> : vector<128x128xf32>
    %53 = tpu.matmul %50, %52, %cst_62 {dimension_numbers = #tpu.dot_dimension_numbers<[1], [0], [0], [1], [0, 0, 1, 1], [], []>} : vector<128x128xf32>, vector<128x128xf32>, vector<128x128xf32> -> vector<128x128xf32>
    %54 = arith.addf %47, %53 : vector<128x128xf32>
    %c0_63 = arith.constant 0 : index
    %c0_64 = arith.constant 0 : index
    %c2_65 = arith.constant 2 : index
    %c2_66 = arith.constant 2 : index
    %c0_67 = arith.constant 0 : index
    %55 = vector.load %arg2[%c0_63, %c0_64, %c2_65, %c2_66, %c0_67] : memref<1x3x10x10x128xf32, #tpu.memory_space<vmem>>, vector<1x2x8x8x128xf32>
    %56 = vector.shape_cast %55 : vector<1x2x8x8x128xf32> to vector<2x8x8x128xf32>
    %57 = vector.shape_cast %56 : vector<2x8x8x128xf32> to vector<128x128xf32>
    %c8 = arith.constant 8 : index
    %c0_68 = arith.constant 0 : index
    %c0_69 = arith.constant 0 : index
    %58 = vector.load %arg3[%c8, %c0_68, %c0_69] : memref<18x128x128xf32, #tpu.memory_space<vmem>>, vector<1x128x128xf32>
    %59 = vector.shape_cast %58 : vector<1x128x128xf32> to vector<128x128xf32>
    %cst_70 = arith.constant dense<0.000000e+00> : vector<128x128xf32>
    %60 = tpu.matmul %57, %59, %cst_70 {dimension_numbers = #tpu.dot_dimension_numbers<[1], [0], [0], [1], [0, 0, 1, 1], [], []>} : vector<128x128xf32>, vector<128x128xf32>, vector<128x128xf32> -> vector<128x128xf32>
    %61 = arith.addf %54, %60 : vector<128x128xf32>
    %c0_71 = arith.constant 0 : index
    %c1_72 = arith.constant 1 : index
    %c0_73 = arith.constant 0 : index
    %c0_74 = arith.constant 0 : index
    %c0_75 = arith.constant 0 : index
    %62 = vector.load %arg2[%c0_71, %c1_72, %c0_73, %c0_74, %c0_75] : memref<1x3x10x10x128xf32, #tpu.memory_space<vmem>>, vector<1x2x8x8x128xf32>
    %63 = vector.shape_cast %62 : vector<1x2x8x8x128xf32> to vector<2x8x8x128xf32>
    %64 = vector.shape_cast %63 : vector<2x8x8x128xf32> to vector<128x128xf32>
    %c9 = arith.constant 9 : index
    %c0_76 = arith.constant 0 : index
    %c0_77 = arith.constant 0 : index
    %65 = vector.load %arg3[%c9, %c0_76, %c0_77] : memref<18x128x128xf32, #tpu.memory_space<vmem>>, vector<1x128x128xf32>
    %66 = vector.shape_cast %65 : vector<1x128x128xf32> to vector<128x128xf32>
    %cst_78 = arith.constant dense<0.000000e+00> : vector<128x128xf32>
    %67 = tpu.matmul %64, %66, %cst_78 {dimension_numbers = #tpu.dot_dimension_numbers<[1], [0], [0], [1], [0, 0, 1, 1], [], []>} : vector<128x128xf32>, vector<128x128xf32>, vector<128x128xf32> -> vector<128x128xf32>
    %68 = arith.addf %61, %67 : vector<128x128xf32>
    %c0_79 = arith.constant 0 : index
    %c1_80 = arith.constant 1 : index
    %c0_81 = arith.constant 0 : index
    %c1_82 = arith.constant 1 : index
    %c0_83 = arith.constant 0 : index
    %69 = vector.load %arg2[%c0_79, %c1_80, %c0_81, %c1_82, %c0_83] : memref<1x3x10x10x128xf32, #tpu.memory_space<vmem>>, vector<1x2x8x8x128xf32>
    %70 = vector.shape_cast %69 : vector<1x2x8x8x128xf32> to vector<2x8x8x128xf32>
    %71 = vector.shape_cast %70 : vector<2x8x8x128xf32> to vector<128x128xf32>
    %c10 = arith.constant 10 : index
    %c0_84 = arith.constant 0 : index
    %c0_85 = arith.constant 0 : index
    %72 = vector.load %arg3[%c10, %c0_84, %c0_85] : memref<18x128x128xf32, #tpu.memory_space<vmem>>, vector<1x128x128xf32>
    %73 = vector.shape_cast %72 : vector<1x128x128xf32> to vector<128x128xf32>
    %cst_86 = arith.constant dense<0.000000e+00> : vector<128x128xf32>
    %74 = tpu.matmul %71, %73, %cst_86 {dimension_numbers = #tpu.dot_dimension_numbers<[1], [0], [0], [1], [0, 0, 1, 1], [], []>} : vector<128x128xf32>, vector<128x128xf32>, vector<128x128xf32> -> vector<128x128xf32>
    %75 = arith.addf %68, %74 : vector<128x128xf32>
    %c0_87 = arith.constant 0 : index
    %c1_88 = arith.constant 1 : index
    %c0_89 = arith.constant 0 : index
    %c2_90 = arith.constant 2 : index
    %c0_91 = arith.constant 0 : index
    %76 = vector.load %arg2[%c0_87, %c1_88, %c0_89, %c2_90, %c0_91] : memref<1x3x10x10x128xf32, #tpu.memory_space<vmem>>, vector<1x2x8x8x128xf32>
    %77 = vector.shape_cast %76 : vector<1x2x8x8x128xf32> to vector<2x8x8x128xf32>
    %78 = vector.shape_cast %77 : vector<2x8x8x128xf32> to vector<128x128xf32>
    %c11 = arith.constant 11 : index
    %c0_92 = arith.constant 0 : index
    %c0_93 = arith.constant 0 : index
    %79 = vector.load %arg3[%c11, %c0_92, %c0_93] : memref<18x128x128xf32, #tpu.memory_space<vmem>>, vector<1x128x128xf32>
    %80 = vector.shape_cast %79 : vector<1x128x128xf32> to vector<128x128xf32>
    %cst_94 = arith.constant dense<0.000000e+00> : vector<128x128xf32>
    %81 = tpu.matmul %78, %80, %cst_94 {dimension_numbers = #tpu.dot_dimension_numbers<[1], [0], [0], [1], [0, 0, 1, 1], [], []>} : vector<128x128xf32>, vector<128x128xf32>, vector<128x128xf32> -> vector<128x128xf32>
    %82 = arith.addf %75, %81 : vector<128x128xf32>
    %c0_95 = arith.constant 0 : index
    %c1_96 = arith.constant 1 : index
    %c1_97 = arith.constant 1 : index
    %c0_98 = arith.constant 0 : index
    %c0_99 = arith.constant 0 : index
    %83 = vector.load %arg2[%c0_95, %c1_96, %c1_97, %c0_98, %c0_99] : memref<1x3x10x10x128xf32, #tpu.memory_space<vmem>>, vector<1x2x8x8x128xf32>
    %84 = vector.shape_cast %83 : vector<1x2x8x8x128xf32> to vector<2x8x8x128xf32>
    %85 = vector.shape_cast %84 : vector<2x8x8x128xf32> to vector<128x128xf32>
    %c12 = arith.constant 12 : index
    %c0_100 = arith.constant 0 : index
    %c0_101 = arith.constant 0 : index
    %86 = vector.load %arg3[%c12, %c0_100, %c0_101] : memref<18x128x128xf32, #tpu.memory_space<vmem>>, vector<1x128x128xf32>
    %87 = vector.shape_cast %86 : vector<1x128x128xf32> to vector<128x128xf32>
    %cst_102 = arith.constant dense<0.000000e+00> : vector<128x128xf32>
    %88 = tpu.matmul %85, %87, %cst_102 {dimension_numbers = #tpu.dot_dimension_numbers<[1], [0], [0], [1], [0, 0, 1, 1], [], []>} : vector<128x128xf32>, vector<128x128xf32>, vector<128x128xf32> -> vector<128x128xf32>
    %89 = arith.addf %82, %88 : vector<128x128xf32>
    %c0_103 = arith.constant 0 : index
    %c1_104 = arith.constant 1 : index
    %c1_105 = arith.constant 1 : index
    %c1_106 = arith.constant 1 : index
    %c0_107 = arith.constant 0 : index
    %90 = vector.load %arg2[%c0_103, %c1_104, %c1_105, %c1_106, %c0_107] : memref<1x3x10x10x128xf32, #tpu.memory_space<vmem>>, vector<1x2x8x8x128xf32>
    %91 = vector.shape_cast %90 : vector<1x2x8x8x128xf32> to vector<2x8x8x128xf32>
    %92 = vector.shape_cast %91 : vector<2x8x8x128xf32> to vector<128x128xf32>
    %c13 = arith.constant 13 : index
    %c0_108 = arith.constant 0 : index
    %c0_109 = arith.constant 0 : index
    %93 = vector.load %arg3[%c13, %c0_108, %c0_109] : memref<18x128x128xf32, #tpu.memory_space<vmem>>, vector<1x128x128xf32>
    %94 = vector.shape_cast %93 : vector<1x128x128xf32> to vector<128x128xf32>
    %cst_110 = arith.constant dense<0.000000e+00> : vector<128x128xf32>
    %95 = tpu.matmul %92, %94, %cst_110 {dimension_numbers = #tpu.dot_dimension_numbers<[1], [0], [0], [1], [0, 0, 1, 1], [], []>} : vector<128x128xf32>, vector<128x128xf32>, vector<128x128xf32> -> vector<128x128xf32>
    %96 = arith.addf %89, %95 : vector<128x128xf32>
    %c0_111 = arith.constant 0 : index
    %c1_112 = arith.constant 1 : index
    %c1_113 = arith.constant 1 : index
    %c2_114 = arith.constant 2 : index
    %c0_115 = arith.constant 0 : index
    %97 = vector.load %arg2[%c0_111, %c1_112, %c1_113, %c2_114, %c0_115] : memref<1x3x10x10x128xf32, #tpu.memory_space<vmem>>, vector<1x2x8x8x128xf32>
    %98 = vector.shape_cast %97 : vector<1x2x8x8x128xf32> to vector<2x8x8x128xf32>
    %99 = vector.shape_cast %98 : vector<2x8x8x128xf32> to vector<128x128xf32>
    %c14 = arith.constant 14 : index
    %c0_116 = arith.constant 0 : index
    %c0_117 = arith.constant 0 : index
    %100 = vector.load %arg3[%c14, %c0_116, %c0_117] : memref<18x128x128xf32, #tpu.memory_space<vmem>>, vector<1x128x128xf32>
    %101 = vector.shape_cast %100 : vector<1x128x128xf32> to vector<128x128xf32>
    %cst_118 = arith.constant dense<0.000000e+00> : vector<128x128xf32>
    %102 = tpu.matmul %99, %101, %cst_118 {dimension_numbers = #tpu.dot_dimension_numbers<[1], [0], [0], [1], [0, 0, 1, 1], [], []>} : vector<128x128xf32>, vector<128x128xf32>, vector<128x128xf32> -> vector<128x128xf32>
    %103 = arith.addf %96, %102 : vector<128x128xf32>
    %c0_119 = arith.constant 0 : index
    %c1_120 = arith.constant 1 : index
    %c2_121 = arith.constant 2 : index
    %c0_122 = arith.constant 0 : index
    %c0_123 = arith.constant 0 : index
    %104 = vector.load %arg2[%c0_119, %c1_120, %c2_121, %c0_122, %c0_123] : memref<1x3x10x10x128xf32, #tpu.memory_space<vmem>>, vector<1x2x8x8x128xf32>
    %105 = vector.shape_cast %104 : vector<1x2x8x8x128xf32> to vector<2x8x8x128xf32>
    %106 = vector.shape_cast %105 : vector<2x8x8x128xf32> to vector<128x128xf32>
    %c15 = arith.constant 15 : index
    %c0_124 = arith.constant 0 : index
    %c0_125 = arith.constant 0 : index
    %107 = vector.load %arg3[%c15, %c0_124, %c0_125] : memref<18x128x128xf32, #tpu.memory_space<vmem>>, vector<1x128x128xf32>
    %108 = vector.shape_cast %107 : vector<1x128x128xf32> to vector<128x128xf32>
    %cst_126 = arith.constant dense<0.000000e+00> : vector<128x128xf32>
    %109 = tpu.matmul %106, %108, %cst_126 {dimension_numbers = #tpu.dot_dimension_numbers<[1], [0], [0], [1], [0, 0, 1, 1], [], []>} : vector<128x128xf32>, vector<128x128xf32>, vector<128x128xf32> -> vector<128x128xf32>
    %110 = arith.addf %103, %109 : vector<128x128xf32>
    %c0_127 = arith.constant 0 : index
    %c1_128 = arith.constant 1 : index
    %c2_129 = arith.constant 2 : index
    %c1_130 = arith.constant 1 : index
    %c0_131 = arith.constant 0 : index
    %111 = vector.load %arg2[%c0_127, %c1_128, %c2_129, %c1_130, %c0_131] : memref<1x3x10x10x128xf32, #tpu.memory_space<vmem>>, vector<1x2x8x8x128xf32>
    %112 = vector.shape_cast %111 : vector<1x2x8x8x128xf32> to vector<2x8x8x128xf32>
    %113 = vector.shape_cast %112 : vector<2x8x8x128xf32> to vector<128x128xf32>
    %c16 = arith.constant 16 : index
    %c0_132 = arith.constant 0 : index
    %c0_133 = arith.constant 0 : index
    %114 = vector.load %arg3[%c16, %c0_132, %c0_133] : memref<18x128x128xf32, #tpu.memory_space<vmem>>, vector<1x128x128xf32>
    %115 = vector.shape_cast %114 : vector<1x128x128xf32> to vector<128x128xf32>
    %cst_134 = arith.constant dense<0.000000e+00> : vector<128x128xf32>
    %116 = tpu.matmul %113, %115, %cst_134 {dimension_numbers = #tpu.dot_dimension_numbers<[1], [0], [0], [1], [0, 0, 1, 1], [], []>} : vector<128x128xf32>, vector<128x128xf32>, vector<128x128xf32> -> vector<128x128xf32>
    %117 = arith.addf %110, %116 : vector<128x128xf32>
    %c0_135 = arith.constant 0 : index
    %c1_136 = arith.constant 1 : index
    %c2_137 = arith.constant 2 : index
    %c2_138 = arith.constant 2 : index
    %c0_139 = arith.constant 0 : index
    %118 = vector.load %arg2[%c0_135, %c1_136, %c2_137, %c2_138, %c0_139] : memref<1x3x10x10x128xf32, #tpu.memory_space<vmem>>, vector<1x2x8x8x128xf32>
    %119 = vector.shape_cast %118 : vector<1x2x8x8x128xf32> to vector<2x8x8x128xf32>
    %120 = vector.shape_cast %119 : vector<2x8x8x128xf32> to vector<128x128xf32>
    %c17 = arith.constant 17 : index
    %c0_140 = arith.constant 0 : index
    %c0_141 = arith.constant 0 : index
    %121 = vector.load %arg3[%c17, %c0_140, %c0_141] : memref<18x128x128xf32, #tpu.memory_space<vmem>>, vector<1x128x128xf32>
    %122 = vector.shape_cast %121 : vector<1x128x128xf32> to vector<128x128xf32>
    %cst_142 = arith.constant dense<0.000000e+00> : vector<128x128xf32>
    %123 = tpu.matmul %120, %122, %cst_142 {dimension_numbers = #tpu.dot_dimension_numbers<[1], [0], [0], [1], [0, 0, 1, 1], [], []>} : vector<128x128xf32>, vector<128x128xf32>, vector<128x128xf32> -> vector<128x128xf32>
    %124 = arith.addf %117, %123 : vector<128x128xf32>
    %c0_143 = arith.constant 0 : index
    %c0_144 = arith.constant 0 : index
    %125 = vector.load %arg4[%c0_143, %c0_144] : memref<1x128xf32, #tpu.memory_space<vmem>>, vector<1x128xf32>
    %126 = vector.broadcast %125 : vector<1x128xf32> to vector<128x128xf32>
    %127 = arith.addf %124, %126 : vector<128x128xf32>
    %c0_145 = arith.constant 0 : index
    %c0_146 = arith.constant 0 : index
    %c0_147 = arith.constant 0 : index
    %128 = vector.load %arg5[%c0_145, %c0_146, %c0_147] : memref<1x128x128xf32, #tpu.memory_space<vmem>>, vector<1x128x128xf32>
    %129 = vector.shape_cast %128 : vector<1x128x128xf32> to vector<128x128xf32>
    %130 = vector.shape_cast %127 : vector<128x128xf32> to vector<1x128x128xf32>
    tpu.vector_store %arg5[%c0_145, %c0_146, %c0_147], %130 {strides = array<i32>} : memref<1x128x128xf32, #tpu.memory_space<vmem>>, vector<1x128x128xf32>,
    return
  }
  func.func @transform_0(%arg0: i32, %arg1: i32) -> (i32, i32, i32, i32, i32) {
    %c2_i32 = arith.constant 2 : i32
    %0 = arith.muli %arg0, %c2_i32 : i32
    %1 = arith.addi %0, %arg1 : i32
    %c0_i32 = arith.constant 0 : i32
    %c0_i32_0 = arith.constant 0 : i32
    %c0_i32_1 = arith.constant 0 : i32
    %c0_i32_2 = arith.constant 0 : i32
    %c0_i32_3 = arith.constant 0 : i32
    return %1, %c0_i32, %c0_i32_0, %c0_i32_1, %c0_i32_2 : i32, i32, i32, i32, i32
  }
  func.func @transform_1(%arg0: i32, %arg1: i32) -> (i32, i32, i32) {
    %c0_i32 = arith.constant 0 : i32
    %c0_i32_0 = arith.constant 0 : i32
    %c0_i32_1 = arith.constant 0 : i32
    %c0_i32_2 = arith.constant 0 : i32
    return %c0_i32, %c0_i32_0, %c0_i32_1 : i32, i32, i32
  }
  func.func @transform_2(%arg0: i32, %arg1: i32) -> (i32, i32) {
    %c0_i32 = arith.constant 0 : i32
    %c0_i32_0 = arith.constant 0 : i32
    %c0_i32_1 = arith.constant 0 : i32
    return %c0_i32, %c0_i32_0 : i32, i32
  }
  func.func @transform_3(%arg0: i32, %arg1: i32) -> (i32, i32, i32) {
    %c2_i32 = arith.constant 2 : i32
    %0 = arith.muli %arg0, %c2_i32 : i32
    %1 = arith.addi %0, %arg1 : i32
    %c0_i32 = arith.constant 0 : i32
    %c0_i32_0 = arith.constant 0 : i32
    %c0_i32_1 = arith.constant 0 : i32
    return %1, %c0_i32, %c0_i32_0 : i32, i32, i32
  }
}

</mosaic_0001>

<llo_original>
// kernel: _my_conv3d.1
$region0: #{_my_conv3d.1}
  #allocation0 [shape = 'u32[]', space=smem, size = 0x4, offset = 0x4, fixed_abs, tag = 'smem constant byte address 0x4 - core index']
  #allocation1 [shape = 'u32[144,128]{1,0:T(1,128)}', space=vmem, size = 0x12000, scoped, tag = 'internal scratch']
  %s0 = inlined_call_operand.vmem [shape: f32[4,3,10,10,128], index: 0, kind: input, shape index: {}]
  %s1 = inlined_call_operand.vmem [shape: f32[18,128,128], index: 1, kind: input, shape index: {}]
  %s2 = inlined_call_operand.vmem [shape: f32[1,128], index: 2, kind: input, shape index: {}]
  %s3 = inlined_call_operand.vmem [shape: f32[4,128,128], index: 3, kind: output, shape index: {}]
  %s4 = sld [smem:[#allocation0]]
  $region45: #{_my_conv3d.1} parent=0
    _
  %s6 = ssub.s32 1, %s4
  %s7 = scalar_select 0, %s6, %s4
  loop: start=0, step=1, limit=6
  $region2: #{_my_conv3d.1} parent=0 // loop_pre_header
    _
  $region3: #{_my_conv3d.1} parent=0 // loop_header
    %s9 = sphi 0, %s13
    %p10 = scmp.ge.s32.totalorder %s9, 6
    %s16 = sphi 0, %s28
    %s17 = sphi 0, %s24
    %s18 = sphi 0, %s16
    %s19 = sphi 0, %s17
    %s20 = sphi 0, %s18
    %s21 = sphi 0, %s19
    %s35 = sphi 0, %s37
    %s38 = sphi 0, %s35
    %s39 = sphi 0, %s38
    %s55 = sphi 0, %s39
    %s59 = sphi 0, %s59
    %s61 = sphi 0, %s59
    %s62 = sphi 0, %s61
    %s76 = sphi 0, %s62
    %s80 = sphi 0, %s80
    %s82 = sphi 0, %s80
    %s83 = sphi 0, %s82
    %s97 = sphi 0, %s83
    %s107 = sphi 0, %s109
    %s110 = sphi 0, %s107
    %s111 = sphi 0, %s110
    %s127 = sphi 0, %s111
  $region4: #{_my_conv3d.1} parent=0 // loop_header_branch
    %12 = sbr.rel (%p10) target = $region8
  $region5: #{_my_conv3d.1} parent=0 // loop_body
    %s14 = ssub.s32 %s9, 1
    %s15 = ssub.s32 %s9, 2
    %s22 = sadd.s32 1, %s17
    %p23 = scmp.ge.s32.totalorder %s22, 2
    %s24 = scalar_select %p23, 0, %s22
    %s25 = sadd.s32 1, %s16
    %s26 = scalar_select %p23, %s25, %s16
    %p27 = scmp.ge.s32.totalorder %s26, 2
    %s28 = scalar_select %p27, 0, %s26
    %s29 = smul.u32 %s16, 2
    %s30 = sadd.s32 %s29, %s17
    %s31 = smul.u32 %s28, 2
    %s32 = sadd.s32 %s31, %s24
    %s33 = ssub.s32 %s30, %s32
    %p34 = scmp.eq.s32.totalorder %s33, 0
    %s36 = sadd.s32 %s35, 1
    %s37 = scalar_select %p34, %s35, %s36
    %p40 = pneg %p34
    %p41 = scmp.eq.s32.totalorder %s9, 3
    %p42 = por %p40, %p41
    %p43 = scmp.ne.s32.totalorder %s35, %s38
    %p44 = scmp.eq.s32.totalorder %s9, 0
    %p45 = por %p43, %p44
    %p46 = scmp.ne.s32.totalorder %s35, %s38
    %p47 = scmp.eq.s32.totalorder %s14, 3
    %p48 = por %p46, %p47
    %p49 = scmp.ne.s32.totalorder %s38, %s39
    %p50 = scmp.eq.s32.totalorder %s14, 0
    %p51 = por %p49, %p50
    %p52 = scmp.ne.s32.totalorder %s38, %s39
    %p53 = scmp.eq.s32.totalorder %s15, 3
    %p54 = por %p52, %p53
    %p56 = scmp.ne.s32.totalorder %s39, %s55
    %p57 = scmp.eq.s32.totalorder %s15, 0
    %p58 = por %p56, %p57
    %s60 = sadd.s32 %s59, 1
    %p63 = scmp.eq.s32.totalorder %s9, 3
    %p64 = scmp.ne.s32.totalorder %s59, %s61
    %p65 = scmp.eq.s32.totalorder %s9, 0
    %p66 = por %p64, %p65
    %p67 = scmp.ne.s32.totalorder %s59, %s61
    %p68 = scmp.eq.s32.totalorder %s14, 3
    %p69 = por %p67, %p68
    %p70 = scmp.ne.s32.totalorder %s61, %s62
    %p71 = scmp.eq.s32.totalorder %s14, 0
    %p72 = por %p70, %p71
    %p73 = scmp.ne.s32.totalorder %s61, %s62
    %p74 = scmp.eq.s32.totalorder %s15, 3
    %p75 = por %p73, %p74
    %p77 = scmp.ne.s32.totalorder %s62, %s76
    %p78 = scmp.eq.s32.totalorder %s15, 0
    %p79 = por %p77, %p78
    %s81 = sadd.s32 %s80, 1
    %p84 = scmp.eq.s32.totalorder %s9, 3
    %p85 = scmp.ne.s32.totalorder %s80, %s82
    %p86 = scmp.eq.s32.totalorder %s9, 0
    %p87 = por %p85, %p86
    %p88 = scmp.ne.s32.totalorder %s80, %s82
    %p89 = scmp.eq.s32.totalorder %s14, 3
    %p90 = por %p88, %p89
    %p91 = scmp.ne.s32.totalorder %s82, %s83
    %p92 = scmp.eq.s32.totalorder %s14, 0
    %p93 = por %p91, %p92
    %p94 = scmp.ne.s32.totalorder %s82, %s83
    %p95 = scmp.eq.s32.totalorder %s15, 3
    %p96 = por %p94, %p95
    %p98 = scmp.ne.s32.totalorder %s83, %s97
    %p99 = scmp.eq.s32.totalorder %s15, 0
    %p100 = por %p98, %p99
    %s101 = smul.u32 %s16, 2
    %s102 = sadd.s32 %s101, %s17
    %s103 = smul.u32 %s28, 2
    %s104 = sadd.s32 %s103, %s24
    %s105 = ssub.s32 %s102, %s104
    %p106 = scmp.eq.s32.totalorder %s105, 0
    %s108 = sadd.s32 %s107, 1
    %s109 = scalar_select %p106, %s107, %s108
    %p112 = pneg %p106
    %p113 = scmp.eq.s32.totalorder %s9, 3
    %p114 = por %p112, %p113
    %p115 = scmp.ne.s32.totalorder %s107, %s110
    %p116 = scmp.eq.s32.totalorder %s9, 0
    %p117 = por %p115, %p116
    %p118 = scmp.ne.s32.totalorder %s107, %s110
    %p119 = scmp.eq.s32.totalorder %s14, 3
    %p120 = por %p118, %p119
    %p121 = scmp.ne.s32.totalorder %s110, %s111
    %p122 = scmp.eq.s32.totalorder %s14, 0
    %p123 = por %p121, %p122
    %p124 = scmp.ne.s32.totalorder %s110, %s111
    %p125 = scmp.eq.s32.totalorder %s15, 3
    %p126 = por %p124, %p125
    %p128 = scmp.ne.s32.totalorder %s111, %s127
    %p129 = scmp.eq.s32.totalorder %s15, 0
    %p130 = por %p128, %p129
    %p131 = scmp.le.s32.totalorder 1, %s9
    %p132 = scmp.lt.s32.totalorder %s9, 5
    %p133 = pnand %p131, %p132
    %p134 = pneg %p133
    // Predicated region
    $region9: #{_my_conv3d.1} parent=5 // pred_check
      _
    $region10: #{_my_conv3d.1} parent=5 // pred_check_branch
      %136 = sbr.rel (%p133) target = $region12
    $region11: #{_my_conv3d.1} parent=5 // pred_region
      %s137 = ssub.s32 %s9, 1
      // Predicated region
      $region13: #{_my_conv3d.1} parent=11 // pred_check
        %p138 = pneg %p72
      $region14: #{_my_conv3d.1} parent=11 // pred_check_branch
        %140 = sbr.rel (%p138) target = $region16
      $region15: #{_my_conv3d.1} parent=11 // pred_region
        _
      $region16: #{_my_conv3d.1} parent=11 // pred_fallthru
        _
      // Predicated region
      $region17: #{_my_conv3d.1} parent=11 // pred_check
        %p141 = pneg %p93
      $region18: #{_my_conv3d.1} parent=11 // pred_check_branch
        %143 = sbr.rel (%p141) target = $region20
      $region19: #{_my_conv3d.1} parent=11 // pred_region
        _
      $region20: #{_my_conv3d.1} parent=11 // pred_fallthru
        _
    $region12: #{_my_conv3d.1} parent=5 // pred_fallthru
      _
    %p144 = scmp.lt.s32.totalorder %s9, 4
    // Predicated region
    $region21: #{_my_conv3d.1} parent=5 // pred_check
      %p145 = pneg %p144
    $region22: #{_my_conv3d.1} parent=5 // pred_check_branch
      %147 = sbr.rel (%p145) target = $region24
    $region23: #{_my_conv3d.1} parent=5 // pred_region
      // Predicated region
      $region25: #{_my_conv3d.1} parent=23 // pred_check
        %p148 = pneg %p45
      $region26: #{_my_conv3d.1} parent=23 // pred_check_branch
        %150 = sbr.rel (%p148) target = $region28
      $region27: #{_my_conv3d.1} parent=23 // pred_region
        %s151 = smul.u32 %s16, 2
        %s152 = sadd.s32 %s151, %s17
        %p153 = scmp.lt.s32.totalorder %s152, 3
        %s154 = scalar_select %p153, %s152, 3
        %s155 = smul.addr %s154, 60
        %s156 = smul.addr %s155, 8
        %s157 = scalar_lea.vmem %s0, %s156
        %s158 = smul.u32 %s16, 2
        %s159 = sadd.s32 %s158, %s17
      $region28: #{_my_conv3d.1} parent=23 // pred_fallthru
        _
    $region24: #{_my_conv3d.1} parent=5 // pred_fallthru
      _
    %p160 = scmp.le.s32.totalorder 1, %s9
    %p161 = scmp.lt.s32.totalorder %s9, 5
    %p162 = pnand %p160, %p161
    %p163 = pneg %p162
    // Predicated region
    $region29: #{_my_conv3d.1} parent=5 // pred_check
      _
    $region30: #{_my_conv3d.1} parent=5 // pred_check_branch
      %165 = sbr.rel (%p162) target = $region32
    $region31: #{_my_conv3d.1} parent=5 // pred_region
      %s166 = ssub.s32 %s9, 1
      %s167 = smul.u32 %s18, 2
      %s168 = sadd.s32 %s167, %s19
      %p169 = scmp.lt.s32.totalorder %s168, 3
      %s170 = scalar_select %p169, %s168, 3
      %s171 = smul.addr %s170, 60
      %s172 = smul.addr %s171, 8
      %s173 = scalar_lea.vmem %s0, %s172
      %p174 = pneg %p51
      %p175 = pneg %p48
      %p176 = pneg %p72
      %p177 = pneg %p69
      %p178 = pneg %p93
      %p179 = pneg %p90
      %p180 = pneg %p123
      %p181 = pneg %p120
      %s182 = smul.u32 %s18, 2
      %s183 = sadd.s32 %s182, %s19
      %p184 = scmp.lt.s32.totalorder %s183, 3
      %s185 = scalar_select %p184, %s183, 3
      %s186 = smul.addr %s185, 16
      %s187 = smul.addr %s186, 8
      %s188 = scalar_lea.vmem %s3, %s187
      %s189 = smul.u32 %s18, 2
      %s190 = sadd.s32 %s189, %s19
      %p191 = scmp.lt.s32.totalorder %s190, 3
      %s192 = scalar_select %p191, %s190, 3
      %s193 = smul.addr %s192, 60
      %s194 = smul.addr %s193, 8
      %s195 = scalar_lea.vmem %s0, %s194
      %s196 = smul.u32 %s18, 2
      %s197 = sadd.s32 %s196, %s19
      %s198 = smul.u32 %s18, 2
      %s199 = sadd.s32 %s198, %s19
      %p200 = scmp.lt.s32.totalorder %s199, 3
      %s201 = scalar_select %p200, %s199, 3
      %s202 = smul.addr %s201, 16
      %s203 = smul.addr %s202, 8
      %s204 = scalar_lea.vmem %s3, %s203
      %s205 = smul.u32 %s18, 2
      %s206 = sadd.s32 %s205, %s19
      %v207 = vld [vmem:[%s195] sm:$0xff]
      %v208 = vld [vmem:[%s195 + $0x10] sm:$0xff]
      %v209 = vld [vmem:[%s195 + $0x20] sm:$0xff]
      %v210 = vld [vmem:[%s195 + $0x30] sm:$0xff]
      %v211 = vld [vmem:[%s195 + $0x40] sm:$0xff]
      %v212 = vld [vmem:[%s195 + $0x50] sm:$0xff]
      %v213 = vld [vmem:[%s195 + $0x60] sm:$0xff]
      %v214 = vld [vmem:[%s195 + $0x70] sm:$0xff]
      %v215 = vld [vmem:[%s195 + $0xa0] sm:$0xff]
      %v216 = vld [vmem:[%s195 + $0xb0] sm:$0xff]
      %v217 = vld [vmem:[%s195 + $0xc0] sm:$0xff]
      %v218 = vld [vmem:[%s195 + $0xd0] sm:$0xff]
      %v219 = vld [vmem:[%s195 + $0xe0] sm:$0xff]
      %v220 = vld [vmem:[%s195 + $0xf0] sm:$0xff]
      %v221 = vld [vmem:[%s195 + $0x100] sm:$0xff]
      %v222 = vld [vmem:[%s195 + $0x110] sm:$0xff]
      %v223 = vld [vmem:[%s1] sm:$0xff]
      %v224 = vld [vmem:[%s1 + $0x8] sm:$0xff]
      %v225 = vld [vmem:[%s1 + $0x10] sm:$0xff]
      %v226 = vld [vmem:[%s1 + $0x18] sm:$0xff]
      %v227 = vld [vmem:[%s1 + $0x20] sm:$0xff]
      %v228 = vld [vmem:[%s1 + $0x28] sm:$0xff]
      %v229 = vld [vmem:[%s1 + $0x30] sm:$0xff]
      %v230 = vld [vmem:[%s1 + $0x38] sm:$0xff]
      %v231 = vld [vmem:[%s1 + $0x40] sm:$0xff]
      %v232 = vld [vmem:[%s1 + $0x48] sm:$0xff]
      %v233 = vld [vmem:[%s1 + $0x50] sm:$0xff]
      %v234 = vld [vmem:[%s1 + $0x58] sm:$0xff]
      %v235 = vld [vmem:[%s1 + $0x60] sm:$0xff]
      %v236 = vld [vmem:[%s1 + $0x68] sm:$0xff]
      %v237 = vld [vmem:[%s1 + $0x70] sm:$0xff]
      %v238 = vld [vmem:[%s1 + $0x78] sm:$0xff]
      %v239 = vld [vmem:[%s195 + $0x1] sm:$0xff]
      %v240 = vld [vmem:[%s195 + $0x11] sm:$0xff]
      %v241 = vld [vmem:[%s195 + $0x21] sm:$0xff]
      %v242 = vld [vmem:[%s195 + $0x31] sm:$0xff]
      %v243 = vld [vmem:[%s195 + $0x41] sm:$0xff]
      %v244 = vld [vmem:[%s195 + $0x51] sm:$0xff]
      %v245 = vld [vmem:[%s195 + $0x61] sm:$0xff]
      %v246 = vld [vmem:[%s195 + $0x71] sm:$0xff]
      %v247 = vld [vmem:[%s195 + $0xa1] sm:$0xff]
      %v248 = vld [vmem:[%s195 + $0xb1] sm:$0xff]
      %v249 = vld [vmem:[%s195 + $0xc1] sm:$0xff]
      %v250 = vld [vmem:[%s195 + $0xd1] sm:$0xff]
      %v251 = vld [vmem:[%s195 + $0xe1] sm:$0xff]
      %v252 = vld [vmem:[%s195 + $0xf1] sm:$0xff]
      %v253 = vld [vmem:[%s195 + $0x101] sm:$0xff]
      %v254 = vld [vmem:[%s195 + $0x111] sm:$0xff]
      %s255 = scalar_lea.vmem %s1, 128
      %v256 = vld [vmem:[%s255] sm:$0xff]
      %v257 = vld [vmem:[%s255 + $0x8] sm:$0xff]
      %v258 = vld [vmem:[%s255 + $0x10] sm:$0xff]
      %v259 = vld [vmem:[%s255 + $0x18] sm:$0xff]
      %v260 = vld [vmem:[%s255 + $0x20] sm:$0xff]
      %v261 = vld [vmem:[%s255 + $0x28] sm:$0xff]
      %v262 = vld [vmem:[%s255 + $0x30] sm:$0xff]
      %v263 = vld [vmem:[%s255 + $0x38] sm:$0xff]
      %v264 = vld [vmem:[%s255 + $0x40] sm:$0xff]
      %v265 = vld [vmem:[%s255 + $0x48] sm:$0xff]
      %v266 = vld [vmem:[%s255 + $0x50] sm:$0xff]
      %v267 = vld [vmem:[%s255 + $0x58] sm:$0xff]
      %v268 = vld [vmem:[%s255 + $0x60] sm:$0xff]
      %v269 = vld [vmem:[%s255 + $0x68] sm:$0xff]
      %v270 = vld [vmem:[%s255 + $0x70] sm:$0xff]
      %v271 = vld [vmem:[%s255 + $0x78] sm:$0xff]
      %272 = vmatprep.subr.mxu0 0.0
      %273 = vmatpush1.msra.mxu0 %v256
      %274 = vmatprep.subr.mxu0 0.0
      %275 = vmatpush1.msra.mxu0 %v257
      %276 = vmatprep.subr.mxu0 0.0
      %277 = vmatpush1.msra.mxu0 %v258
      %278 = vmatprep.subr.mxu0 0.0
      %279 = vmatpush1.msra.mxu0 %v259
      %280 = vmatprep.subr.mxu0 0.0
      %281 = vmatpush1.msra.mxu0 %v260
      %282 = vmatprep.subr.mxu0 0.0
      %283 = vmatpush1.msra.mxu0 %v261
      %284 = vmatprep.subr.mxu0 0.0
      %285 = vmatpush1.msra.mxu0 %v262
      %286 = vmatprep.subr.mxu0 0.0
      %287 = vmatpush1.msra.mxu0 %v263
      %288 = vmatprep.subr.mxu0 0.0
      %289 = vmatpush1.msra.mxu0 %v264
      %290 = vmatprep.subr.mxu0 0.0
      %291 = vmatpush1.msra.mxu0 %v265
      %292 = vmatprep.subr.mxu0 0.0
      %293 = vmatpush1.msra.mxu0 %v266
      %294 = vmatprep.subr.mxu0 0.0
      %295 = vmatpush1.msra.mxu0 %v267
      %296 = vmatprep.subr.mxu0 0.0
      %297 = vmatpush1.msra.mxu0 %v268
      %298 = vmatprep.subr.mxu0 0.0
      %299 = vmatpush1.msra.mxu0 %v269
      %300 = vmatprep.subr.mxu0 0.0
      %301 = vmatpush1.msra.mxu0 %v270
      %302 = vmatprep.subr.mxu0 0.0
      %303 = vmatpush1.msra.mxu0 %v271
      %304 = vmatprep.subr.mxu0 0.0
      %305 = vmatpush1.msra.mxu0 0.0
      %306 = vmatprep.subr.mxu0 0.0
      %307 = vmatpush1.msra.mxu0 0.0
      %308 = vmatprep.subr.mxu0 0.0
      %309 = vmatpush1.msra.mxu0 0.0
      %310 = vmatprep.subr.mxu0 0.0
      %311 = vmatpush1.msra.mxu0 0.0
      %312 = vmatprep.subr.mxu0 0.0
      %313 = vmatpush1.msra.mxu0 0.0
      %314 = vmatprep.subr.mxu0 0.0
      %315 = vmatpush1.msra.mxu0 0.0
      %316 = vmatprep.subr.mxu0 0.0
      %317 = vmatpush1.msra.mxu0 0.0
      %318 = vmatprep.subr.mxu0 0.0
      %319 = vmatpush1.msra.mxu0 0.0
      %320 = vmatprep.subr.mxu0 0.0
      %321 = vmatpush1.msra.mxu0 0.0
      %322 = vmatprep.subr.mxu0 0.0
      %323 = vmatpush1.msra.mxu0 0.0
      %324 = vmatprep.subr.mxu0 0.0
      %325 = vmatpush1.msra.mxu0 0.0
      %326 = vmatprep.subr.mxu0 0.0
      %327 = vmatpush1.msra.mxu0 0.0
      %328 = vmatprep.subr.mxu0 0.0
      %329 = vmatpush1.msra.mxu0 0.0
      %330 = vmatprep.subr.mxu0 0.0
      %331 = vmatpush1.msra.mxu0 0.0
      %332 = vmatprep.subr.mxu0 0.0
      %333 = vmatpush1.msra.mxu0 0.0
      %334 = vmatprep.subr.mxu0 0.0
      %335 = vmatpush1.msra.mxu0 0.0
      %336 = vmatprep.mubr.f32.mxu0 0.0
      %337 = vmatmul.mubr.f32.gmra.mrb[0].mxu0 %v239
      %v338 = vpop.f32.mrb[0].mxu0
      %v339 = vadd.f32 0.0, %v338
      %v340 = vpop.f32.mrb[0].mxu0
      %341 = vmatprep.mubr.f32.mxu0 0.0
      %342 = vmatmul.mubr.f32.gmra.mrb[0].mxu0 %v240
      %v343 = vpop.f32.mrb[0].mxu0
      %v344 = vadd.f32 0.0, %v343
      %v345 = vpop.f32.mrb[0].mxu0
      %346 = vmatprep.mubr.f32.mxu0 0.0
      %347 = vmatmul.mubr.f32.gmra.mrb[0].mxu0 %v241
      %v348 = vpop.f32.mrb[0].mxu0
      %v349 = vadd.f32 0.0, %v348
      %v350 = vpop.f32.mrb[0].mxu0
      %351 = vmatprep.mubr.f32.mxu0 0.0
      %352 = vmatmul.mubr.f32.gmra.mrb[0].mxu0 %v242
      %v353 = vpop.f32.mrb[0].mxu0
      %v354 = vadd.f32 0.0, %v353
      %v355 = vpop.f32.mrb[0].mxu0
      %356 = vmatprep.mubr.f32.mxu0 0.0
      %357 = vmatmul.mubr.f32.gmra.mrb[0].mxu0 %v243
      %v358 = vpop.f32.mrb[0].mxu0
      %v359 = vadd.f32 0.0, %v358
      %v360 = vpop.f32.mrb[0].mxu0
      %361 = vmatprep.mubr.f32.mxu0 0.0
      %362 = vmatmul.mubr.f32.gmra.mrb[0].mxu0 %v244
      %v363 = vpop.f32.mrb[0].mxu0
      %v364 = vadd.f32 0.0, %v363
      %v365 = vpop.f32.mrb[0].mxu0
      %366 = vmatprep.mubr.f32.mxu0 0.0
      %367 = vmatmul.mubr.f32.gmra.mrb[0].mxu0 %v245
      %v368 = vpop.f32.mrb[0].mxu0
      %v369 = vadd.f32 0.0, %v368
      %v370 = vpop.f32.mrb[0].mxu0
      %371 = vmatprep.mubr.f32.mxu0 0.0
      %372 = vmatmul.mubr.f32.gmra.mrb[0].mxu0 %v246
      %v373 = vpop.f32.mrb[0].mxu0
      %v374 = vadd.f32 0.0, %v373
      %v375 = vpop.f32.mrb[0].mxu0
      %376 = vmatprep.mubr.f32.mxu0 0.0
      %377 = vmatmul.mubr.f32.gmra.mrb[0].mxu0 %v247
      %v378 = vpop.f32.mrb[0].mxu0
      %v379 = vadd.f32 0.0, %v378
      %v380 = vpop.f32.mrb[0].mxu0
      %381 = vmatprep.mubr.f32.mxu0 0.0
      %382 = vmatmul.mubr.f32.gmra.mrb[0].mxu0 %v248
      %v383 = vpop.f32.mrb[0].mxu0
      %v384 = vadd.f32 0.0, %v383
      %v385 = vpop.f32.mrb[0].mxu0
      %386 = vmatprep.mubr.f32.mxu0 0.0
      %387 = vmatmul.mubr.f32.gmra.mrb[0].mxu0 %v249
      %v388 = vpop.f32.mrb[0].mxu0
      %v389 = vadd.f32 0.0, %v388
      %v390 = vpop.f32.mrb[0].mxu0
      %391 = vmatprep.mubr.f32.mxu0 0.0
      %392 = vmatmul.mubr.f32.gmra.mrb[0].mxu0 %v250
      %v393 = vpop.f32.mrb[0].mxu0
      %v394 = vadd.f32 0.0, %v393
      %v395 = vpop.f32.mrb[0].mxu0
      %396 = vmatprep.mubr.f32.mxu0 0.0
      %397 = vmatmul.mubr.f32.gmra.mrb[0].mxu0 %v251
      %v398 = vpop.f32.mrb[0].mxu0
      %v399 = vadd.f32 0.0, %v398
      %v400 = vpop.f32.mrb[0].mxu0
      %401 = vmatprep.mubr.f32.mxu0 0.0
      %402 = vmatmul.mubr.f32.gmra.mrb[0].mxu0 %v252
      %v403 = vpop.f32.mrb[0].mxu0
      %v404 = vadd.f32 0.0, %v403
      %v405 = vpop.f32.mrb[0].mxu0
      %406 = vmatprep.mubr.f32.mxu0 0.0
      %407 = vmatmul.mubr.f32.gmra.mrb[0].mxu0 %v253
      %v408 = vpop.f32.mrb[0].mxu0
      %v409 = vadd.f32 0.0, %v408
      %v410 = vpop.f32.mrb[0].mxu0
      %411 = vmatprep.mubr.f32.mxu0 0.0
      %412 = vmatmul.mubr.f32.gmra.mrb[0].mxu0 %v254
      %v413 = vpop.f32.mrb[0].mxu0
      %v414 = vadd.f32 0.0, %v413
      %v415 = vpop.f32.mrb[0].mxu0
      %416 = vdwg.mxu0
      %417 = vmatprep.subr.mxu0 0.0
      %418 = vmatpush1.msra.mxu0 %v223
      %419 = vmatprep.subr.mxu0 0.0
      %420 = vmatpush1.msra.mxu0 %v224
      %421 = vmatprep.subr.mxu0 0.0
      %422 = vmatpush1.msra.mxu0 %v225
      %423 = vmatprep.subr.mxu0 0.0
      %424 = vmatpush1.msra.mxu0 %v226
      %425 = vmatprep.subr.mxu0 0.0
      %426 = vmatpush1.msra.mxu0 %v227
      %427 = vmatprep.subr.mxu0 0.0
      %428 = vmatpush1.msra.mxu0 %v228
      %429 = vmatprep.subr.mxu0 0.0
      %430 = vmatpush1.msra.mxu0 %v229
      %431 = vmatprep.subr.mxu0 0.0
      %432 = vmatpush1.msra.mxu0 %v230
      %433 = vmatprep.subr.mxu0 0.0
      %434 = vmatpush1.msra.mxu0 %v231
      %435 = vmatprep.subr.mxu0 0.0
      %436 = vmatpush1.msra.mxu0 %v232
      %437 = vmatprep.subr.mxu0 0.0
      %438 = vmatpush1.msra.mxu0 %v233
      %439 = vmatprep.subr.mxu0 0.0
      %440 = vmatpush1.msra.mxu0 %v234
      %441 = vmatprep.subr.mxu0 0.0
      %442 = vmatpush1.msra.mxu0 %v235
      %443 = vmatprep.subr.mxu0 0.0
      %444 = vmatpush1.msra.mxu0 %v236
      %445 = vmatprep.subr.mxu0 0.0
      %446 = vmatpush1.msra.mxu0 %v237
      %447 = vmatprep.subr.mxu0 0.0
      %448 = vmatpush1.msra.mxu0 %v238
      %449 = vmatprep.subr.mxu0 0.0
      %450 = vmatpush1.msra.mxu0 0.0
      %451 = vmatprep.subr.mxu0 0.0
      %452 = vmatpush1.msra.mxu0 0.0
      %453 = vmatprep.subr.mxu0 0.0
      %454 = vmatpush1.msra.mxu0 0.0
      %455 = vmatprep.subr.mxu0 0.0
      %456 = vmatpush1.msra.mxu0 0.0
      %457 = vmatprep.subr.mxu0 0.0
      %458 = vmatpush1.msra.mxu0 0.0
      %459 = vmatprep.subr.mxu0 0.0
      %460 = vmatpush1.msra.mxu0 0.0
      %461 = vmatprep.subr.mxu0 0.0
      %462 = vmatpush1.msra.mxu0 0.0
      %463 = vmatprep.subr.mxu0 0.0
      %464 = vmatpush1.msra.mxu0 0.0
      %465 = vmatprep.subr.mxu0 0.0
      %466 = vmatpush1.msra.mxu0 0.0
      %467 = vmatprep.subr.mxu0 0.0
      %468 = vmatpush1.msra.mxu0 0.0
      %469 = vmatprep.subr.mxu0 0.0
      %470 = vmatpush1.msra.mxu0 0.0
      %471 = vmatprep.subr.mxu0 0.0
      %472 = vmatpush1.msra.mxu0 0.0
      %473 = vmatprep.subr.mxu0 0.0
      %474 = vmatpush1.msra.mxu0 0.0
      %475 = vmatprep.subr.mxu0 0.0
      %476 = vmatpush1.msra.mxu0 0.0
      %477 = vmatprep.subr.mxu0 0.0
      %478 = vmatpush1.msra.mxu0 0.0
      %479 = vmatprep.subr.mxu0 0.0
      %480 = vmatpush1.msra.mxu0 0.0
      %481 = vmatprep.mubr.f32.mxu0 0.0
      %482 = vmatmul.mubr.f32.gmra.mrb[0].mxu0 %v207
      %v483 = vpop.f32.mrb[0].mxu0
      %v484 = vadd.f32 %v339, %v483
      %v485 = vpop.f32.mrb[0].mxu0
      %486 = vmatprep.mubr.f32.mxu0 0.0
      %487 = vmatmul.mubr.f32.gmra.mrb[0].mxu0 %v208
      %v488 = vpop.f32.mrb[0].mxu0
      %v489 = vadd.f32 %v344, %v488
      %v490 = vpop.f32.mrb[0].mxu0
      %491 = vmatprep.mubr.f32.mxu0 0.0
      %492 = vmatmul.mubr.f32.gmra.mrb[0].mxu0 %v209
      %v493 = vpop.f32.mrb[0].mxu0
      %v494 = vadd.f32 %v349, %v493
      %v495 = vpop.f32.mrb[0].mxu0
      %496 = vmatprep.mubr.f32.mxu0 0.0
      %497 = vmatmul.mubr.f32.gmra.mrb[0].mxu0 %v210
      %v498 = vpop.f32.mrb[0].mxu0
      %v499 = vadd.f32 %v354, %v498
      %v500 = vpop.f32.mrb[0].mxu0
      %501 = vmatprep.mubr.f32.mxu0 0.0
      %502 = vmatmul.mubr.f32.gmra.mrb[0].mxu0 %v211
      %v503 = vpop.f32.mrb[0].mxu0
      %v504 = vadd.f32 %v359, %v503
      %v505 = vpop.f32.mrb[0].mxu0
      %506 = vmatprep.mubr.f32.mxu0 0.0
      %507 = vmatmul.mubr.f32.gmra.mrb[0].mxu0 %v212
      %v508 = vpop.f32.mrb[0].mxu0
      %v509 = vadd.f32 %v364, %v508
      %v510 = vpop.f32.mrb[0].mxu0
      %511 = vmatprep.mubr.f32.mxu0 0.0
      %512 = vmatmul.mubr.f32.gmra.mrb[0].mxu0 %v213
      %v513 = vpop.f32.mrb[0].mxu0
      %v514 = vadd.f32 %v369, %v513
      %v515 = vpop.f32.mrb[0].mxu0
      %516 = vmatprep.mubr.f32.mxu0 0.0
      %517 = vmatmul.mubr.f32.gmra.mrb[0].mxu0 %v214
      %v518 = vpop.f32.mrb[0].mxu0
      %v519 = vadd.f32 %v374, %v518
      %v520 = vpop.f32.mrb[0].mxu0
      %521 = vmatprep.mubr.f32.mxu0 0.0
      %522 = vmatmul.mubr.f32.gmra.mrb[0].mxu0 %v215
      %v523 = vpop.f32.mrb[0].mxu0
      %v524 = vadd.f32 %v379, %v523
      %v525 = vpop.f32.mrb[0].mxu0
      %526 = vmatprep.mubr.f32.mxu0 0.0
      %527 = vmatmul.mubr.f32.gmra.mrb[0].mxu0 %v216
      %v528 = vpop.f32.mrb[0].mxu0
      %v529 = vadd.f32 %v384, %v528
      %v530 = vpop.f32.mrb[0].mxu0
      %531 = vmatprep.mubr.f32.mxu0 0.0
      %532 = vmatmul.mubr.f32.gmra.mrb[0].mxu0 %v217
      %v533 = vpop.f32.mrb[0].mxu0
      %v534 = vadd.f32 %v389, %v533
      %v535 = vpop.f32.mrb[0].mxu0
      %536 = vmatprep.mubr.f32.mxu0 0.0
      %537 = vmatmul.mubr.f32.gmra.mrb[0].mxu0 %v218
      %v538 = vpop.f32.mrb[0].mxu0
      %v539 = vadd.f32 %v394, %v538
      %v540 = vpop.f32.mrb[0].mxu0
      %541 = vmatprep.mubr.f32.mxu0 0.0
      %542 = vmatmul.mubr.f32.gmra.mrb[0].mxu0 %v219
      %v543 = vpop.f32.mrb[0].mxu0
      %v544 = vadd.f32 %v399, %v543
      %v545 = vpop.f32.mrb[0].mxu0
      %546 = vmatprep.mubr.f32.mxu0 0.0
      %547 = vmatmul.mubr.f32.gmra.mrb[0].mxu0 %v220
      %v548 = vpop.f32.mrb[0].mxu0
      %v549 = vadd.f32 %v404, %v548
      %v550 = vpop.f32.mrb[0].mxu0
      %551 = vmatprep.mubr.f32.mxu0 0.0
      %552 = vmatmul.mubr.f32.gmra.mrb[0].mxu0 %v221
      %v553 = vpop.f32.mrb[0].mxu0
      %v554 = vadd.f32 %v409, %v553
      %v555 = vpop.f32.mrb[0].mxu0
      %556 = vmatprep.mubr.f32.mxu0 0.0
      %557 = vmatmul.mubr.f32.gmra.mrb[0].mxu0 %v222
      %v558 = vpop.f32.mrb[0].mxu0
      %v559 = vadd.f32 %v414, %v558
      %v560 = vpop.f32.mrb[0].mxu0
      %561 = vdwg.mxu0
      %v562 = vld [vmem:[%s195 + $0x2] sm:$0xff]
      %v563 = vld [vmem:[%s195 + $0x12] sm:$0xff]
      %v564 = vld [vmem:[%s195 + $0x22] sm:$0xff]
      %v565 = vld [vmem:[%s195 + $0x32] sm:$0xff]
      %v566 = vld [vmem:[%s195 + $0x42] sm:$0xff]
      %v567 = vld [vmem:[%s195 + $0x52] sm:$0xff]
      %v568 = vld [vmem:[%s195 + $0x62] sm:$0xff]
      %v569 = vld [vmem:[%s195 + $0x72] sm:$0xff]
      %v570 = vld [vmem:[%s195 + $0xa2] sm:$0xff]
      %v571 = vld [vmem:[%s195 + $0xb2] sm:$0xff]
      %v572 = vld [vmem:[%s195 + $0xc2] sm:$0xff]
      %v573 = vld [vmem:[%s195 + $0xd2] sm:$0xff]
      %v574 = vld [vmem:[%s195 + $0xe2] sm:$0xff]
      %v575 = vld [vmem:[%s195 + $0xf2] sm:$0xff]
      %v576 = vld [vmem:[%s195 + $0x102] sm:$0xff]
      %v577 = vld [vmem:[%s195 + $0x112] sm:$0xff]
      %s578 = scalar_lea.vmem %s1, 256
      %v579 = vld [vmem:[%s578] sm:$0xff]
      %v580 = vld [vmem:[%s578 + $0x8] sm:$0xff]
      %v581 = vld [vmem:[%s578 + $0x10] sm:$0xff]
      %v582 = vld [vmem:[%s578 + $0x18] sm:$0xff]
      %v583 = vld [vmem:[%s578 + $0x20] sm:$0xff]
      %v584 = vld [vmem:[%s578 + $0x28] sm:$0xff]
      %v585 = vld [vmem:[%s578 + $0x30] sm:$0xff]
      %v586 = vld [vmem:[%s578 + $0x38] sm:$0xff]
      %v587 = vld [vmem:[%s578 + $0x40] sm:$0xff]
      %v588 = vld [vmem:[%s578 + $0x48] sm:$0xff]
      %v589 = vld [vmem:[%s578 + $0x50] sm:$0xff]
      %v590 = vld [vmem:[%s578 + $0x58] sm:$0xff]
      %v591 = vld [vmem:[%s578 + $0x60] sm:$0xff]
      %v592 = vld [vmem:[%s578 + $0x68] sm:$0xff]
      %v593 = vld [vmem:[%s578 + $0x70] sm:$0xff]
      %v594 = vld [vmem:[%s578 + $0x78] sm:$0xff]
      %595 = vmatprep.subr.mxu0 0.0
      %596 = vmatpush1.msra.mxu0 %v579
      %597 = vmatprep.subr.mxu0 0.0
      %598 = vmatpush1.msra.mxu0 %v580
      %599 = vmatprep.subr.mxu0 0.0
      %600 = vmatpush1.msra.mxu0 %v581
      %601 = vmatprep.subr.mxu0 0.0
      %602 = vmatpush1.msra.mxu0 %v582
      %603 = vmatprep.subr.mxu0 0.0
      %604 = vmatpush1.msra.mxu0 %v583
      %605 = vmatprep.subr.mxu0 0.0
      %606 = vmatpush1.msra.mxu0 %v584
      %607 = vmatprep.subr.mxu0 0.0
      %608 = vmatpush1.msra.mxu0 %v585
      %609 = vmatprep.subr.mxu0 0.0
      %610 = vmatpush1.msra.mxu0 %v586
      %611 = vmatprep.subr.mxu0 0.0
      %612 = vmatpush1.msra.mxu0 %v587
      %613 = vmatprep.subr.mxu0 0.0
      %614 = vmatpush1.msra.mxu0 %v588
      %615 = vmatprep.subr.mxu0 0.0
      %616 = vmatpush1.msra.mxu0 %v589
      %617 = vmatprep.subr.mxu0 0.0
      %618 = vmatpush1.msra.mxu0 %v590
      %619 = vmatprep.subr.mxu0 0.0
      %620 = vmatpush1.msra.mxu0 %v591
      %621 = vmatprep.subr.mxu0 0.0
      %622 = vmatpush1.msra.mxu0 %v592
      %623 = vmatprep.subr.mxu0 0.0
      %624 = vmatpush1.msra.mxu0 %v593
      %625 = vmatprep.subr.mxu0 0.0
      %626 = vmatpush1.msra.mxu0 %v594
      %627 = vmatprep.subr.mxu0 0.0
      %628 = vmatpush1.msra.mxu0 0.0
      %629 = vmatprep.subr.mxu0 0.0
      %630 = vmatpush1.msra.mxu0 0.0
      %631 = vmatprep.subr.mxu0 0.0
      %632 = vmatpush1.msra.mxu0 0.0
      %633 = vmatprep.subr.mxu0 0.0
      %634 = vmatpush1.msra.mxu0 0.0
      %635 = vmatprep.subr.mxu0 0.0
      %636 = vmatpush1.msra.mxu0 0.0
      %637 = vmatprep.subr.mxu0 0.0
      %638 = vmatpush1.msra.mxu0 0.0
      %639 = vmatprep.subr.mxu0 0.0
      %640 = vmatpush1.msra.mxu0 0.0
      %641 = vmatprep.subr.mxu0 0.0
      %642 = vmatpush1.msra.mxu0 0.0
      %643 = vmatprep.subr.mxu0 0.0
      %644 = vmatpush1.msra.mxu0 0.0
      %645 = vmatprep.subr.mxu0 0.0
      %646 = vmatpush1.msra.mxu0 0.0
      %647 = vmatprep.subr.mxu0 0.0
      %648 = vmatpush1.msra.mxu0 0.0
      %649 = vmatprep.subr.mxu0 0.0
      %650 = vmatpush1.msra.mxu0 0.0
      %651 = vmatprep.subr.mxu0 0.0
      %652 = vmatpush1.msra.mxu0 0.0
      %653 = vmatprep.subr.mxu0 0.0
      %654 = vmatpush1.msra.mxu0 0.0
      %655 = vmatprep.subr.mxu0 0.0
      %656 = vmatpush1.msra.mxu0 0.0
      %657 = vmatprep.subr.mxu0 0.0
      %658 = vmatpush1.msra.mxu0 0.0
      %659 = vmatprep.mubr.f32.mxu0 0.0
      %660 = vmatmul.mubr.f32.gmra.mrb[0].mxu0 %v562
      %v661 = vpop.f32.mrb[0].mxu0
      %v662 = vadd.f32 0.0, %v661
      %v663 = vpop.f32.mrb[0].mxu0
      %664 = vmatprep.mubr.f32.mxu0 0.0
      %665 = vmatmul.mubr.f32.gmra.mrb[0].mxu0 %v563
      %v666 = vpop.f32.mrb[0].mxu0
      %v667 = vadd.f32 0.0, %v666
      %v668 = vpop.f32.mrb[0].mxu0
      %669 = vmatprep.mubr.f32.mxu0 0.0
      %670 = vmatmul.mubr.f32.gmra.mrb[0].mxu0 %v564
      %v671 = vpop.f32.mrb[0].mxu0
      %v672 = vadd.f32 0.0, %v671
      %v673 = vpop.f32.mrb[0].mxu0
      %674 = vmatprep.mubr.f32.mxu0 0.0
      %675 = vmatmul.mubr.f32.gmra.mrb[0].mxu0 %v565
      %v676 = vpop.f32.mrb[0].mxu0
      %v677 = vadd.f32 0.0, %v676
      %v678 = vpop.f32.mrb[0].mxu0
      %679 = vmatprep.mubr.f32.mxu0 0.0
      %680 = vmatmul.mubr.f32.gmra.mrb[0].mxu0 %v566
      %v681 = vpop.f32.mrb[0].mxu0
      %v682 = vadd.f32 0.0, %v681
      %v683 = vpop.f32.mrb[0].mxu0
      %684 = vmatprep.mubr.f32.mxu0 0.0
      %685 = vmatmul.mubr.f32.gmra.mrb[0].mxu0 %v567
      %v686 = vpop.f32.mrb[0].mxu0
      %v687 = vadd.f32 0.0, %v686
      %v688 = vpop.f32.mrb[0].mxu0
      %689 = vmatprep.mubr.f32.mxu0 0.0
      %690 = vmatmul.mubr.f32.gmra.mrb[0].mxu0 %v568
      %v691 = vpop.f32.mrb[0].mxu0
      %v692 = vadd.f32 0.0, %v691
      %v693 = vpop.f32.mrb[0].mxu0
      %694 = vmatprep.mubr.f32.mxu0 0.0
      %695 = vmatmul.mubr.f32.gmra.mrb[0].mxu0 %v569
      %v696 = vpop.f32.mrb[0].mxu0
      %v697 = vadd.f32 0.0, %v696
      %v698 = vpop.f32.mrb[0].mxu0
      %699 = vmatprep.mubr.f32.mxu0 0.0
      %700 = vmatmul.mubr.f32.gmra.mrb[0].mxu0 %v570
      %v701 = vpop.f32.mrb[0].mxu0
      %v702 = vadd.f32 0.0, %v701
      %v703 = vpop.f32.mrb[0].mxu0
      %704 = vmatprep.mubr.f32.mxu0 0.0
      %705 = vmatmul.mubr.f32.gmra.mrb[0].mxu0 %v571
      %v706 = vpop.f32.mrb[0].mxu0
      %v707 = vadd.f32 0.0, %v706
      %v708 = vpop.f32.mrb[0].mxu0
      %709 = vmatprep.mubr.f32.mxu0 0.0
      %710 = vmatmul.mubr.f32.gmra.mrb[0].mxu0 %v572
      %v711 = vpop.f32.mrb[0].mxu0
      %v712 = vadd.f32 0.0, %v711
      %v713 = vpop.f32.mrb[0].mxu0
      %714 = vmatprep.mubr.f32.mxu0 0.0
      %715 = vmatmul.mubr.f32.gmra.mrb[0].mxu0 %v573
      %v716 = vpop.f32.mrb[0].mxu0
      %v717 = vadd.f32 0.0, %v716
      %v718 = vpop.f32.mrb[0].mxu0
      %719 = vmatprep.mubr.f32.mxu0 0.0
      %720 = vmatmul.mubr.f32.gmra.mrb[0].mxu0 %v574
      %v721 = vpop.f32.mrb[0].mxu0
      %v722 = vadd.f32 0.0, %v721
      %v723 = vpop.f32.mrb[0].mxu0
      %724 = vmatprep.mubr.f32.mxu0 0.0
      %725 = vmatmul.mubr.f32.gmra.mrb[0].mxu0 %v575
      %v726 = vpop.f32.mrb[0].mxu0
      %v727 = vadd.f32 0.0, %v726
      %v728 = vpop.f32.mrb[0].mxu0
      %729 = vmatprep.mubr.f32.mxu0 0.0
      %730 = vmatmul.mubr.f32.gmra.mrb[0].mxu0 %v576
      %v731 = vpop.f32.mrb[0].mxu0
      %v732 = vadd.f32 0.0, %v731
      %v733 = vpop.f32.mrb[0].mxu0
      %734 = vmatprep.mubr.f32.mxu0 0.0
      %735 = vmatmul.mubr.f32.gmra.mrb[0].mxu0 %v577
      %v736 = vpop.f32.mrb[0].mxu0
      %v737 = vadd.f32 0.0, %v736
      %v738 = vpop.f32.mrb[0].mxu0
      %739 = vdwg.mxu0
      %v740 = vadd.f32 %v484, %v662
      %v741 = vadd.f32 %v489, %v667
      %v742 = vadd.f32 %v494, %v672
      %v743 = vadd.f32 %v499, %v677
      %v744 = vadd.f32 %v504, %v682
      %v745 = vadd.f32 %v509, %v687
      %v746 = vadd.f32 %v514, %v692
      %v747 = vadd.f32 %v519, %v697
      %v748 = vadd.f32 %v524, %v702
      %v749 = vadd.f32 %v529, %v707
      %v750 = vadd.f32 %v534, %v712
      %v751 = vadd.f32 %v539, %v717
      %v752 = vadd.f32 %v544, %v722
      %v753 = vadd.f32 %v549, %v727
      %v754 = vadd.f32 %v554, %v732
      %v755 = vadd.f32 %v559, %v737
      %s756 = scalar_lea.vmem %s195, 16
      %v757 = vld [vmem:[%s756] sm:$0xff]
      %v758 = vld [vmem:[%s756 + $0x10] sm:$0xff]
      %v759 = vld [vmem:[%s756 + $0x20] sm:$0xff]
      %v760 = vld [vmem:[%s756 + $0x30] sm:$0xff]
      %v761 = vld [vmem:[%s756 + $0x40] sm:$0xff]
      %v762 = vld [vmem:[%s756 + $0x50] sm:$0xff]
      %v763 = vld [vmem:[%s756 + $0x60] sm:$0xff]
      %v764 = vld [vmem:[%s756 + $0x70] sm:$0xff]
      %v765 = vld [vmem:[%s756 + $0xa0] sm:$0xff]
      %v766 = vld [vmem:[%s756 + $0xb0] sm:$0xff]
      %v767 = vld [vmem:[%s756 + $0xc0] sm:$0xff]
      %v768 = vld [vmem:[%s756 + $0xd0] sm:$0xff]
      %v769 = vld [vmem:[%s756 + $0xe0] sm:$0xff]
      %v770 = vld [vmem:[%s756 + $0xf0] sm:$0xff]
      %v771 = vld [vmem:[%s756 + $0x100] sm:$0xff]
      %v772 = vld [vmem:[%s756 + $0x110] sm:$0xff]
      %s773 = scalar_lea.vmem %s1, 384
      %v774 = vld [vmem:[%s773] sm:$0xff]
      %v775 = vld [vmem:[%s773 + $0x8] sm:$0xff]
      %v776 = vld [vmem:[%s773 + $0x10] sm:$0xff]
      %v777 = vld [vmem:[%s773 + $0x18] sm:$0xff]
      %v778 = vld [vmem:[%s773 + $0x20] sm:$0xff]
      %v779 = vld [vmem:[%s773 + $0x28] sm:$0xff]
      %v780 = vld [vmem:[%s773 + $0x30] sm:$0xff]
      %v781 = vld [vmem:[%s773 + $0x38] sm:$0xff]
      %v782 = vld [vmem:[%s773 + $0x40] sm:$0xff]
      %v783 = vld [vmem:[%s773 + $0x48] sm:$0xff]
      %v784 = vld [vmem:[%s773 + $0x50] sm:$0xff]
      %v785 = vld [vmem:[%s773 + $0x58] sm:$0xff]
      %v786 = vld [vmem:[%s773 + $0x60] sm:$0xff]
      %v787 = vld [vmem:[%s773 + $0x68] sm:$0xff]
      %v788 = vld [vmem:[%s773 + $0x70] sm:$0xff]
      %v789 = vld [vmem:[%s773 + $0x78] sm:$0xff]
      %790 = vmatprep.subr.mxu0 0.0
      %791 = vmatpush1.msra.mxu0 %v774
      %792 = vmatprep.subr.mxu0 0.0
      %793 = vmatpush1.msra.mxu0 %v775
      %794 = vmatprep.subr.mxu0 0.0
      %795 = vmatpush1.msra.mxu0 %v776
      %796 = vmatprep.subr.mxu0 0.0
      %797 = vmatpush1.msra.mxu0 %v777
      %798 = vmatprep.subr.mxu0 0.0
      %799 = vmatpush1.msra.mxu0 %v778
      %800 = vmatprep.subr.mxu0 0.0
      %801 = vmatpush1.msra.mxu0 %v779
      %802 = vmatprep.subr.mxu0 0.0
      %803 = vmatpush1.msra.mxu0 %v780
      %804 = vmatprep.subr.mxu0 0.0
      %805 = vmatpush1.msra.mxu0 %v781
      %806 = vmatprep.subr.mxu0 0.0
      %807 = vmatpush1.msra.mxu0 %v782
      %808 = vmatprep.subr.mxu0 0.0
      %809 = vmatpush1.msra.mxu0 %v783
      %810 = vmatprep.subr.mxu0 0.0
      %811 = vmatpush1.msra.mxu0 %v784
      %812 = vmatprep.subr.mxu0 0.0
      %813 = vmatpush1.msra.mxu0 %v785
      %814 = vmatprep.subr.mxu0 0.0
      %815 = vmatpush1.msra.mxu0 %v786
      %816 = vmatprep.subr.mxu0 0.0
      %817 = vmatpush1.msra.mxu0 %v787
      %818 = vmatprep.subr.mxu0 0.0
      %819 = vmatpush1.msra.mxu0 %v788
      %820 = vmatprep.subr.mxu0 0.0
      %821 = vmatpush1.msra.mxu0 %v789
      %822 = vmatprep.subr.mxu0 0.0
      %823 = vmatpush1.msra.mxu0 0.0
      %824 = vmatprep.subr.mxu0 0.0
      %825 = vmatpush1.msra.mxu0 0.0
      %826 = vmatprep.subr.mxu0 0.0
      %827 = vmatpush1.msra.mxu0 0.0
      %828 = vmatprep.subr.mxu0 0.0
      %829 = vmatpush1.msra.mxu0 0.0
      %830 = vmatprep.subr.mxu0 0.0
      %831 = vmatpush1.msra.mxu0 0.0
      %832 = vmatprep.subr.mxu0 0.0
      %833 = vmatpush1.msra.mxu0 0.0
      %834 = vmatprep.subr.mxu0 0.0
      %835 = vmatpush1.msra.mxu0 0.0
      %836 = vmatprep.subr.mxu0 0.0
      %837 = vmatpush1.msra.mxu0 0.0
      %838 = vmatprep.subr.mxu0 0.0
      %839 = vmatpush1.msra.mxu0 0.0
      %840 = vmatprep.subr.mxu0 0.0
      %841 = vmatpush1.msra.mxu0 0.0
      %842 = vmatprep.subr.mxu0 0.0
      %843 = vmatpush1.msra.mxu0 0.0
      %844 = vmatprep.subr.mxu0 0.0
      %845 = vmatpush1.msra.mxu0 0.0
      %846 = vmatprep.subr.mxu0 0.0
      %847 = vmatpush1.msra.mxu0 0.0
      %848 = vmatprep.subr.mxu0 0.0
      %849 = vmatpush1.msra.mxu0 0.0
      %850 = vmatprep.subr.mxu0 0.0
      %851 = vmatpush1.msra.mxu0 0.0
      %852 = vmatprep.subr.mxu0 0.0
      %853 = vmatpush1.msra.mxu0 0.0
      %854 = vmatprep.mubr.f32.mxu0 0.0
      %855 = vmatmul.mubr.f32.gmra.mrb[0].mxu0 %v757
      %v856 = vpop.f32.mrb[0].mxu0
      %v857 = vadd.f32 0.0, %v856
      %v858 = vpop.f32.mrb[0].mxu0
      %859 = vmatprep.mubr.f32.mxu0 0.0
      %860 = vmatmul.mubr.f32.gmra.mrb[0].mxu0 %v758
      %v861 = vpop.f32.mrb[0].mxu0
      %v862 = vadd.f32 0.0, %v861
      %v863 = vpop.f32.mrb[0].mxu0
      %864 = vmatprep.mubr.f32.mxu0 0.0
      %865 = vmatmul.mubr.f32.gmra.mrb[0].mxu0 %v759
      %v866 = vpop.f32.mrb[0].mxu0
      %v867 = vadd.f32 0.0, %v866
      %v868 = vpop.f32.mrb[0].mxu0
      %869 = vmatprep.mubr.f32.mxu0 0.0
      %870 = vmatmul.mubr.f32.gmra.mrb[0].mxu0 %v760
      %v871 = vpop.f32.mrb[0].mxu0
      %v872 = vadd.f32 0.0, %v871
      %v873 = vpop.f32.mrb[0].mxu0
      %874 = vmatprep.mubr.f32.mxu0 0.0
      %875 = vmatmul.mubr.f32.gmra.mrb[0].mxu0 %v761
      %v876 = vpop.f32.mrb[0].mxu0
      %v877 = vadd.f32 0.0, %v876
      %v878 = vpop.f32.mrb[0].mxu0
      %879 = vmatprep.mubr.f32.mxu0 0.0
      %880 = vmatmul.mubr.f32.gmra.mrb[0].mxu0 %v762
      %v881 = vpop.f32.mrb[0].mxu0
      %v882 = vadd.f32 0.0, %v881
      %v883 = vpop.f32.mrb[0].mxu0
      %884 = vmatprep.mubr.f32.mxu0 0.0
      %885 = vmatmul.mubr.f32.gmra.mrb[0].mxu0 %v763
      %v886 = vpop.f32.mrb[0].mxu0
      %v887 = vadd.f32 0.0, %v886
      %v888 = vpop.f32.mrb[0].mxu0
      %889 = vmatprep.mubr.f32.mxu0 0.0
      %890 = vmatmul.mubr.f32.gmra.mrb[0].mxu0 %v764
      %v891 = vpop.f32.mrb[0].mxu0
      %v892 = vadd.f32 0.0, %v891
      %v893 = vpop.f32.mrb[0].mxu0
      %894 = vmatprep.mubr.f32.mxu0 0.0
      %895 = vmatmul.mubr.f32.gmra.mrb[0].mxu0 %v765
      %v896 = vpop.f32.mrb[0].mxu0
      %v897 = vadd.f32 0.0, %v896
      %v898 = vpop.f32.mrb[0].mxu0
      %899 = vmatprep.mubr.f32.mxu0 0.0
      %900 = vmatmul.mubr.f32.gmra.mrb[0].mxu0 %v766
      %v901 = vpop.f32.mrb[0].mxu0
      %v902 = vadd.f32 0.0, %v901
      %v903 = vpop.f32.mrb[0].mxu0
      %904 = vmatprep.mubr.f32.mxu0 0.0
      %905 = vmatmul.mubr.f32.gmra.mrb[0].mxu0 %v767
      %v906 = vpop.f32.mrb[0].mxu0
      %v907 = vadd.f32 0.0, %v906
      %v908 = vpop.f32.mrb[0].mxu0
      %909 = vmatprep.mubr.f32.mxu0 0.0
      %910 = vmatmul.mubr.f32.gmra.mrb[0].mxu0 %v768
      %v911 = vpop.f32.mrb[0].mxu0
      %v912 = vadd.f32 0.0, %v911
      %v913 = vpop.f32.mrb[0].mxu0
      %914 = vmatprep.mubr.f32.mxu0 0.0
      %915 = vmatmul.mubr.f32.gmra.mrb[0].mxu0 %v769
      %v916 = vpop.f32.mrb[0].mxu0
      %v917 = vadd.f32 0.0, %v916
      %v918 = vpop.f32.mrb[0].mxu0
      %919 = vmatprep.mubr.f32.mxu0 0.0
      %920 = vmatmul.mubr.f32.gmra.mrb[0].mxu0 %v770
      %v921 = vpop.f32.mrb[0].mxu0
      %v922 = vadd.f32 0.0, %v921
      %v923 = vpop.f32.mrb[0].mxu0
      %924 = vmatprep.mubr.f32.mxu0 0.0
      %925 = vmatmul.mubr.f32.gmra.mrb[0].mxu0 %v771
      %v926 = vpop.f32.mrb[0].mxu0
      %v927 = vadd.f32 0.0, %v926
      %v928 = vpop.f32.mrb[0].mxu0
      %929 = vmatprep.mubr.f32.mxu0 0.0
      %930 = vmatmul.mubr.f32.gmra.mrb[0].mxu0 %v772
      %v931 = vpop.f32.mrb[0].mxu0
      %v932 = vadd.f32 0.0, %v931
      %v933 = vpop.f32.mrb[0].mxu0
      %934 = vdwg.mxu0
      %v935 = vadd.f32 %v740, %v857
      %v936 = vadd.f32 %v741, %v862
      %v937 = vadd.f32 %v742, %v867
      %v938 = vadd.f32 %v743, %v872
      %v939 = vadd.f32 %v744, %v877
      %v940 = vadd.f32 %v745, %v882
      %v941 = vadd.f32 %v746, %v887
      %v942 = vadd.f32 %v747, %v892
      %v943 = vadd.f32 %v748, %v897
      %v944 = vadd.f32 %v749, %v902
      %v945 = vadd.f32 %v750, %v907
      %v946 = vadd.f32 %v751, %v912
      %v947 = vadd.f32 %v752, %v917
      %v948 = vadd.f32 %v753, %v922
      %v949 = vadd.f32 %v754, %v927
      %v950 = vadd.f32 %v755, %v932
      %v951 = vld [vmem:[%s756 + $0x1] sm:$0xff]
      %v952 = vld [vmem:[%s756 + $0x11] sm:$0xff]
      %v953 = vld [vmem:[%s756 + $0x21] sm:$0xff]
      %v954 = vld [vmem:[%s756 + $0x31] sm:$0xff]
      %v955 = vld [vmem:[%s756 + $0x41] sm:$0xff]
      %v956 = vld [vmem:[%s756 + $0x51] sm:$0xff]
      %v957 = vld [vmem:[%s756 + $0x61] sm:$0xff]
      %v958 = vld [vmem:[%s756 + $0x71] sm:$0xff]
      %v959 = vld [vmem:[%s756 + $0xa1] sm:$0xff]
      %v960 = vld [vmem:[%s756 + $0xb1] sm:$0xff]
      %v961 = vld [vmem:[%s756 + $0xc1] sm:$0xff]
      %v962 = vld [vmem:[%s756 + $0xd1] sm:$0xff]
      %v963 = vld [vmem:[%s756 + $0xe1] sm:$0xff]
      %v964 = vld [vmem:[%s756 + $0xf1] sm:$0xff]
      %v965 = vld [vmem:[%s756 + $0x101] sm:$0xff]
      %v966 = vld [vmem:[%s756 + $0x111] sm:$0xff]
      %s967 = scalar_lea.vmem %s1, 512
      %v968 = vld [vmem:[%s967] sm:$0xff]
      %v969 = vld [vmem:[%s967 + $0x8] sm:$0xff]
      %v970 = vld [vmem:[%s967 + $0x10] sm:$0xff]
      %v971 = vld [vmem:[%s967 + $0x18] sm:$0xff]
      %v972 = vld [vmem:[%s967 + $0x20] sm:$0xff]
      %v973 = vld [vmem:[%s967 + $0x28] sm:$0xff]
      %v974 = vld [vmem:[%s967 + $0x30] sm:$0xff]
      %v975 = vld [vmem:[%s967 + $0x38] sm:$0xff]
      %v976 = vld [vmem:[%s967 + $0x40] sm:$0xff]
      %v977 = vld [vmem:[%s967 + $0x48] sm:$0xff]
      %v978 = vld [vmem:[%s967 + $0x50] sm:$0xff]
      %v979 = vld [vmem:[%s967 + $0x58] sm:$0xff]
      %v980 = vld [vmem:[%s967 + $0x60] sm:$0xff]
      %v981 = vld [vmem:[%s967 + $0x68] sm:$0xff]
      %v982 = vld [vmem:[%s967 + $0x70] sm:$0xff]
      %v983 = vld [vmem:[%s967 + $0x78] sm:$0xff]
      %984 = vmatprep.subr.mxu0 0.0
      %985 = vmatpush1.msra.mxu0 %v968
      %986 = vmatprep.subr.mxu0 0.0
      %987 = vmatpush1.msra.mxu0 %v969
      %988 = vmatprep.subr.mxu0 0.0
      %989 = vmatpush1.msra.mxu0 %v970
      %990 = vmatprep.subr.mxu0 0.0
      %991 = vmatpush1.msra.mxu0 %v971
      %992 = vmatprep.subr.mxu0 0.0
      %993 = vmatpush1.msra.mxu0 %v972
      %994 = vmatprep.subr.mxu0 0.0
      %995 = vmatpush1.msra.mxu0 %v973
      %996 = vmatprep.subr.mxu0 0.0
      %997 = vmatpush1.msra.mxu0 %v974
      %998 = vmatprep.subr.mxu0 0.0
      %999 = vmatpush1.msra.mxu0 %v975
      %1000 = vmatprep.subr.mxu0 0.0
      %1001 = vmatpush1.msra.mxu0 %v976
      %1002 = vmatprep.subr.mxu0 0.0
      %1003 = vmatpush1.msra.mxu0 %v977
      %1004 = vmatprep.subr.mxu0 0.0
      %1005 = vmatpush1.msra.mxu0 %v978
      %1006 = vmatprep.subr.mxu0 0.0
      %1007 = vmatpush1.msra.mxu0 %v979
      %1008 = vmatprep.subr.mxu0 0.0
      %1009 = vmatpush1.msra.mxu0 %v980
      %1010 = vmatprep.subr.mxu0 0.0
      %1011 = vmatpush1.msra.mxu0 %v981
      %1012 = vmatprep.subr.mxu0 0.0
      %1013 = vmatpush1.msra.mxu0 %v982
      %1014 = vmatprep.subr.mxu0 0.0
      %1015 = vmatpush1.msra.mxu0 %v983
      %1016 = vmatprep.subr.mxu0 0.0
      %1017 = vmatpush1.msra.mxu0 0.0
      %1018 = vmatprep.subr.mxu0 0.0
      %1019 = vmatpush1.msra.mxu0 0.0
      %1020 = vmatprep.subr.mxu0 0.0
      %1021 = vmatpush1.msra.mxu0 0.0
      %1022 = vmatprep.subr.mxu0 0.0
      %1023 = vmatpush1.msra.mxu0 0.0
      %1024 = vmatprep.subr.mxu0 0.0
      %1025 = vmatpush1.msra.mxu0 0.0
      %1026 = vmatprep.subr.mxu0 0.0
      %1027 = vmatpush1.msra.mxu0 0.0
      %1028 = vmatprep.subr.mxu0 0.0
      %1029 = vmatpush1.msra.mxu0 0.0
      %1030 = vmatprep.subr.mxu0 0.0
      %1031 = vmatpush1.msra.mxu0 0.0
      %1032 = vmatprep.subr.mxu0 0.0
      %1033 = vmatpush1.msra.mxu0 0.0
      %1034 = vmatprep.subr.mxu0 0.0
      %1035 = vmatpush1.msra.mxu0 0.0
      %1036 = vmatprep.subr.mxu0 0.0
      %1037 = vmatpush1.msra.mxu0 0.0
      %1038 = vmatprep.subr.mxu0 0.0
      %1039 = vmatpush1.msra.mxu0 0.0
      %1040 = vmatprep.subr.mxu0 0.0
      %1041 = vmatpush1.msra.mxu0 0.0
      %1042 = vmatprep.subr.mxu0 0.0
      %1043 = vmatpush1.msra.mxu0 0.0
      %1044 = vmatprep.subr.mxu0 0.0
      %1045 = vmatpush1.msra.mxu0 0.0
      %1046 = vmatprep.subr.mxu0 0.0
      %1047 = vmatpush1.msra.mxu0 0.0
      %1048 = vmatprep.mubr.f32.mxu0 0.0
      %1049 = vmatmul.mubr.f32.gmra.mrb[0].mxu0 %v951
      %v1050 = vpop.f32.mrb[0].mxu0
      %v1051 = vadd.f32 0.0, %v1050
      %v1052 = vpop.f32.mrb[0].mxu0
      %1053 = vmatprep.mubr.f32.mxu0 0.0
      %1054 = vmatmul.mubr.f32.gmra.mrb[0].mxu0 %v952
      %v1055 = vpop.f32.mrb[0].mxu0
      %v1056 = vadd.f32 0.0, %v1055
      %v1057 = vpop.f32.mrb[0].mxu0
      %1058 = vmatprep.mubr.f32.mxu0 0.0
      %1059 = vmatmul.mubr.f32.gmra.mrb[0].mxu0 %v953
      %v1060 = vpop.f32.mrb[0].mxu0
      %v1061 = vadd.f32 0.0, %v1060
      %v1062 = vpop.f32.mrb[0].mxu0
      %1063 = vmatprep.mubr.f32.mxu0 0.0
      %1064 = vmatmul.mubr.f32.gmra.mrb[0].mxu0 %v954
      %v1065 = vpop.f32.mrb[0].mxu0
      %v1066 = vadd.f32 0.0, %v1065
      %v1067 = vpop.f32.mrb[0].mxu0
      %1068 = vmatprep.mubr.f32.mxu0 0.0
      %1069 = vmatmul.mubr.f32.gmra.mrb[0].mxu0 %v955
      %v1070 = vpop.f32.mrb[0].mxu0
      %v1071 = vadd.f32 0.0, %v1070
      %v1072 = vpop.f32.mrb[0].mxu0
      %1073 = vmatprep.mubr.f32.mxu0 0.0
      %1074 = vmatmul.mubr.f32.gmra.mrb[0].mxu0 %v956
      %v1075 = vpop.f32.mrb[0].mxu0
      %v1076 = vadd.f32 0.0, %v1075
      %v1077 = vpop.f32.mrb[0].mxu0
      %1078 = vmatprep.mubr.f32.mxu0 0.0
      %1079 = vmatmul.mubr.f32.gmra.mrb[0].mxu0 %v957
      %v1080 = vpop.f32.mrb[0].mxu0
      %v1081 = vadd.f32 0.0, %v1080
      %v1082 = vpop.f32.mrb[0].mxu0
      %1083 = vmatprep.mubr.f32.mxu0 0.0
      %1084 = vmatmul.mubr.f32.gmra.mrb[0].mxu0 %v958
      %v1085 = vpop.f32.mrb[0].mxu0
      %v1086 = vadd.f32 0.0, %v1085
      %v1087 = vpop.f32.mrb[0].mxu0
      %1088 = vmatprep.mubr.f32.mxu0 0.0
      %1089 = vmatmul.mubr.f32.gmra.mrb[0].mxu0 %v959
      %v1090 = vpop.f32.mrb[0].mxu0
      %v1091 = vadd.f32 0.0, %v1090
      %v1092 = vpop.f32.mrb[0].mxu0
      %1093 = vmatprep.mubr.f32.mxu0 0.0
      %1094 = vmatmul.mubr.f32.gmra.mrb[0].mxu0 %v960
      %v1095 = vpop.f32.mrb[0].mxu0
      %v1096 = vadd.f32 0.0, %v1095
      %v1097 = vpop.f32.mrb[0].mxu0
      %1098 = vmatprep.mubr.f32.mxu0 0.0
      %1099 = vmatmul.mubr.f32.gmra.mrb[0].mxu0 %v961
      %v1100 = vpop.f32.mrb[0].mxu0
      %v1101 = vadd.f32 0.0, %v1100
      %v1102 = vpop.f32.mrb[0].mxu0
      %1103 = vmatprep.mubr.f32.mxu0 0.0
      %1104 = vmatmul.mubr.f32.gmra.mrb[0].mxu0 %v962
      %v1105 = vpop.f32.mrb[0].mxu0
      %v1106 = vadd.f32 0.0, %v1105
      %v1107 = vpop.f32.mrb[0].mxu0
      %1108 = vmatprep.mubr.f32.mxu0 0.0
      %1109 = vmatmul.mubr.f32.gmra.mrb[0].mxu0 %v963
      %v1110 = vpop.f32.mrb[0].mxu0
      %v1111 = vadd.f32 0.0, %v1110
      %v1112 = vpop.f32.mrb[0].mxu0
      %1113 = vmatprep.mubr.f32.mxu0 0.0
      %1114 = vmatmul.mubr.f32.gmra.mrb[0].mxu0 %v964
      %v1115 = vpop.f32.mrb[0].mxu0
      %v1116 = vadd.f32 0.0, %v1115
      %v1117 = vpop.f32.mrb[0].mxu0
      %1118 = vmatprep.mubr.f32.mxu0 0.0
      %1119 = vmatmul.mubr.f32.gmra.mrb[0].mxu0 %v965
      %v1120 = vpop.f32.mrb[0].mxu0
      %v1121 = vadd.f32 0.0, %v1120
      %v1122 = vpop.f32.mrb[0].mxu0
      %1123 = vmatprep.mubr.f32.mxu0 0.0
      %1124 = vmatmul.mubr.f32.gmra.mrb[0].mxu0 %v966
      %v1125 = vpop.f32.mrb[0].mxu0
      %v1126 = vadd.f32 0.0, %v1125
      %v1127 = vpop.f32.mrb[0].mxu0
      %1128 = vdwg.mxu0
      %v1129 = vadd.f32 %v935, %v1051
      %v1130 = vadd.f32 %v936, %v1056
      %v1131 = vadd.f32 %v937, %v1061
      %v1132 = vadd.f32 %v938, %v1066
      %v1133 = vadd.f32 %v939, %v1071
      %v1134 = vadd.f32 %v940, %v1076
      %v1135 = vadd.f32 %v941, %v1081
      %v1136 = vadd.f32 %v942, %v1086
      %v1137 = vadd.f32 %v943, %v1091
      %v1138 = vadd.f32 %v944, %v1096
      %v1139 = vadd.f32 %v945, %v1101
      %v1140 = vadd.f32 %v946, %v1106
      %v1141 = vadd.f32 %v947, %v1111
      %v1142 = vadd.f32 %v948, %v1116
      %v1143 = vadd.f32 %v949, %v1121
      %v1144 = vadd.f32 %v950, %v1126
      %v1145 = vld [vmem:[%s756 + $0x2] sm:$0xff]
      %v1146 = vld [vmem:[%s756 + $0x12] sm:$0xff]
      %v1147 = vld [vmem:[%s756 + $0x22] sm:$0xff]
      %v1148 = vld [vmem:[%s756 + $0x32] sm:$0xff]
      %v1149 = vld [vmem:[%s756 + $0x42] sm:$0xff]
      %v1150 = vld [vmem:[%s756 + $0x52] sm:$0xff]
      %v1151 = vld [vmem:[%s756 + $0x62] sm:$0xff]
      %v1152 = vld [vmem:[%s756 + $0x72] sm:$0xff]
      %v1153 = vld [vmem:[%s756 + $0xa2] sm:$0xff]
      %v1154 = vld [vmem:[%s756 + $0xb2] sm:$0xff]
      %v1155 = vld [vmem:[%s756 + $0xc2] sm:$0xff]
      %v1156 = vld [vmem:[%s756 + $0xd2] sm:$0xff]
      %v1157 = vld [vmem:[%s756 + $0xe2] sm:$0xff]
      %v1158 = vld [vmem:[%s756 + $0xf2] sm:$0xff]
      %v1159 = vld [vmem:[%s756 + $0x102] sm:$0xff]
      %v1160 = vld [vmem:[%s756 + $0x112] sm:$0xff]
      %s1161 = scalar_lea.vmem %s1, 640
      %v1162 = vld [vmem:[%s1161] sm:$0xff]
      %v1163 = vld [vmem:[%s1161 + $0x8] sm:$0xff]
      %v1164 = vld [vmem:[%s1161 + $0x10] sm:$0xff]
      %v1165 = vld [vmem:[%s1161 + $0x18] sm:$0xff]
      %v1166 = vld [vmem:[%s1161 + $0x20] sm:$0xff]
      %v1167 = vld [vmem:[%s1161 + $0x28] sm:$0xff]
      %v1168 = vld [vmem:[%s1161 + $0x30] sm:$0xff]
      %v1169 = vld [vmem:[%s1161 + $0x38] sm:$0xff]
      %v1170 = vld [vmem:[%s1161 + $0x40] sm:$0xff]
      %v1171 = vld [vmem:[%s1161 + $0x48] sm:$0xff]
      %v1172 = vld [vmem:[%s1161 + $0x50] sm:$0xff]
      %v1173 = vld [vmem:[%s1161 + $0x58] sm:$0xff]
      %v1174 = vld [vmem:[%s1161 + $0x60] sm:$0xff]
      %v1175 = vld [vmem:[%s1161 + $0x68] sm:$0xff]
      %v1176 = vld [vmem:[%s1161 + $0x70] sm:$0xff]
      %v1177 = vld [vmem:[%s1161 + $0x78] sm:$0xff]
      %1178 = vmatprep.subr.mxu0 0.0
      %1179 = vmatpush1.msra.mxu0 %v1162
      %1180 = vmatprep.subr.mxu0 0.0
      %1181 = vmatpush1.msra.mxu0 %v1163
      %1182 = vmatprep.subr.mxu0 0.0
      %1183 = vmatpush1.msra.mxu0 %v1164
      %1184 = vmatprep.subr.mxu0 0.0
      %1185 = vmatpush1.msra.mxu0 %v1165
      %1186 = vmatprep.subr.mxu0 0.0
      %1187 = vmatpush1.msra.mxu0 %v1166
      %1188 = vmatprep.subr.mxu0 0.0
      %1189 = vmatpush1.msra.mxu0 %v1167
      %1190 = vmatprep.subr.mxu0 0.0
      %1191 = vmatpush1.msra.mxu0 %v1168
      %1192 = vmatprep.subr.mxu0 0.0
      %1193 = vmatpush1.msra.mxu0 %v1169
      %1194 = vmatprep.subr.mxu0 0.0
      %1195 = vmatpush1.msra.mxu0 %v1170
      %1196 = vmatprep.subr.mxu0 0.0
      %1197 = vmatpush1.msra.mxu0 %v1171
      %1198 = vmatprep.subr.mxu0 0.0
      %1199 = vmatpush1.msra.mxu0 %v1172
      %1200 = vmatprep.subr.mxu0 0.0
      %1201 = vmatpush1.msra.mxu0 %v1173
      %1202 = vmatprep.subr.mxu0 0.0
      %1203 = vmatpush1.msra.mxu0 %v1174
      %1204 = vmatprep.subr.mxu0 0.0
      %1205 = vmatpush1.msra.mxu0 %v1175
      %1206 = vmatprep.subr.mxu0 0.0
      %1207 = vmatpush1.msra.mxu0 %v1176
      %1208 = vmatprep.subr.mxu0 0.0
      %1209 = vmatpush1.msra.mxu0 %v1177
      %1210 = vmatprep.subr.mxu0 0.0
      %1211 = vmatpush1.msra.mxu0 0.0
      %1212 = vmatprep.subr.mxu0 0.0
      %1213 = vmatpush1.msra.mxu0 0.0
      %1214 = vmatprep.subr.mxu0 0.0
      %1215 = vmatpush1.msra.mxu0 0.0
      %1216 = vmatprep.subr.mxu0 0.0
      %1217 = vmatpush1.msra.mxu0 0.0
      %1218 = vmatprep.subr.mxu0 0.0
      %1219 = vmatpush1.msra.mxu0 0.0
      %1220 = vmatprep.subr.mxu0 0.0
      %1221 = vmatpush1.msra.mxu0 0.0
      %1222 = vmatprep.subr.mxu0 0.0
      %1223 = vmatpush1.msra.mxu0 0.0
      %1224 = vmatprep.subr.mxu0 0.0
      %1225 = vmatpush1.msra.mxu0 0.0
      %1226 = vmatprep.subr.mxu0 0.0
      %1227 = vmatpush1.msra.mxu0 0.0
      %1228 = vmatprep.subr.mxu0 0.0
      %1229 = vmatpush1.msra.mxu0 0.0
      %1230 = vmatprep.subr.mxu0 0.0
      %1231 = vmatpush1.msra.mxu0 0.0
      %1232 = vmatprep.subr.mxu0 0.0
      %1233 = vmatpush1.msra.mxu0 0.0
      %1234 = vmatprep.subr.mxu0 0.0
      %1235 = vmatpush1.msra.mxu0 0.0
      %1236 = vmatprep.subr.mxu0 0.0
      %1237 = vmatpush1.msra.mxu0 0.0
      %1238 = vmatprep.subr.mxu0 0.0
      %1239 = vmatpush1.msra.mxu0 0.0
      %1240 = vmatprep.subr.mxu0 0.0
      %1241 = vmatpush1.msra.mxu0 0.0
      %1242 = vmatprep.mubr.f32.mxu0 0.0
      %1243 = vmatmul.mubr.f32.gmra.mrb[0].mxu0 %v1145
      %v1244 = vpop.f32.mrb[0].mxu0
      %v1245 = vadd.f32 0.0, %v1244
      %v1246 = vpop.f32.mrb[0].mxu0
      %1247 = vmatprep.mubr.f32.mxu0 0.0
      %1248 = vmatmul.mubr.f32.gmra.mrb[0].mxu0 %v1146
      %v1249 = vpop.f32.mrb[0].mxu0
      %v1250 = vadd.f32 0.0, %v1249
      %v1251 = vpop.f32.mrb[0].mxu0
      %1252 = vmatprep.mubr.f32.mxu0 0.0
      %1253 = vmatmul.mubr.f32.gmra.mrb[0].mxu0 %v1147
      %v1254 = vpop.f32.mrb[0].mxu0
      %v1255 = vadd.f32 0.0, %v1254
      %v1256 = vpop.f32.mrb[0].mxu0
      %1257 = vmatprep.mubr.f32.mxu0 0.0
      %1258 = vmatmul.mubr.f32.gmra.mrb[0].mxu0 %v1148
      %v1259 = vpop.f32.mrb[0].mxu0
      %v1260 = vadd.f32 0.0, %v1259
      %v1261 = vpop.f32.mrb[0].mxu0
      %1262 = vmatprep.mubr.f32.mxu0 0.0
      %1263 = vmatmul.mubr.f32.gmra.mrb[0].mxu0 %v1149
      %v1264 = vpop.f32.mrb[0].mxu0
      %v1265 = vadd.f32 0.0, %v1264
      %v1266 = vpop.f32.mrb[0].mxu0
      %1267 = vmatprep.mubr.f32.mxu0 0.0
      %1268 = vmatmul.mubr.f32.gmra.mrb[0].mxu0 %v1150
      %v1269 = vpop.f32.mrb[0].mxu0
      %v1270 = vadd.f32 0.0, %v1269
      %v1271 = vpop.f32.mrb[0].mxu0
      %1272 = vmatprep.mubr.f32.mxu0 0.0
      %1273 = vmatmul.mubr.f32.gmra.mrb[0].mxu0 %v1151
      %v1274 = vpop.f32.mrb[0].mxu0
      %v1275 = vadd.f32 0.0, %v1274
      %v1276 = vpop.f32.mrb[0].mxu0
      %1277 = vmatprep.mubr.f32.mxu0 0.0
      %1278 = vmatmul.mubr.f32.gmra.mrb[0].mxu0 %v1152
      %v1279 = vpop.f32.mrb[0].mxu0
      %v1280 = vadd.f32 0.0, %v1279
      %v1281 = vpop.f32.mrb[0].mxu0
      %1282 = vmatprep.mubr.f32.mxu0 0.0
      %1283 = vmatmul.mubr.f32.gmra.mrb[0].mxu0 %v1153
      %v1284 = vpop.f32.mrb[0].mxu0
      %v1285 = vadd.f32 0.0, %v1284
      %v1286 = vpop.f32.mrb[0].mxu0
      %1287 = vmatprep.mubr.f32.mxu0 0.0
      %1288 = vmatmul.mubr.f32.gmra.mrb[0].mxu0 %v1154
      %v1289 = vpop.f32.mrb[0].mxu0
      %v1290 = vadd.f32 0.0, %v1289
      %v1291 = vpop.f32.mrb[0].mxu0
      %1292 = vmatprep.mubr.f32.mxu0 0.0
      %1293 = vmatmul.mubr.f32.gmra.mrb[0].mxu0 %v1155
      %v1294 = vpop.f32.mrb[0].mxu0
      %v1295 = vadd.f32 0.0, %v1294
      %v1296 = vpop.f32.mrb[0].mxu0
      %1297 = vmatprep.mubr.f32.mxu0 0.0
      %1298 = vmatmul.mubr.f32.gmra.mrb[0].mxu0 %v1156
      %v1299 = vpop.f32.mrb[0].mxu0
      %v1300 = vadd.f32 0.0, %v1299
      %v1301 = vpop.f32.mrb[0].mxu0
      %1302 = vmatprep.mubr.f32.mxu0 0.0
      %1303 = vmatmul.mubr.f32.gmra.mrb[0].mxu0 %v1157
      %v1304 = vpop.f32.mrb[0].mxu0
      %v1305 = vadd.f32 0.0, %v1304
      %v1306 = vpop.f32.mrb[0].mxu0
      %1307 = vmatprep.mubr.f32.mxu0 0.0
      %1308 = vmatmul.mubr.f32.gmra.mrb[0].mxu0 %v1158
      %v1309 = vpop.f32.mrb[0].mxu0
      %v1310 = vadd.f32 0.0, %v1309
      %v1311 = vpop.f32.mrb[0].mxu0
      %1312 = vmatprep.mubr.f32.mxu0 0.0
      %1313 = vmatmul.mubr.f32.gmra.mrb[0].mxu0 %v1159
      %v1314 = vpop.f32.mrb[0].mxu0
      %v1315 = vadd.f32 0.0, %v1314
      %v1316 = vpop.f32.mrb[0].mxu0
      %1317 = vmatprep.mubr.f32.mxu0 0.0
      %1318 = vmatmul.mubr.f32.gmra.mrb[0].mxu0 %v1160
      %v1319 = vpop.f32.mrb[0].mxu0
      %v1320 = vadd.f32 0.0, %v1319
      %v1321 = vpop.f32.mrb[0].mxu0
      %1322 = vdwg.mxu0
      %v1323 = vadd.f32 %v1129, %v1245
      %v1324 = vadd.f32 %v1130, %v1250
      %v1325 = vadd.f32 %v1131, %v1255
      %v1326 = vadd.f32 %v1132, %v1260
      %v1327 = vadd.f32 %v1133, %v1265
      %v1328 = vadd.f32 %v1134, %v1270
      %v1329 = vadd.f32 %v1135, %v1275
      %v1330 = vadd.f32 %v1136, %v1280
      %v1331 = vadd.f32 %v1137, %v1285
      %v1332 = vadd.f32 %v1138, %v1290
      %v1333 = vadd.f32 %v1139, %v1295
      %v1334 = vadd.f32 %v1140, %v1300
      %v1335 = vadd.f32 %v1141, %v1305
      %v1336 = vadd.f32 %v1142, %v1310
      %v1337 = vadd.f32 %v1143, %v1315
      %v1338 = vadd.f32 %v1144, %v1320
      %s1339 = scalar_lea.vmem %s195, 32
      %v1340 = vld [vmem:[%s1339] sm:$0xff]
      %v1341 = vld [vmem:[%s1339 + $0x10] sm:$0xff]
      %v1342 = vld [vmem:[%s1339 + $0x20] sm:$0xff]
      %v1343 = vld [vmem:[%s1339 + $0x30] sm:$0xff]
      %v1344 = vld [vmem:[%s1339 + $0x40] sm:$0xff]
      %v1345 = vld [vmem:[%s1339 + $0x50] sm:$0xff]
      %v1346 = vld [vmem:[%s1339 + $0x60] sm:$0xff]
      %v1347 = vld [vmem:[%s1339 + $0x70] sm:$0xff]
      %v1348 = vld [vmem:[%s1339 + $0xa0] sm:$0xff]
      %v1349 = vld [vmem:[%s1339 + $0xb0] sm:$0xff]
      %v1350 = vld [vmem:[%s1339 + $0xc0] sm:$0xff]
      %v1351 = vld [vmem:[%s1339 + $0xd0] sm:$0xff]
      %v1352 = vld [vmem:[%s1339 + $0xe0] sm:$0xff]
      %v1353 = vld [vmem:[%s1339 + $0xf0] sm:$0xff]
      %v1354 = vld [vmem:[%s1339 + $0x100] sm:$0xff]
      %v1355 = vld [vmem:[%s1339 + $0x110] sm:$0xff]
      %s1356 = scalar_lea.vmem %s1, 768
      %v1357 = vld [vmem:[%s1356] sm:$0xff]
      %v1358 = vld [vmem:[%s1356 + $0x8] sm:$0xff]
      %v1359 = vld [vmem:[%s1356 + $0x10] sm:$0xff]
      %v1360 = vld [vmem:[%s1356 + $0x18] sm:$0xff]
      %v1361 = vld [vmem:[%s1356 + $0x20] sm:$0xff]
      %v1362 = vld [vmem:[%s1356 + $0x28] sm:$0xff]
      %v1363 = vld [vmem:[%s1356 + $0x30] sm:$0xff]
      %v1364 = vld [vmem:[%s1356 + $0x38] sm:$0xff]
      %v1365 = vld [vmem:[%s1356 + $0x40] sm:$0xff]
      %v1366 = vld [vmem:[%s1356 + $0x48] sm:$0xff]
      %v1367 = vld [vmem:[%s1356 + $0x50] sm:$0xff]
      %v1368 = vld [vmem:[%s1356 + $0x58] sm:$0xff]
      %v1369 = vld [vmem:[%s1356 + $0x60] sm:$0xff]
      %v1370 = vld [vmem:[%s1356 + $0x68] sm:$0xff]
      %v1371 = vld [vmem:[%s1356 + $0x70] sm:$0xff]
      %v1372 = vld [vmem:[%s1356 + $0x78] sm:$0xff]
      %1373 = vmatprep.subr.mxu0 0.0
      %1374 = vmatpush1.msra.mxu0 %v1357
      %1375 = vmatprep.subr.mxu0 0.0
      %1376 = vmatpush1.msra.mxu0 %v1358
      %1377 = vmatprep.subr.mxu0 0.0
      %1378 = vmatpush1.msra.mxu0 %v1359
      %1379 = vmatprep.subr.mxu0 0.0
      %1380 = vmatpush1.msra.mxu0 %v1360
      %1381 = vmatprep.subr.mxu0 0.0
      %1382 = vmatpush1.msra.mxu0 %v1361
      %1383 = vmatprep.subr.mxu0 0.0
      %1384 = vmatpush1.msra.mxu0 %v1362
      %1385 = vmatprep.subr.mxu0 0.0
      %1386 = vmatpush1.msra.mxu0 %v1363
      %1387 = vmatprep.subr.mxu0 0.0
      %1388 = vmatpush1.msra.mxu0 %v1364
      %1389 = vmatprep.subr.mxu0 0.0
      %1390 = vmatpush1.msra.mxu0 %v1365
      %1391 = vmatprep.subr.mxu0 0.0
      %1392 = vmatpush1.msra.mxu0 %v1366
      %1393 = vmatprep.subr.mxu0 0.0
      %1394 = vmatpush1.msra.mxu0 %v1367
      %1395 = vmatprep.subr.mxu0 0.0
      %1396 = vmatpush1.msra.mxu0 %v1368
      %1397 = vmatprep.subr.mxu0 0.0
      %1398 = vmatpush1.msra.mxu0 %v1369
      %1399 = vmatprep.subr.mxu0 0.0
      %1400 = vmatpush1.msra.mxu0 %v1370
      %1401 = vmatprep.subr.mxu0 0.0
      %1402 = vmatpush1.msra.mxu0 %v1371
      %1403 = vmatprep.subr.mxu0 0.0
      %1404 = vmatpush1.msra.mxu0 %v1372
      %1405 = vmatprep.subr.mxu0 0.0
      %1406 = vmatpush1.msra.mxu0 0.0
      %1407 = vmatprep.subr.mxu0 0.0
      %1408 = vmatpush1.msra.mxu0 0.0
      %1409 = vmatprep.subr.mxu0 0.0
      %1410 = vmatpush1.msra.mxu0 0.0
      %1411 = vmatprep.subr.mxu0 0.0
      %1412 = vmatpush1.msra.mxu0 0.0
      %1413 = vmatprep.subr.mxu0 0.0
      %1414 = vmatpush1.msra.mxu0 0.0
      %1415 = vmatprep.subr.mxu0 0.0
      %1416 = vmatpush1.msra.mxu0 0.0
      %1417 = vmatprep.subr.mxu0 0.0
      %1418 = vmatpush1.msra.mxu0 0.0
      %1419 = vmatprep.subr.mxu0 0.0
      %1420 = vmatpush1.msra.mxu0 0.0
      %1421 = vmatprep.subr.mxu0 0.0
      %1422 = vmatpush1.msra.mxu0 0.0
      %1423 = vmatprep.subr.mxu0 0.0
      %1424 = vmatpush1.msra.mxu0 0.0
      %1425 = vmatprep.subr.mxu0 0.0
      %1426 = vmatpush1.msra.mxu0 0.0
      %1427 = vmatprep.subr.mxu0 0.0
      %1428 = vmatpush1.msra.mxu0 0.0
      %1429 = vmatprep.subr.mxu0 0.0
      %1430 = vmatpush1.msra.mxu0 0.0
      %1431 = vmatprep.subr.mxu0 0.0
      %1432 = vmatpush1.msra.mxu0 0.0
      %1433 = vmatprep.subr.mxu0 0.0
      %1434 = vmatpush1.msra.mxu0 0.0
      %1435 = vmatprep.subr.mxu0 0.0
      %1436 = vmatpush1.msra.mxu0 0.0
      %1437 = vmatprep.mubr.f32.mxu0 0.0
      %1438 = vmatmul.mubr.f32.gmra.mrb[0].mxu0 %v1340
      %v1439 = vpop.f32.mrb[0].mxu0
      %v1440 = vadd.f32 0.0, %v1439
      %v1441 = vpop.f32.mrb[0].mxu0
      %1442 = vmatprep.mubr.f32.mxu0 0.0
      %1443 = vmatmul.mubr.f32.gmra.mrb[0].mxu0 %v1341
      %v1444 = vpop.f32.mrb[0].mxu0
      %v1445 = vadd.f32 0.0, %v1444
      %v1446 = vpop.f32.mrb[0].mxu0
      %1447 = vmatprep.mubr.f32.mxu0 0.0
      %1448 = vmatmul.mubr.f32.gmra.mrb[0].mxu0 %v1342
      %v1449 = vpop.f32.mrb[0].mxu0
      %v1450 = vadd.f32 0.0, %v1449
      %v1451 = vpop.f32.mrb[0].mxu0
      %1452 = vmatprep.mubr.f32.mxu0 0.0
      %1453 = vmatmul.mubr.f32.gmra.mrb[0].mxu0 %v1343
      %v1454 = vpop.f32.mrb[0].mxu0
      %v1455 = vadd.f32 0.0, %v1454
      %v1456 = vpop.f32.mrb[0].mxu0
      %1457 = vmatprep.mubr.f32.mxu0 0.0
      %1458 = vmatmul.mubr.f32.gmra.mrb[0].mxu0 %v1344
      %v1459 = vpop.f32.mrb[0].mxu0
      %v1460 = vadd.f32 0.0, %v1459
      %v1461 = vpop.f32.mrb[0].mxu0
      %1462 = vmatprep.mubr.f32.mxu0 0.0
      %1463 = vmatmul.mubr.f32.gmra.mrb[0].mxu0 %v1345
      %v1464 = vpop.f32.mrb[0].mxu0
      %v1465 = vadd.f32 0.0, %v1464
      %v1466 = vpop.f32.mrb[0].mxu0
      %1467 = vmatprep.mubr.f32.mxu0 0.0
      %1468 = vmatmul.mubr.f32.gmra.mrb[0].mxu0 %v1346
      %v1469 = vpop.f32.mrb[0].mxu0
      %v1470 = vadd.f32 0.0, %v1469
      %v1471 = vpop.f32.mrb[0].mxu0
      %1472 = vmatprep.mubr.f32.mxu0 0.0
      %1473 = vmatmul.mubr.f32.gmra.mrb[0].mxu0 %v1347
      %v1474 = vpop.f32.mrb[0].mxu0
      %v1475 = vadd.f32 0.0, %v1474
      %v1476 = vpop.f32.mrb[0].mxu0
      %1477 = vmatprep.mubr.f32.mxu0 0.0
      %1478 = vmatmul.mubr.f32.gmra.mrb[0].mxu0 %v1348
      %v1479 = vpop.f32.mrb[0].mxu0
      %v1480 = vadd.f32 0.0, %v1479
      %v1481 = vpop.f32.mrb[0].mxu0
      %1482 = vmatprep.mubr.f32.mxu0 0.0
      %1483 = vmatmul.mubr.f32.gmra.mrb[0].mxu0 %v1349
      %v1484 = vpop.f32.mrb[0].mxu0
      %v1485 = vadd.f32 0.0, %v1484
      %v1486 = vpop.f32.mrb[0].mxu0
      %1487 = vmatprep.mubr.f32.mxu0 0.0
      %1488 = vmatmul.mubr.f32.gmra.mrb[0].mxu0 %v1350
      %v1489 = vpop.f32.mrb[0].mxu0
      %v1490 = vadd.f32 0.0, %v1489
      %v1491 = vpop.f32.mrb[0].mxu0
      %1492 = vmatprep.mubr.f32.mxu0 0.0
      %1493 = vmatmul.mubr.f32.gmra.mrb[0].mxu0 %v1351
      %v1494 = vpop.f32.mrb[0].mxu0
      %v1495 = vadd.f32 0.0, %v1494
      %v1496 = vpop.f32.mrb[0].mxu0
      %1497 = vmatprep.mubr.f32.mxu0 0.0
      %1498 = vmatmul.mubr.f32.gmra.mrb[0].mxu0 %v1352
      %v1499 = vpop.f32.mrb[0].mxu0
      %v1500 = vadd.f32 0.0, %v1499
      %v1501 = vpop.f32.mrb[0].mxu0
      %1502 = vmatprep.mubr.f32.mxu0 0.0
      %1503 = vmatmul.mubr.f32.gmra.mrb[0].mxu0 %v1353
      %v1504 = vpop.f32.mrb[0].mxu0
      %v1505 = vadd.f32 0.0, %v1504
      %v1506 = vpop.f32.mrb[0].mxu0
      %1507 = vmatprep.mubr.f32.mxu0 0.0
      %1508 = vmatmul.mubr.f32.gmra.mrb[0].mxu0 %v1354
      %v1509 = vpop.f32.mrb[0].mxu0
      %v1510 = vadd.f32 0.0, %v1509
      %v1511 = vpop.f32.mrb[0].mxu0
      %1512 = vmatprep.mubr.f32.mxu0 0.0
      %1513 = vmatmul.mubr.f32.gmra.mrb[0].mxu0 %v1355
      %v1514 = vpop.f32.mrb[0].mxu0
      %v1515 = vadd.f32 0.0, %v1514
      %v1516 = vpop.f32.mrb[0].mxu0
      %1517 = vdwg.mxu0
      %v1518 = vadd.f32 %v1323, %v1440
      %v1519 = vadd.f32 %v1324, %v1445
      %v1520 = vadd.f32 %v1325, %v1450
      %v1521 = vadd.f32 %v1326, %v1455
      %v1522 = vadd.f32 %v1327, %v1460
      %v1523 = vadd.f32 %v1328, %v1465
      %v1524 = vadd.f32 %v1329, %v1470
      %v1525 = vadd.f32 %v1330, %v1475
      %v1526 = vadd.f32 %v1331, %v1480
      %v1527 = vadd.f32 %v1332, %v1485
      %v1528 = vadd.f32 %v1333, %v1490
      %v1529 = vadd.f32 %v1334, %v1495
      %v1530 = vadd.f32 %v1335, %v1500
      %v1531 = vadd.f32 %v1336, %v1505
      %v1532 = vadd.f32 %v1337, %v1510
      %v1533 = vadd.f32 %v1338, %v1515
      %v1534 = vld [vmem:[%s1339 + $0x1] sm:$0xff]
      %v1535 = vld [vmem:[%s1339 + $0x11] sm:$0xff]
      %v1536 = vld [vmem:[%s1339 + $0x21] sm:$0xff]
      %v1537 = vld [vmem:[%s1339 + $0x31] sm:$0xff]
      %v1538 = vld [vmem:[%s1339 + $0x41] sm:$0xff]
      %v1539 = vld [vmem:[%s1339 + $0x51] sm:$0xff]
      %v1540 = vld [vmem:[%s1339 + $0x61] sm:$0xff]
      %v1541 = vld [vmem:[%s1339 + $0x71] sm:$0xff]
      %v1542 = vld [vmem:[%s1339 + $0xa1] sm:$0xff]
      %v1543 = vld [vmem:[%s1339 + $0xb1] sm:$0xff]
      %v1544 = vld [vmem:[%s1339 + $0xc1] sm:$0xff]
      %v1545 = vld [vmem:[%s1339 + $0xd1] sm:$0xff]
      %v1546 = vld [vmem:[%s1339 + $0xe1] sm:$0xff]
      %v1547 = vld [vmem:[%s1339 + $0xf1] sm:$0xff]
      %v1548 = vld [vmem:[%s1339 + $0x101] sm:$0xff]
      %v1549 = vld [vmem:[%s1339 + $0x111] sm:$0xff]
      %s1550 = scalar_lea.vmem %s1, 896
      %v1551 = vld [vmem:[%s1550] sm:$0xff]
      %v1552 = vld [vmem:[%s1550 + $0x8] sm:$0xff]
      %v1553 = vld [vmem:[%s1550 + $0x10] sm:$0xff]
      %v1554 = vld [vmem:[%s1550 + $0x18] sm:$0xff]
      %v1555 = vld [vmem:[%s1550 + $0x20] sm:$0xff]
      %v1556 = vld [vmem:[%s1550 + $0x28] sm:$0xff]
      %v1557 = vld [vmem:[%s1550 + $0x30] sm:$0xff]
      %v1558 = vld [vmem:[%s1550 + $0x38] sm:$0xff]
      %v1559 = vld [vmem:[%s1550 + $0x40] sm:$0xff]
      %v1560 = vld [vmem:[%s1550 + $0x48] sm:$0xff]
      %v1561 = vld [vmem:[%s1550 + $0x50] sm:$0xff]
      %v1562 = vld [vmem:[%s1550 + $0x58] sm:$0xff]
      %v1563 = vld [vmem:[%s1550 + $0x60] sm:$0xff]
      %v1564 = vld [vmem:[%s1550 + $0x68] sm:$0xff]
      %v1565 = vld [vmem:[%s1550 + $0x70] sm:$0xff]
      %v1566 = vld [vmem:[%s1550 + $0x78] sm:$0xff]
      %1567 = vmatprep.subr.mxu0 0.0
      %1568 = vmatpush1.msra.mxu0 %v1551
      %1569 = vmatprep.subr.mxu0 0.0
      %1570 = vmatpush1.msra.mxu0 %v1552
      %1571 = vmatprep.subr.mxu0 0.0
      %1572 = vmatpush1.msra.mxu0 %v1553
      %1573 = vmatprep.subr.mxu0 0.0
      %1574 = vmatpush1.msra.mxu0 %v1554
      %1575 = vmatprep.subr.mxu0 0.0
      %1576 = vmatpush1.msra.mxu0 %v1555
      %1577 = vmatprep.subr.mxu0 0.0
      %1578 = vmatpush1.msra.mxu0 %v1556
      %1579 = vmatprep.subr.mxu0 0.0
      %1580 = vmatpush1.msra.mxu0 %v1557
      %1581 = vmatprep.subr.mxu0 0.0
      %1582 = vmatpush1.msra.mxu0 %v1558
      %1583 = vmatprep.subr.mxu0 0.0
      %1584 = vmatpush1.msra.mxu0 %v1559
      %1585 = vmatprep.subr.mxu0 0.0
      %1586 = vmatpush1.msra.mxu0 %v1560
      %1587 = vmatprep.subr.mxu0 0.0
      %1588 = vmatpush1.msra.mxu0 %v1561
      %1589 = vmatprep.subr.mxu0 0.0
      %1590 = vmatpush1.msra.mxu0 %v1562
      %1591 = vmatprep.subr.mxu0 0.0
      %1592 = vmatpush1.msra.mxu0 %v1563
      %1593 = vmatprep.subr.mxu0 0.0
      %1594 = vmatpush1.msra.mxu0 %v1564
      %1595 = vmatprep.subr.mxu0 0.0
      %1596 = vmatpush1.msra.mxu0 %v1565
      %1597 = vmatprep.subr.mxu0 0.0
      %1598 = vmatpush1.msra.mxu0 %v1566
      %1599 = vmatprep.subr.mxu0 0.0
      %1600 = vmatpush1.msra.mxu0 0.0
      %1601 = vmatprep.subr.mxu0 0.0
      %1602 = vmatpush1.msra.mxu0 0.0
      %1603 = vmatprep.subr.mxu0 0.0
      %1604 = vmatpush1.msra.mxu0 0.0
      %1605 = vmatprep.subr.mxu0 0.0
      %1606 = vmatpush1.msra.mxu0 0.0
      %1607 = vmatprep.subr.mxu0 0.0
      %1608 = vmatpush1.msra.mxu0 0.0
      %1609 = vmatprep.subr.mxu0 0.0
      %1610 = vmatpush1.msra.mxu0 0.0
      %1611 = vmatprep.subr.mxu0 0.0
      %1612 = vmatpush1.msra.mxu0 0.0
      %1613 = vmatprep.subr.mxu0 0.0
      %1614 = vmatpush1.msra.mxu0 0.0
      %1615 = vmatprep.subr.mxu0 0.0
      %1616 = vmatpush1.msra.mxu0 0.0
      %1617 = vmatprep.subr.mxu0 0.0
      %1618 = vmatpush1.msra.mxu0 0.0
      %1619 = vmatprep.subr.mxu0 0.0
      %1620 = vmatpush1.msra.mxu0 0.0
      %1621 = vmatprep.subr.mxu0 0.0
      %1622 = vmatpush1.msra.mxu0 0.0
      %1623 = vmatprep.subr.mxu0 0.0
      %1624 = vmatpush1.msra.mxu0 0.0
      %1625 = vmatprep.subr.mxu0 0.0
      %1626 = vmatpush1.msra.mxu0 0.0
      %1627 = vmatprep.subr.mxu0 0.0
      %1628 = vmatpush1.msra.mxu0 0.0
      %1629 = vmatprep.subr.mxu0 0.0
      %1630 = vmatpush1.msra.mxu0 0.0
      %1631 = vmatprep.mubr.f32.mxu0 0.0
      %1632 = vmatmul.mubr.f32.gmra.mrb[0].mxu0 %v1534
      %v1633 = vpop.f32.mrb[0].mxu0
      %v1634 = vadd.f32 0.0, %v1633
      %v1635 = vpop.f32.mrb[0].mxu0
      %1636 = vmatprep.mubr.f32.mxu0 0.0
      %1637 = vmatmul.mubr.f32.gmra.mrb[0].mxu0 %v1535
      %v1638 = vpop.f32.mrb[0].mxu0
      %v1639 = vadd.f32 0.0, %v1638
      %v1640 = vpop.f32.mrb[0].mxu0
      %1641 = vmatprep.mubr.f32.mxu0 0.0
      %1642 = vmatmul.mubr.f32.gmra.mrb[0].mxu0 %v1536
      %v1643 = vpop.f32.mrb[0].mxu0
      %v1644 = vadd.f32 0.0, %v1643
      %v1645 = vpop.f32.mrb[0].mxu0
      %1646 = vmatprep.mubr.f32.mxu0 0.0
      %1647 = vmatmul.mubr.f32.gmra.mrb[0].mxu0 %v1537
      %v1648 = vpop.f32.mrb[0].mxu0
      %v1649 = vadd.f32 0.0, %v1648
      %v1650 = vpop.f32.mrb[0].mxu0
      %1651 = vmatprep.mubr.f32.mxu0 0.0
      %1652 = vmatmul.mubr.f32.gmra.mrb[0].mxu0 %v1538
      %v1653 = vpop.f32.mrb[0].mxu0
      %v1654 = vadd.f32 0.0, %v1653
      %v1655 = vpop.f32.mrb[0].mxu0
      %1656 = vmatprep.mubr.f32.mxu0 0.0
      %1657 = vmatmul.mubr.f32.gmra.mrb[0].mxu0 %v1539
      %v1658 = vpop.f32.mrb[0].mxu0
      %v1659 = vadd.f32 0.0, %v1658
      %v1660 = vpop.f32.mrb[0].mxu0
      %1661 = vmatprep.mubr.f32.mxu0 0.0
      %1662 = vmatmul.mubr.f32.gmra.mrb[0].mxu0 %v1540
      %v1663 = vpop.f32.mrb[0].mxu0
      %v1664 = vadd.f32 0.0, %v1663
      %v1665 = vpop.f32.mrb[0].mxu0
      %1666 = vmatprep.mubr.f32.mxu0 0.0
      %1667 = vmatmul.mubr.f32.gmra.mrb[0].mxu0 %v1541
      %v1668 = vpop.f32.mrb[0].mxu0
      %v1669 = vadd.f32 0.0, %v1668
      %v1670 = vpop.f32.mrb[0].mxu0
      %1671 = vmatprep.mubr.f32.mxu0 0.0
      %1672 = vmatmul.mubr.f32.gmra.mrb[0].mxu0 %v1542
      %v1673 = vpop.f32.mrb[0].mxu0
      %v1674 = vadd.f32 0.0, %v1673
      %v1675 = vpop.f32.mrb[0].mxu0
      %1676 = vmatprep.mubr.f32.mxu0 0.0
      %1677 = vmatmul.mubr.f32.gmra.mrb[0].mxu0 %v1543
      %v1678 = vpop.f32.mrb[0].mxu0
      %v1679 = vadd.f32 0.0, %v1678
      %v1680 = vpop.f32.mrb[0].mxu0
      %1681 = vmatprep.mubr.f32.mxu0 0.0
      %1682 = vmatmul.mubr.f32.gmra.mrb[0].mxu0 %v1544
      %v1683 = vpop.f32.mrb[0].mxu0
      %v1684 = vadd.f32 0.0, %v1683
      %v1685 = vpop.f32.mrb[0].mxu0
      %1686 = vmatprep.mubr.f32.mxu0 0.0
      %1687 = vmatmul.mubr.f32.gmra.mrb[0].mxu0 %v1545
      %v1688 = vpop.f32.mrb[0].mxu0
      %v1689 = vadd.f32 0.0, %v1688
      %v1690 = vpop.f32.mrb[0].mxu0
      %1691 = vmatprep.mubr.f32.mxu0 0.0
      %1692 = vmatmul.mubr.f32.gmra.mrb[0].mxu0 %v1546
      %v1693 = vpop.f32.mrb[0].mxu0
      %v1694 = vadd.f32 0.0, %v1693
      %v1695 = vpop.f32.mrb[0].mxu0
      %1696 = vmatprep.mubr.f32.mxu0 0.0
      %1697 = vmatmul.mubr.f32.gmra.mrb[0].mxu0 %v1547
      %v1698 = vpop.f32.mrb[0].mxu0
      %v1699 = vadd.f32 0.0, %v1698
      %v1700 = vpop.f32.mrb[0].mxu0
      %1701 = vmatprep.mubr.f32.mxu0 0.0
      %1702 = vmatmul.mubr.f32.gmra.mrb[0].mxu0 %v1548
      %v1703 = vpop.f32.mrb[0].mxu0
      %v1704 = vadd.f32 0.0, %v1703
      %v1705 = vpop.f32.mrb[0].mxu0
      %1706 = vmatprep.mubr.f32.mxu0 0.0
      %1707 = vmatmul.mubr.f32.gmra.mrb[0].mxu0 %v1549
      %v1708 = vpop.f32.mrb[0].mxu0
      %v1709 = vadd.f32 0.0, %v1708
      %v1710 = vpop.f32.mrb[0].mxu0
      %1711 = vdwg.mxu0
      %v1712 = vadd.f32 %v1518, %v1634
      %v1713 = vadd.f32 %v1519, %v1639
      %v1714 = vadd.f32 %v1520, %v1644
      %v1715 = vadd.f32 %v1521, %v1649
      %v1716 = vadd.f32 %v1522, %v1654
      %v1717 = vadd.f32 %v1523, %v1659
      %v1718 = vadd.f32 %v1524, %v1664
      %v1719 = vadd.f32 %v1525, %v1669
      %v1720 = vadd.f32 %v1526, %v1674
      %v1721 = vadd.f32 %v1527, %v1679
      %v1722 = vadd.f32 %v1528, %v1684
      %v1723 = vadd.f32 %v1529, %v1689
      %v1724 = vadd.f32 %v1530, %v1694
      %v1725 = vadd.f32 %v1531, %v1699
      %v1726 = vadd.f32 %v1532, %v1704
      %v1727 = vadd.f32 %v1533, %v1709
      %v1728 = vld [vmem:[%s1339 + $0x2] sm:$0xff]
      %v1729 = vld [vmem:[%s1339 + $0x12] sm:$0xff]
      %v1730 = vld [vmem:[%s1339 + $0x22] sm:$0xff]
      %v1731 = vld [vmem:[%s1339 + $0x32] sm:$0xff]
      %v1732 = vld [vmem:[%s1339 + $0x42] sm:$0xff]
      %v1733 = vld [vmem:[%s1339 + $0x52] sm:$0xff]
      %v1734 = vld [vmem:[%s1339 + $0x62] sm:$0xff]
      %v1735 = vld [vmem:[%s1339 + $0x72] sm:$0xff]
      %v1736 = vld [vmem:[%s1339 + $0xa2] sm:$0xff]
      %v1737 = vld [vmem:[%s1339 + $0xb2] sm:$0xff]
      %v1738 = vld [vmem:[%s1339 + $0xc2] sm:$0xff]
      %v1739 = vld [vmem:[%s1339 + $0xd2] sm:$0xff]
      %v1740 = vld [vmem:[%s1339 + $0xe2] sm:$0xff]
      %v1741 = vld [vmem:[%s1339 + $0xf2] sm:$0xff]
      %v1742 = vld [vmem:[%s1339 + $0x102] sm:$0xff]
      %v1743 = vld [vmem:[%s1339 + $0x112] sm:$0xff]
      %s1744 = scalar_lea.vmem %s1, 1024
      %v1745 = vld [vmem:[%s1744] sm:$0xff]
      %v1746 = vld [vmem:[%s1744 + $0x8] sm:$0xff]
      %v1747 = vld [vmem:[%s1744 + $0x10] sm:$0xff]
      %v1748 = vld [vmem:[%s1744 + $0x18] sm:$0xff]
      %v1749 = vld [vmem:[%s1744 + $0x20] sm:$0xff]
      %v1750 = vld [vmem:[%s1744 + $0x28] sm:$0xff]
      %v1751 = vld [vmem:[%s1744 + $0x30] sm:$0xff]
      %v1752 = vld [vmem:[%s1744 + $0x38] sm:$0xff]
      %v1753 = vld [vmem:[%s1744 + $0x40] sm:$0xff]
      %v1754 = vld [vmem:[%s1744 + $0x48] sm:$0xff]
      %v1755 = vld [vmem:[%s1744 + $0x50] sm:$0xff]
      %v1756 = vld [vmem:[%s1744 + $0x58] sm:$0xff]
      %v1757 = vld [vmem:[%s1744 + $0x60] sm:$0xff]
      %v1758 = vld [vmem:[%s1744 + $0x68] sm:$0xff]
      %v1759 = vld [vmem:[%s1744 + $0x70] sm:$0xff]
      %v1760 = vld [vmem:[%s1744 + $0x78] sm:$0xff]
      %1761 = vmatprep.subr.mxu0 0.0
      %1762 = vmatpush1.msra.mxu0 %v1745
      %1763 = vmatprep.subr.mxu0 0.0
      %1764 = vmatpush1.msra.mxu0 %v1746
      %1765 = vmatprep.subr.mxu0 0.0
      %1766 = vmatpush1.msra.mxu0 %v1747
      %1767 = vmatprep.subr.mxu0 0.0
      %1768 = vmatpush1.msra.mxu0 %v1748
      %1769 = vmatprep.subr.mxu0 0.0
      %1770 = vmatpush1.msra.mxu0 %v1749
      %1771 = vmatprep.subr.mxu0 0.0
      %1772 = vmatpush1.msra.mxu0 %v1750
      %1773 = vmatprep.subr.mxu0 0.0
      %1774 = vmatpush1.msra.mxu0 %v1751
      %1775 = vmatprep.subr.mxu0 0.0
      %1776 = vmatpush1.msra.mxu0 %v1752
      %1777 = vmatprep.subr.mxu0 0.0
      %1778 = vmatpush1.msra.mxu0 %v1753
      %1779 = vmatprep.subr.mxu0 0.0
      %1780 = vmatpush1.msra.mxu0 %v1754
      %1781 = vmatprep.subr.mxu0 0.0
      %1782 = vmatpush1.msra.mxu0 %v1755
      %1783 = vmatprep.subr.mxu0 0.0
      %1784 = vmatpush1.msra.mxu0 %v1756
      %1785 = vmatprep.subr.mxu0 0.0
      %1786 = vmatpush1.msra.mxu0 %v1757
      %1787 = vmatprep.subr.mxu0 0.0
      %1788 = vmatpush1.msra.mxu0 %v1758
      %1789 = vmatprep.subr.mxu0 0.0
      %1790 = vmatpush1.msra.mxu0 %v1759
      %1791 = vmatprep.subr.mxu0 0.0
      %1792 = vmatpush1.msra.mxu0 %v1760
      %1793 = vmatprep.subr.mxu0 0.0
      %1794 = vmatpush1.msra.mxu0 0.0
      %1795 = vmatprep.subr.mxu0 0.0
      %1796 = vmatpush1.msra.mxu0 0.0
      %1797 = vmatprep.subr.mxu0 0.0
      %1798 = vmatpush1.msra.mxu0 0.0
      %1799 = vmatprep.subr.mxu0 0.0
      %1800 = vmatpush1.msra.mxu0 0.0
      %1801 = vmatprep.subr.mxu0 0.0
      %1802 = vmatpush1.msra.mxu0 0.0
      %1803 = vmatprep.subr.mxu0 0.0
      %1804 = vmatpush1.msra.mxu0 0.0
      %1805 = vmatprep.subr.mxu0 0.0
      %1806 = vmatpush1.msra.mxu0 0.0
      %1807 = vmatprep.subr.mxu0 0.0
      %1808 = vmatpush1.msra.mxu0 0.0
      %1809 = vmatprep.subr.mxu0 0.0
      %1810 = vmatpush1.msra.mxu0 0.0
      %1811 = vmatprep.subr.mxu0 0.0
      %1812 = vmatpush1.msra.mxu0 0.0
      %1813 = vmatprep.subr.mxu0 0.0
      %1814 = vmatpush1.msra.mxu0 0.0
      %1815 = vmatprep.subr.mxu0 0.0
      %1816 = vmatpush1.msra.mxu0 0.0
      %1817 = vmatprep.subr.mxu0 0.0
      %1818 = vmatpush1.msra.mxu0 0.0
      %1819 = vmatprep.subr.mxu0 0.0
      %1820 = vmatpush1.msra.mxu0 0.0
      %1821 = vmatprep.subr.mxu0 0.0
      %1822 = vmatpush1.msra.mxu0 0.0
      %1823 = vmatprep.subr.mxu0 0.0
      %1824 = vmatpush1.msra.mxu0 0.0
      %1825 = vmatprep.mubr.f32.mxu0 0.0
      %1826 = vmatmul.mubr.f32.gmra.mrb[0].mxu0 %v1728
      %v1827 = vpop.f32.mrb[0].mxu0
      %v1828 = vadd.f32 0.0, %v1827
      %v1829 = vpop.f32.mrb[0].mxu0
      %1830 = vmatprep.mubr.f32.mxu0 0.0
      %1831 = vmatmul.mubr.f32.gmra.mrb[0].mxu0 %v1729
      %v1832 = vpop.f32.mrb[0].mxu0
      %v1833 = vadd.f32 0.0, %v1832
      %v1834 = vpop.f32.mrb[0].mxu0
      %1835 = vmatprep.mubr.f32.mxu0 0.0
      %1836 = vmatmul.mubr.f32.gmra.mrb[0].mxu0 %v1730
      %v1837 = vpop.f32.mrb[0].mxu0
      %v1838 = vadd.f32 0.0, %v1837
      %v1839 = vpop.f32.mrb[0].mxu0
      %1840 = vmatprep.mubr.f32.mxu0 0.0
      %1841 = vmatmul.mubr.f32.gmra.mrb[0].mxu0 %v1731
      %v1842 = vpop.f32.mrb[0].mxu0
      %v1843 = vadd.f32 0.0, %v1842
      %v1844 = vpop.f32.mrb[0].mxu0
      %1845 = vmatprep.mubr.f32.mxu0 0.0
      %1846 = vmatmul.mubr.f32.gmra.mrb[0].mxu0 %v1732
      %v1847 = vpop.f32.mrb[0].mxu0
      %v1848 = vadd.f32 0.0, %v1847
      %v1849 = vpop.f32.mrb[0].mxu0
      %1850 = vmatprep.mubr.f32.mxu0 0.0
      %1851 = vmatmul.mubr.f32.gmra.mrb[0].mxu0 %v1733
      %v1852 = vpop.f32.mrb[0].mxu0
      %v1853 = vadd.f32 0.0, %v1852
      %v1854 = vpop.f32.mrb[0].mxu0
      %1855 = vmatprep.mubr.f32.mxu0 0.0
      %1856 = vmatmul.mubr.f32.gmra.mrb[0].mxu0 %v1734
      %v1857 = vpop.f32.mrb[0].mxu0
      %v1858 = vadd.f32 0.0, %v1857
      %v1859 = vpop.f32.mrb[0].mxu0
      %1860 = vmatprep.mubr.f32.mxu0 0.0
      %1861 = vmatmul.mubr.f32.gmra.mrb[0].mxu0 %v1735
      %v1862 = vpop.f32.mrb[0].mxu0
      %v1863 = vadd.f32 0.0, %v1862
      %v1864 = vpop.f32.mrb[0].mxu0
      %1865 = vmatprep.mubr.f32.mxu0 0.0
      %1866 = vmatmul.mubr.f32.gmra.mrb[0].mxu0 %v1736
      %v1867 = vpop.f32.mrb[0].mxu0
      %v1868 = vadd.f32 0.0, %v1867
      %v1869 = vpop.f32.mrb[0].mxu0
      %1870 = vmatprep.mubr.f32.mxu0 0.0
      %1871 = vmatmul.mubr.f32.gmra.mrb[0].mxu0 %v1737
      %v1872 = vpop.f32.mrb[0].mxu0
      %v1873 = vadd.f32 0.0, %v1872
      %v1874 = vpop.f32.mrb[0].mxu0
      %1875 = vmatprep.mubr.f32.mxu0 0.0
      %1876 = vmatmul.mubr.f32.gmra.mrb[0].mxu0 %v1738
      %v1877 = vpop.f32.mrb[0].mxu0
      %v1878 = vadd.f32 0.0, %v1877
      %v1879 = vpop.f32.mrb[0].mxu0
      %1880 = vmatprep.mubr.f32.mxu0 0.0
      %1881 = vmatmul.mubr.f32.gmra.mrb[0].mxu0 %v1739
      %v1882 = vpop.f32.mrb[0].mxu0
      %v1883 = vadd.f32 0.0, %v1882
      %v1884 = vpop.f32.mrb[0].mxu0
      %1885 = vmatprep.mubr.f32.mxu0 0.0
      %1886 = vmatmul.mubr.f32.gmra.mrb[0].mxu0 %v1740
      %v1887 = vpop.f32.mrb[0].mxu0
      %v1888 = vadd.f32 0.0, %v1887
      %v1889 = vpop.f32.mrb[0].mxu0
      %1890 = vmatprep.mubr.f32.mxu0 0.0
      %1891 = vmatmul.mubr.f32.gmra.mrb[0].mxu0 %v1741
      %v1892 = vpop.f32.mrb[0].mxu0
      %v1893 = vadd.f32 0.0, %v1892
      %v1894 = vpop.f32.mrb[0].mxu0
      %1895 = vmatprep.mubr.f32.mxu0 0.0
      %1896 = vmatmul.mubr.f32.gmra.mrb[0].mxu0 %v1742
      %v1897 = vpop.f32.mrb[0].mxu0
      %v1898 = vadd.f32 0.0, %v1897
      %v1899 = vpop.f32.mrb[0].mxu0
      %1900 = vmatprep.mubr.f32.mxu0 0.0
      %1901 = vmatmul.mubr.f32.gmra.mrb[0].mxu0 %v1743
      %v1902 = vpop.f32.mrb[0].mxu0
      %v1903 = vadd.f32 0.0, %v1902
      %v1904 = vpop.f32.mrb[0].mxu0
      %1905 = vdwg.mxu0
      %v1906 = vadd.f32 %v1712, %v1828
      %v1907 = vadd.f32 %v1713, %v1833
      %v1908 = vadd.f32 %v1714, %v1838
      %v1909 = vadd.f32 %v1715, %v1843
      %v1910 = vadd.f32 %v1716, %v1848
      %v1911 = vadd.f32 %v1717, %v1853
      %v1912 = vadd.f32 %v1718, %v1858
      %v1913 = vadd.f32 %v1719, %v1863
      %v1914 = vadd.f32 %v1720, %v1868
      %v1915 = vadd.f32 %v1721, %v1873
      %v1916 = vadd.f32 %v1722, %v1878
      %v1917 = vadd.f32 %v1723, %v1883
      %v1918 = vadd.f32 %v1724, %v1888
      %v1919 = vadd.f32 %v1725, %v1893
      %v1920 = vadd.f32 %v1726, %v1898
      %v1921 = vadd.f32 %v1727, %v1903
      %s1922 = scalar_lea.vmem %s195, 160
      %v1923 = vld [vmem:[%s1922] sm:$0xff]
      %v1924 = vld [vmem:[%s1922 + $0x10] sm:$0xff]
      %v1925 = vld [vmem:[%s1922 + $0x20] sm:$0xff]
      %v1926 = vld [vmem:[%s1922 + $0x30] sm:$0xff]
      %v1927 = vld [vmem:[%s1922 + $0x40] sm:$0xff]
      %v1928 = vld [vmem:[%s1922 + $0x50] sm:$0xff]
      %v1929 = vld [vmem:[%s1922 + $0x60] sm:$0xff]
      %v1930 = vld [vmem:[%s1922 + $0x70] sm:$0xff]
      %v1931 = vld [vmem:[%s1922 + $0xa0] sm:$0xff]
      %v1932 = vld [vmem:[%s1922 + $0xb0] sm:$0xff]
      %v1933 = vld [vmem:[%s1922 + $0xc0] sm:$0xff]
      %v1934 = vld [vmem:[%s1922 + $0xd0] sm:$0xff]
      %v1935 = vld [vmem:[%s1922 + $0xe0] sm:$0xff]
      %v1936 = vld [vmem:[%s1922 + $0xf0] sm:$0xff]
      %v1937 = vld [vmem:[%s1922 + $0x100] sm:$0xff]
      %v1938 = vld [vmem:[%s1922 + $0x110] sm:$0xff]
      %s1939 = scalar_lea.vmem %s1, 1152
      %v1940 = vld [vmem:[%s1939] sm:$0xff]
      %v1941 = vld [vmem:[%s1939 + $0x8] sm:$0xff]
      %v1942 = vld [vmem:[%s1939 + $0x10] sm:$0xff]
      %v1943 = vld [vmem:[%s1939 + $0x18] sm:$0xff]
      %v1944 = vld [vmem:[%s1939 + $0x20] sm:$0xff]
      %v1945 = vld [vmem:[%s1939 + $0x28] sm:$0xff]
      %v1946 = vld [vmem:[%s1939 + $0x30] sm:$0xff]
      %v1947 = vld [vmem:[%s1939 + $0x38] sm:$0xff]
      %v1948 = vld [vmem:[%s1939 + $0x40] sm:$0xff]
      %v1949 = vld [vmem:[%s1939 + $0x48] sm:$0xff]
      %v1950 = vld [vmem:[%s1939 + $0x50] sm:$0xff]
      %v1951 = vld [vmem:[%s1939 + $0x58] sm:$0xff]
      %v1952 = vld [vmem:[%s1939 + $0x60] sm:$0xff]
      %v1953 = vld [vmem:[%s1939 + $0x68] sm:$0xff]
      %v1954 = vld [vmem:[%s1939 + $0x70] sm:$0xff]
      %v1955 = vld [vmem:[%s1939 + $0x78] sm:$0xff]
      %1956 = vmatprep.subr.mxu0 0.0
      %1957 = vmatpush1.msra.mxu0 %v1940
      %1958 = vmatprep.subr.mxu0 0.0
      %1959 = vmatpush1.msra.mxu0 %v1941
      %1960 = vmatprep.subr.mxu0 0.0
      %1961 = vmatpush1.msra.mxu0 %v1942
      %1962 = vmatprep.subr.mxu0 0.0
      %1963 = vmatpush1.msra.mxu0 %v1943
      %1964 = vmatprep.subr.mxu0 0.0
      %1965 = vmatpush1.msra.mxu0 %v1944
      %1966 = vmatprep.subr.mxu0 0.0
      %1967 = vmatpush1.msra.mxu0 %v1945
      %1968 = vmatprep.subr.mxu0 0.0
      %1969 = vmatpush1.msra.mxu0 %v1946
      %1970 = vmatprep.subr.mxu0 0.0
      %1971 = vmatpush1.msra.mxu0 %v1947
      %1972 = vmatprep.subr.mxu0 0.0
      %1973 = vmatpush1.msra.mxu0 %v1948
      %1974 = vmatprep.subr.mxu0 0.0
      %1975 = vmatpush1.msra.mxu0 %v1949
      %1976 = vmatprep.subr.mxu0 0.0
      %1977 = vmatpush1.msra.mxu0 %v1950
      %1978 = vmatprep.subr.mxu0 0.0
      %1979 = vmatpush1.msra.mxu0 %v1951
      %1980 = vmatprep.subr.mxu0 0.0
      %1981 = vmatpush1.msra.mxu0 %v1952
      %1982 = vmatprep.subr.mxu0 0.0
      %1983 = vmatpush1.msra.mxu0 %v1953
      %1984 = vmatprep.subr.mxu0 0.0
      %1985 = vmatpush1.msra.mxu0 %v1954
      %1986 = vmatprep.subr.mxu0 0.0
      %1987 = vmatpush1.msra.mxu0 %v1955
      %1988 = vmatprep.subr.mxu0 0.0
      %1989 = vmatpush1.msra.mxu0 0.0
      %1990 = vmatprep.subr.mxu0 0.0
      %1991 = vmatpush1.msra.mxu0 0.0
      %1992 = vmatprep.subr.mxu0 0.0
      %1993 = vmatpush1.msra.mxu0 0.0
      %1994 = vmatprep.subr.mxu0 0.0
      %1995 = vmatpush1.msra.mxu0 0.0
      %1996 = vmatprep.subr.mxu0 0.0
      %1997 = vmatpush1.msra.mxu0 0.0
      %1998 = vmatprep.subr.mxu0 0.0
      %1999 = vmatpush1.msra.mxu0 0.0
      %2000 = vmatprep.subr.mxu0 0.0
      %2001 = vmatpush1.msra.mxu0 0.0
      %2002 = vmatprep.subr.mxu0 0.0
      %2003 = vmatpush1.msra.mxu0 0.0
      %2004 = vmatprep.subr.mxu0 0.0
      %2005 = vmatpush1.msra.mxu0 0.0
      %2006 = vmatprep.subr.mxu0 0.0
      %2007 = vmatpush1.msra.mxu0 0.0
      %2008 = vmatprep.subr.mxu0 0.0
      %2009 = vmatpush1.msra.mxu0 0.0
      %2010 = vmatprep.subr.mxu0 0.0
      %2011 = vmatpush1.msra.mxu0 0.0
      %2012 = vmatprep.subr.mxu0 0.0
      %2013 = vmatpush1.msra.mxu0 0.0
      %2014 = vmatprep.subr.mxu0 0.0
      %2015 = vmatpush1.msra.mxu0 0.0
      %2016 = vmatprep.subr.mxu0 0.0
      %2017 = vmatpush1.msra.mxu0 0.0
      %2018 = vmatprep.subr.mxu0 0.0
      %2019 = vmatpush1.msra.mxu0 0.0
      %2020 = vmatprep.mubr.f32.mxu0 0.0
      %2021 = vmatmul.mubr.f32.gmra.mrb[0].mxu0 %v1923
      %v2022 = vpop.f32.mrb[0].mxu0
      %v2023 = vadd.f32 0.0, %v2022
      %v2024 = vpop.f32.mrb[0].mxu0
      %2025 = vmatprep.mubr.f32.mxu0 0.0
      %2026 = vmatmul.mubr.f32.gmra.mrb[0].mxu0 %v1924
      %v2027 = vpop.f32.mrb[0].mxu0
      %v2028 = vadd.f32 0.0, %v2027
      %v2029 = vpop.f32.mrb[0].mxu0
      %2030 = vmatprep.mubr.f32.mxu0 0.0
      %2031 = vmatmul.mubr.f32.gmra.mrb[0].mxu0 %v1925
      %v2032 = vpop.f32.mrb[0].mxu0
      %v2033 = vadd.f32 0.0, %v2032
      %v2034 = vpop.f32.mrb[0].mxu0
      %2035 = vmatprep.mubr.f32.mxu0 0.0
      %2036 = vmatmul.mubr.f32.gmra.mrb[0].mxu0 %v1926
      %v2037 = vpop.f32.mrb[0].mxu0
      %v2038 = vadd.f32 0.0, %v2037
      %v2039 = vpop.f32.mrb[0].mxu0
      %2040 = vmatprep.mubr.f32.mxu0 0.0
      %2041 = vmatmul.mubr.f32.gmra.mrb[0].mxu0 %v1927
      %v2042 = vpop.f32.mrb[0].mxu0
      %v2043 = vadd.f32 0.0, %v2042
      %v2044 = vpop.f32.mrb[0].mxu0
      %2045 = vmatprep.mubr.f32.mxu0 0.0
      %2046 = vmatmul.mubr.f32.gmra.mrb[0].mxu0 %v1928
      %v2047 = vpop.f32.mrb[0].mxu0
      %v2048 = vadd.f32 0.0, %v2047
      %v2049 = vpop.f32.mrb[0].mxu0
      %2050 = vmatprep.mubr.f32.mxu0 0.0
      %2051 = vmatmul.mubr.f32.gmra.mrb[0].mxu0 %v1929
      %v2052 = vpop.f32.mrb[0].mxu0
      %v2053 = vadd.f32 0.0, %v2052
      %v2054 = vpop.f32.mrb[0].mxu0
      %2055 = vmatprep.mubr.f32.mxu0 0.0
      %2056 = vmatmul.mubr.f32.gmra.mrb[0].mxu0 %v1930
      %v2057 = vpop.f32.mrb[0].mxu0
      %v2058 = vadd.f32 0.0, %v2057
      %v2059 = vpop.f32.mrb[0].mxu0
      %2060 = vmatprep.mubr.f32.mxu0 0.0
      %2061 = vmatmul.mubr.f32.gmra.mrb[0].mxu0 %v1931
      %v2062 = vpop.f32.mrb[0].mxu0
      %v2063 = vadd.f32 0.0, %v2062
      %v2064 = vpop.f32.mrb[0].mxu0
      %2065 = vmatprep.mubr.f32.mxu0 0.0
      %2066 = vmatmul.mubr.f32.gmra.mrb[0].mxu0 %v1932
      %v2067 = vpop.f32.mrb[0].mxu0
      %v2068 = vadd.f32 0.0, %v2067
      %v2069 = vpop.f32.mrb[0].mxu0
      %2070 = vmatprep.mubr.f32.mxu0 0.0
      %2071 = vmatmul.mubr.f32.gmra.mrb[0].mxu0 %v1933
      %v2072 = vpop.f32.mrb[0].mxu0
      %v2073 = vadd.f32 0.0, %v2072
      %v2074 = vpop.f32.mrb[0].mxu0
      %2075 = vmatprep.mubr.f32.mxu0 0.0
      %2076 = vmatmul.mubr.f32.gmra.mrb[0].mxu0 %v1934
      %v2077 = vpop.f32.mrb[0].mxu0
      %v2078 = vadd.f32 0.0, %v2077
      %v2079 = vpop.f32.mrb[0].mxu0
      %2080 = vmatprep.mubr.f32.mxu0 0.0
      %2081 = vmatmul.mubr.f32.gmra.mrb[0].mxu0 %v1935
      %v2082 = vpop.f32.mrb[0].mxu0
      %v2083 = vadd.f32 0.0, %v2082
      %v2084 = vpop.f32.mrb[0].mxu0
      %2085 = vmatprep.mubr.f32.mxu0 0.0
      %2086 = vmatmul.mubr.f32.gmra.mrb[0].mxu0 %v1936
      %v2087 = vpop.f32.mrb[0].mxu0
      %v2088 = vadd.f32 0.0, %v2087
      %v2089 = vpop.f32.mrb[0].mxu0
      %2090 = vmatprep.mubr.f32.mxu0 0.0
      %2091 = vmatmul.mubr.f32.gmra.mrb[0].mxu0 %v1937
      %v2092 = vpop.f32.mrb[0].mxu0
      %v2093 = vadd.f32 0.0, %v2092
      %v2094 = vpop.f32.mrb[0].mxu0
      %2095 = vmatprep.mubr.f32.mxu0 0.0
      %2096 = vmatmul.mubr.f32.gmra.mrb[0].mxu0 %v1938
      %v2097 = vpop.f32.mrb[0].mxu0
      %v2098 = vadd.f32 0.0, %v2097
      %v2099 = vpop.f32.mrb[0].mxu0
      %2100 = vdwg.mxu0
      %v2101 = vadd.f32 %v1906, %v2023
      %v2102 = vadd.f32 %v1907, %v2028
      %v2103 = vadd.f32 %v1908, %v2033
      %v2104 = vadd.f32 %v1909, %v2038
      %v2105 = vadd.f32 %v1910, %v2043
      %v2106 = vadd.f32 %v1911, %v2048
      %v2107 = vadd.f32 %v1912, %v2053
      %v2108 = vadd.f32 %v1913, %v2058
      %v2109 = vadd.f32 %v1914, %v2063
      %v2110 = vadd.f32 %v1915, %v2068
      %v2111 = vadd.f32 %v1916, %v2073
      %v2112 = vadd.f32 %v1917, %v2078
      %v2113 = vadd.f32 %v1918, %v2083
      %v2114 = vadd.f32 %v1919, %v2088
      %v2115 = vadd.f32 %v1920, %v2093
      %v2116 = vadd.f32 %v1921, %v2098
      %v2117 = vld [vmem:[%s1922 + $0x1] sm:$0xff]
      %v2118 = vld [vmem:[%s1922 + $0x11] sm:$0xff]
      %v2119 = vld [vmem:[%s1922 + $0x21] sm:$0xff]
      %v2120 = vld [vmem:[%s1922 + $0x31] sm:$0xff]
      %v2121 = vld [vmem:[%s1922 + $0x41] sm:$0xff]
      %v2122 = vld [vmem:[%s1922 + $0x51] sm:$0xff]
      %v2123 = vld [vmem:[%s1922 + $0x61] sm:$0xff]
      %v2124 = vld [vmem:[%s1922 + $0x71] sm:$0xff]
      %v2125 = vld [vmem:[%s1922 + $0xa1] sm:$0xff]
      %v2126 = vld [vmem:[%s1922 + $0xb1] sm:$0xff]
      %v2127 = vld [vmem:[%s1922 + $0xc1] sm:$0xff]
      %v2128 = vld [vmem:[%s1922 + $0xd1] sm:$0xff]
      %v2129 = vld [vmem:[%s1922 + $0xe1] sm:$0xff]
      %v2130 = vld [vmem:[%s1922 + $0xf1] sm:$0xff]
      %v2131 = vld [vmem:[%s1922 + $0x101] sm:$0xff]
      %v2132 = vld [vmem:[%s1922 + $0x111] sm:$0xff]
      %s2133 = scalar_lea.vmem %s1, 1280
      %v2134 = vld [vmem:[%s2133] sm:$0xff]
      %v2135 = vld [vmem:[%s2133 + $0x8] sm:$0xff]
      %v2136 = vld [vmem:[%s2133 + $0x10] sm:$0xff]
      %v2137 = vld [vmem:[%s2133 + $0x18] sm:$0xff]
      %v2138 = vld [vmem:[%s2133 + $0x20] sm:$0xff]
      %v2139 = vld [vmem:[%s2133 + $0x28] sm:$0xff]
      %v2140 = vld [vmem:[%s2133 + $0x30] sm:$0xff]
      %v2141 = vld [vmem:[%s2133 + $0x38] sm:$0xff]
      %v2142 = vld [vmem:[%s2133 + $0x40] sm:$0xff]
      %v2143 = vld [vmem:[%s2133 + $0x48] sm:$0xff]
      %v2144 = vld [vmem:[%s2133 + $0x50] sm:$0xff]
      %v2145 = vld [vmem:[%s2133 + $0x58] sm:$0xff]
      %v2146 = vld [vmem:[%s2133 + $0x60] sm:$0xff]
      %v2147 = vld [vmem:[%s2133 + $0x68] sm:$0xff]
      %v2148 = vld [vmem:[%s2133 + $0x70] sm:$0xff]
      %v2149 = vld [vmem:[%s2133 + $0x78] sm:$0xff]
      %2150 = vmatprep.subr.mxu0 0.0
      %2151 = vmatpush1.msra.mxu0 %v2134
      %2152 = vmatprep.subr.mxu0 0.0
      %2153 = vmatpush1.msra.mxu0 %v2135
      %2154 = vmatprep.subr.mxu0 0.0
      %2155 = vmatpush1.msra.mxu0 %v2136
      %2156 = vmatprep.subr.mxu0 0.0
      %2157 = vmatpush1.msra.mxu0 %v2137
      %2158 = vmatprep.subr.mxu0 0.0
      %2159 = vmatpush1.msra.mxu0 %v2138
      %2160 = vmatprep.subr.mxu0 0.0
      %2161 = vmatpush1.msra.mxu0 %v2139
      %2162 = vmatprep.subr.mxu0 0.0
      %2163 = vmatpush1.msra.mxu0 %v2140
      %2164 = vmatprep.subr.mxu0 0.0
      %2165 = vmatpush1.msra.mxu0 %v2141
      %2166 = vmatprep.subr.mxu0 0.0
      %2167 = vmatpush1.msra.mxu0 %v2142
      %2168 = vmatprep.subr.mxu0 0.0
      %2169 = vmatpush1.msra.mxu0 %v2143
      %2170 = vmatprep.subr.mxu0 0.0
      %2171 = vmatpush1.msra.mxu0 %v2144
      %2172 = vmatprep.subr.mxu0 0.0
      %2173 = vmatpush1.msra.mxu0 %v2145
      %2174 = vmatprep.subr.mxu0 0.0
      %2175 = vmatpush1.msra.mxu0 %v2146
      %2176 = vmatprep.subr.mxu0 0.0
      %2177 = vmatpush1.msra.mxu0 %v2147
      %2178 = vmatprep.subr.mxu0 0.0
      %2179 = vmatpush1.msra.mxu0 %v2148
      %2180 = vmatprep.subr.mxu0 0.0
      %2181 = vmatpush1.msra.mxu0 %v2149
      %2182 = vmatprep.subr.mxu0 0.0
      %2183 = vmatpush1.msra.mxu0 0.0
      %2184 = vmatprep.subr.mxu0 0.0
      %2185 = vmatpush1.msra.mxu0 0.0
      %2186 = vmatprep.subr.mxu0 0.0
      %2187 = vmatpush1.msra.mxu0 0.0
      %2188 = vmatprep.subr.mxu0 0.0
      %2189 = vmatpush1.msra.mxu0 0.0
      %2190 = vmatprep.subr.mxu0 0.0
      %2191 = vmatpush1.msra.mxu0 0.0
      %2192 = vmatprep.subr.mxu0 0.0
      %2193 = vmatpush1.msra.mxu0 0.0
      %2194 = vmatprep.subr.mxu0 0.0
      %2195 = vmatpush1.msra.mxu0 0.0
      %2196 = vmatprep.subr.mxu0 0.0
      %2197 = vmatpush1.msra.mxu0 0.0
      %2198 = vmatprep.subr.mxu0 0.0
      %2199 = vmatpush1.msra.mxu0 0.0
      %2200 = vmatprep.subr.mxu0 0.0
      %2201 = vmatpush1.msra.mxu0 0.0
      %2202 = vmatprep.subr.mxu0 0.0
      %2203 = vmatpush1.msra.mxu0 0.0
      %2204 = vmatprep.subr.mxu0 0.0
      %2205 = vmatpush1.msra.mxu0 0.0
      %2206 = vmatprep.subr.mxu0 0.0
      %2207 = vmatpush1.msra.mxu0 0.0
      %2208 = vmatprep.subr.mxu0 0.0
      %2209 = vmatpush1.msra.mxu0 0.0
      %2210 = vmatprep.subr.mxu0 0.0
      %2211 = vmatpush1.msra.mxu0 0.0
      %2212 = vmatprep.subr.mxu0 0.0
      %2213 = vmatpush1.msra.mxu0 0.0
      %2214 = vmatprep.mubr.f32.mxu0 0.0
      %2215 = vmatmul.mubr.f32.gmra.mrb[0].mxu0 %v2117
      %v2216 = vpop.f32.mrb[0].mxu0
      %v2217 = vadd.f32 0.0, %v2216
      %v2218 = vpop.f32.mrb[0].mxu0
      %2219 = vmatprep.mubr.f32.mxu0 0.0
      %2220 = vmatmul.mubr.f32.gmra.mrb[0].mxu0 %v2118
      %v2221 = vpop.f32.mrb[0].mxu0
      %v2222 = vadd.f32 0.0, %v2221
      %v2223 = vpop.f32.mrb[0].mxu0
      %2224 = vmatprep.mubr.f32.mxu0 0.0
      %2225 = vmatmul.mubr.f32.gmra.mrb[0].mxu0 %v2119
      %v2226 = vpop.f32.mrb[0].mxu0
      %v2227 = vadd.f32 0.0, %v2226
      %v2228 = vpop.f32.mrb[0].mxu0
      %2229 = vmatprep.mubr.f32.mxu0 0.0
      %2230 = vmatmul.mubr.f32.gmra.mrb[0].mxu0 %v2120
      %v2231 = vpop.f32.mrb[0].mxu0
      %v2232 = vadd.f32 0.0, %v2231
      %v2233 = vpop.f32.mrb[0].mxu0
      %2234 = vmatprep.mubr.f32.mxu0 0.0
      %2235 = vmatmul.mubr.f32.gmra.mrb[0].mxu0 %v2121
      %v2236 = vpop.f32.mrb[0].mxu0
      %v2237 = vadd.f32 0.0, %v2236
      %v2238 = vpop.f32.mrb[0].mxu0
      %2239 = vmatprep.mubr.f32.mxu0 0.0
      %2240 = vmatmul.mubr.f32.gmra.mrb[0].mxu0 %v2122
      %v2241 = vpop.f32.mrb[0].mxu0
      %v2242 = vadd.f32 0.0, %v2241
      %v2243 = vpop.f32.mrb[0].mxu0
      %2244 = vmatprep.mubr.f32.mxu0 0.0
      %2245 = vmatmul.mubr.f32.gmra.mrb[0].mxu0 %v2123
      %v2246 = vpop.f32.mrb[0].mxu0
      %v2247 = vadd.f32 0.0, %v2246
      %v2248 = vpop.f32.mrb[0].mxu0
      %2249 = vmatprep.mubr.f32.mxu0 0.0
      %2250 = vmatmul.mubr.f32.gmra.mrb[0].mxu0 %v2124
      %v2251 = vpop.f32.mrb[0].mxu0
      %v2252 = vadd.f32 0.0, %v2251
      %v2253 = vpop.f32.mrb[0].mxu0
      %2254 = vmatprep.mubr.f32.mxu0 0.0
      %2255 = vmatmul.mubr.f32.gmra.mrb[0].mxu0 %v2125
      %v2256 = vpop.f32.mrb[0].mxu0
      %v2257 = vadd.f32 0.0, %v2256
      %v2258 = vpop.f32.mrb[0].mxu0
      %2259 = vmatprep.mubr.f32.mxu0 0.0
      %2260 = vmatmul.mubr.f32.gmra.mrb[0].mxu0 %v2126
      %v2261 = vpop.f32.mrb[0].mxu0
      %v2262 = vadd.f32 0.0, %v2261
      %v2263 = vpop.f32.mrb[0].mxu0
      %2264 = vmatprep.mubr.f32.mxu0 0.0
      %2265 = vmatmul.mubr.f32.gmra.mrb[0].mxu0 %v2127
      %v2266 = vpop.f32.mrb[0].mxu0
      %v2267 = vadd.f32 0.0, %v2266
      %v2268 = vpop.f32.mrb[0].mxu0
      %2269 = vmatprep.mubr.f32.mxu0 0.0
      %2270 = vmatmul.mubr.f32.gmra.mrb[0].mxu0 %v2128
      %v2271 = vpop.f32.mrb[0].mxu0
      %v2272 = vadd.f32 0.0, %v2271
      %v2273 = vpop.f32.mrb[0].mxu0
      %2274 = vmatprep.mubr.f32.mxu0 0.0
      %2275 = vmatmul.mubr.f32.gmra.mrb[0].mxu0 %v2129
      %v2276 = vpop.f32.mrb[0].mxu0
      %v2277 = vadd.f32 0.0, %v2276
      %v2278 = vpop.f32.mrb[0].mxu0
      %2279 = vmatprep.mubr.f32.mxu0 0.0
      %2280 = vmatmul.mubr.f32.gmra.mrb[0].mxu0 %v2130
      %v2281 = vpop.f32.mrb[0].mxu0
      %v2282 = vadd.f32 0.0, %v2281
      %v2283 = vpop.f32.mrb[0].mxu0
      %2284 = vmatprep.mubr.f32.mxu0 0.0
      %2285 = vmatmul.mubr.f32.gmra.mrb[0].mxu0 %v2131
      %v2286 = vpop.f32.mrb[0].mxu0
      %v2287 = vadd.f32 0.0, %v2286
      %v2288 = vpop.f32.mrb[0].mxu0
      %2289 = vmatprep.mubr.f32.mxu0 0.0
      %2290 = vmatmul.mubr.f32.gmra.mrb[0].mxu0 %v2132
      %v2291 = vpop.f32.mrb[0].mxu0
      %v2292 = vadd.f32 0.0, %v2291
      %v2293 = vpop.f32.mrb[0].mxu0
      %2294 = vdwg.mxu0
      %v2295 = vadd.f32 %v2101, %v2217
      %v2296 = vadd.f32 %v2102, %v2222
      %v2297 = vadd.f32 %v2103, %v2227
      %v2298 = vadd.f32 %v2104, %v2232
      %v2299 = vadd.f32 %v2105, %v2237
      %v2300 = vadd.f32 %v2106, %v2242
      %v2301 = vadd.f32 %v2107, %v2247
      %v2302 = vadd.f32 %v2108, %v2252
      %v2303 = vadd.f32 %v2109, %v2257
      %v2304 = vadd.f32 %v2110, %v2262
      %v2305 = vadd.f32 %v2111, %v2267
      %v2306 = vadd.f32 %v2112, %v2272
      %v2307 = vadd.f32 %v2113, %v2277
      %v2308 = vadd.f32 %v2114, %v2282
      %v2309 = vadd.f32 %v2115, %v2287
      %v2310 = vadd.f32 %v2116, %v2292
      %v2311 = vld [vmem:[%s1922 + $0x2] sm:$0xff]
      %v2312 = vld [vmem:[%s1922 + $0x12] sm:$0xff]
      %v2313 = vld [vmem:[%s1922 + $0x22] sm:$0xff]
      %v2314 = vld [vmem:[%s1922 + $0x32] sm:$0xff]
      %v2315 = vld [vmem:[%s1922 + $0x42] sm:$0xff]
      %v2316 = vld [vmem:[%s1922 + $0x52] sm:$0xff]
      %v2317 = vld [vmem:[%s1922 + $0x62] sm:$0xff]
      %v2318 = vld [vmem:[%s1922 + $0x72] sm:$0xff]
      %v2319 = vld [vmem:[%s1922 + $0xa2] sm:$0xff]
      %v2320 = vld [vmem:[%s1922 + $0xb2] sm:$0xff]
      %v2321 = vld [vmem:[%s1922 + $0xc2] sm:$0xff]
      %v2322 = vld [vmem:[%s1922 + $0xd2] sm:$0xff]
      %v2323 = vld [vmem:[%s1922 + $0xe2] sm:$0xff]
      %v2324 = vld [vmem:[%s1922 + $0xf2] sm:$0xff]
      %v2325 = vld [vmem:[%s1922 + $0x102] sm:$0xff]
      %v2326 = vld [vmem:[%s1922 + $0x112] sm:$0xff]
      %s2327 = scalar_lea.vmem %s1, 1408
      %v2328 = vld [vmem:[%s2327] sm:$0xff]
      %v2329 = vld [vmem:[%s2327 + $0x8] sm:$0xff]
      %v2330 = vld [vmem:[%s2327 + $0x10] sm:$0xff]
      %v2331 = vld [vmem:[%s2327 + $0x18] sm:$0xff]
      %v2332 = vld [vmem:[%s2327 + $0x20] sm:$0xff]
      %v2333 = vld [vmem:[%s2327 + $0x28] sm:$0xff]
      %v2334 = vld [vmem:[%s2327 + $0x30] sm:$0xff]
      %v2335 = vld [vmem:[%s2327 + $0x38] sm:$0xff]
      %v2336 = vld [vmem:[%s2327 + $0x40] sm:$0xff]
      %v2337 = vld [vmem:[%s2327 + $0x48] sm:$0xff]
      %v2338 = vld [vmem:[%s2327 + $0x50] sm:$0xff]
      %v2339 = vld [vmem:[%s2327 + $0x58] sm:$0xff]
      %v2340 = vld [vmem:[%s2327 + $0x60] sm:$0xff]
      %v2341 = vld [vmem:[%s2327 + $0x68] sm:$0xff]
      %v2342 = vld [vmem:[%s2327 + $0x70] sm:$0xff]
      %v2343 = vld [vmem:[%s2327 + $0x78] sm:$0xff]
      %2344 = vmatprep.subr.mxu0 0.0
      %2345 = vmatpush1.msra.mxu0 %v2328
      %2346 = vmatprep.subr.mxu0 0.0
      %2347 = vmatpush1.msra.mxu0 %v2329
      %2348 = vmatprep.subr.mxu0 0.0
      %2349 = vmatpush1.msra.mxu0 %v2330
      %2350 = vmatprep.subr.mxu0 0.0
      %2351 = vmatpush1.msra.mxu0 %v2331
      %2352 = vmatprep.subr.mxu0 0.0
      %2353 = vmatpush1.msra.mxu0 %v2332
      %2354 = vmatprep.subr.mxu0 0.0
      %2355 = vmatpush1.msra.mxu0 %v2333
      %2356 = vmatprep.subr.mxu0 0.0
      %2357 = vmatpush1.msra.mxu0 %v2334
      %2358 = vmatprep.subr.mxu0 0.0
      %2359 = vmatpush1.msra.mxu0 %v2335
      %2360 = vmatprep.subr.mxu0 0.0
      %2361 = vmatpush1.msra.mxu0 %v2336
      %2362 = vmatprep.subr.mxu0 0.0
      %2363 = vmatpush1.msra.mxu0 %v2337
      %2364 = vmatprep.subr.mxu0 0.0
      %2365 = vmatpush1.msra.mxu0 %v2338
      %2366 = vmatprep.subr.mxu0 0.0
      %2367 = vmatpush1.msra.mxu0 %v2339
      %2368 = vmatprep.subr.mxu0 0.0
      %2369 = vmatpush1.msra.mxu0 %v2340
      %2370 = vmatprep.subr.mxu0 0.0
      %2371 = vmatpush1.msra.mxu0 %v2341
      %2372 = vmatprep.subr.mxu0 0.0
      %2373 = vmatpush1.msra.mxu0 %v2342
      %2374 = vmatprep.subr.mxu0 0.0
      %2375 = vmatpush1.msra.mxu0 %v2343
      %2376 = vmatprep.subr.mxu0 0.0
      %2377 = vmatpush1.msra.mxu0 0.0
      %2378 = vmatprep.subr.mxu0 0.0
      %2379 = vmatpush1.msra.mxu0 0.0
      %2380 = vmatprep.subr.mxu0 0.0
      %2381 = vmatpush1.msra.mxu0 0.0
      %2382 = vmatprep.subr.mxu0 0.0
      %2383 = vmatpush1.msra.mxu0 0.0
      %2384 = vmatprep.subr.mxu0 0.0
      %2385 = vmatpush1.msra.mxu0 0.0
      %2386 = vmatprep.subr.mxu0 0.0
      %2387 = vmatpush1.msra.mxu0 0.0
      %2388 = vmatprep.subr.mxu0 0.0
      %2389 = vmatpush1.msra.mxu0 0.0
      %2390 = vmatprep.subr.mxu0 0.0
      %2391 = vmatpush1.msra.mxu0 0.0
      %2392 = vmatprep.subr.mxu0 0.0
      %2393 = vmatpush1.msra.mxu0 0.0
      %2394 = vmatprep.subr.mxu0 0.0
      %2395 = vmatpush1.msra.mxu0 0.0
      %2396 = vmatprep.subr.mxu0 0.0
      %2397 = vmatpush1.msra.mxu0 0.0
      %2398 = vmatprep.subr.mxu0 0.0
      %2399 = vmatpush1.msra.mxu0 0.0
      %2400 = vmatprep.subr.mxu0 0.0
      %2401 = vmatpush1.msra.mxu0 0.0
      %2402 = vmatprep.subr.mxu0 0.0
      %2403 = vmatpush1.msra.mxu0 0.0
      %2404 = vmatprep.subr.mxu0 0.0
      %2405 = vmatpush1.msra.mxu0 0.0
      %2406 = vmatprep.subr.mxu0 0.0
      %2407 = vmatpush1.msra.mxu0 0.0
      %2408 = vmatprep.mubr.f32.mxu0 0.0
      %2409 = vmatmul.mubr.f32.gmra.mrb[0].mxu0 %v2311
      %v2410 = vpop.f32.mrb[0].mxu0
      %v2411 = vadd.f32 0.0, %v2410
      %v2412 = vpop.f32.mrb[0].mxu0
      %2413 = vmatprep.mubr.f32.mxu0 0.0
      %2414 = vmatmul.mubr.f32.gmra.mrb[0].mxu0 %v2312
      %v2415 = vpop.f32.mrb[0].mxu0
      %v2416 = vadd.f32 0.0, %v2415
      %v2417 = vpop.f32.mrb[0].mxu0
      %2418 = vmatprep.mubr.f32.mxu0 0.0
      %2419 = vmatmul.mubr.f32.gmra.mrb[0].mxu0 %v2313
      %v2420 = vpop.f32.mrb[0].mxu0
      %v2421 = vadd.f32 0.0, %v2420
      %v2422 = vpop.f32.mrb[0].mxu0
      %2423 = vmatprep.mubr.f32.mxu0 0.0
      %2424 = vmatmul.mubr.f32.gmra.mrb[0].mxu0 %v2314
      %v2425 = vpop.f32.mrb[0].mxu0
      %v2426 = vadd.f32 0.0, %v2425
      %v2427 = vpop.f32.mrb[0].mxu0
      %2428 = vmatprep.mubr.f32.mxu0 0.0
      %2429 = vmatmul.mubr.f32.gmra.mrb[0].mxu0 %v2315
      %v2430 = vpop.f32.mrb[0].mxu0
      %v2431 = vadd.f32 0.0, %v2430
      %v2432 = vpop.f32.mrb[0].mxu0
      %2433 = vmatprep.mubr.f32.mxu0 0.0
      %2434 = vmatmul.mubr.f32.gmra.mrb[0].mxu0 %v2316
      %v2435 = vpop.f32.mrb[0].mxu0
      %v2436 = vadd.f32 0.0, %v2435
      %v2437 = vpop.f32.mrb[0].mxu0
      %2438 = vmatprep.mubr.f32.mxu0 0.0
      %2439 = vmatmul.mubr.f32.gmra.mrb[0].mxu0 %v2317
      %v2440 = vpop.f32.mrb[0].mxu0
      %v2441 = vadd.f32 0.0, %v2440
      %v2442 = vpop.f32.mrb[0].mxu0
      %2443 = vmatprep.mubr.f32.mxu0 0.0
      %2444 = vmatmul.mubr.f32.gmra.mrb[0].mxu0 %v2318
      %v2445 = vpop.f32.mrb[0].mxu0
      %v2446 = vadd.f32 0.0, %v2445
      %v2447 = vpop.f32.mrb[0].mxu0
      %2448 = vmatprep.mubr.f32.mxu0 0.0
      %2449 = vmatmul.mubr.f32.gmra.mrb[0].mxu0 %v2319
      %v2450 = vpop.f32.mrb[0].mxu0
      %v2451 = vadd.f32 0.0, %v2450
      %v2452 = vpop.f32.mrb[0].mxu0
      %2453 = vmatprep.mubr.f32.mxu0 0.0
      %2454 = vmatmul.mubr.f32.gmra.mrb[0].mxu0 %v2320
      %v2455 = vpop.f32.mrb[0].mxu0
      %v2456 = vadd.f32 0.0, %v2455
      %v2457 = vpop.f32.mrb[0].mxu0
      %2458 = vmatprep.mubr.f32.mxu0 0.0
      %2459 = vmatmul.mubr.f32.gmra.mrb[0].mxu0 %v2321
      %v2460 = vpop.f32.mrb[0].mxu0
      %v2461 = vadd.f32 0.0, %v2460
      %v2462 = vpop.f32.mrb[0].mxu0
      %2463 = vmatprep.mubr.f32.mxu0 0.0
      %2464 = vmatmul.mubr.f32.gmra.mrb[0].mxu0 %v2322
      %v2465 = vpop.f32.mrb[0].mxu0
      %v2466 = vadd.f32 0.0, %v2465
      %v2467 = vpop.f32.mrb[0].mxu0
      %2468 = vmatprep.mubr.f32.mxu0 0.0
      %2469 = vmatmul.mubr.f32.gmra.mrb[0].mxu0 %v2323
      %v2470 = vpop.f32.mrb[0].mxu0
      %v2471 = vadd.f32 0.0, %v2470
      %v2472 = vpop.f32.mrb[0].mxu0
      %2473 = vmatprep.mubr.f32.mxu0 0.0
      %2474 = vmatmul.mubr.f32.gmra.mrb[0].mxu0 %v2324
      %v2475 = vpop.f32.mrb[0].mxu0
      %v2476 = vadd.f32 0.0, %v2475
      %v2477 = vpop.f32.mrb[0].mxu0
      %2478 = vmatprep.mubr.f32.mxu0 0.0
      %2479 = vmatmul.mubr.f32.gmra.mrb[0].mxu0 %v2325
      %v2480 = vpop.f32.mrb[0].mxu0
      %v2481 = vadd.f32 0.0, %v2480
      %v2482 = vpop.f32.mrb[0].mxu0
      %2483 = vmatprep.mubr.f32.mxu0 0.0
      %2484 = vmatmul.mubr.f32.gmra.mrb[0].mxu0 %v2326
      %v2485 = vpop.f32.mrb[0].mxu0
      %v2486 = vadd.f32 0.0, %v2485
      %v2487 = vpop.f32.mrb[0].mxu0
      %2488 = vdwg.mxu0
      %v2489 = vadd.f32 %v2295, %v2411
      %v2490 = vadd.f32 %v2296, %v2416
      %v2491 = vadd.f32 %v2297, %v2421
      %v2492 = vadd.f32 %v2298, %v2426
      %v2493 = vadd.f32 %v2299, %v2431
      %v2494 = vadd.f32 %v2300, %v2436
      %v2495 = vadd.f32 %v2301, %v2441
      %v2496 = vadd.f32 %v2302, %v2446
      %v2497 = vadd.f32 %v2303, %v2451
      %v2498 = vadd.f32 %v2304, %v2456
      %v2499 = vadd.f32 %v2305, %v2461
      %v2500 = vadd.f32 %v2306, %v2466
      %v2501 = vadd.f32 %v2307, %v2471
      %v2502 = vadd.f32 %v2308, %v2476
      %v2503 = vadd.f32 %v2309, %v2481
      %v2504 = vadd.f32 %v2310, %v2486
      %s2505 = scalar_lea.vmem %s195, 176
      %v2506 = vld [vmem:[%s2505] sm:$0xff]
      %v2507 = vld [vmem:[%s2505 + $0x10] sm:$0xff]
      %v2508 = vld [vmem:[%s2505 + $0x20] sm:$0xff]
      %v2509 = vld [vmem:[%s2505 + $0x30] sm:$0xff]
      %v2510 = vld [vmem:[%s2505 + $0x40] sm:$0xff]
      %v2511 = vld [vmem:[%s2505 + $0x50] sm:$0xff]
      %v2512 = vld [vmem:[%s2505 + $0x60] sm:$0xff]
      %v2513 = vld [vmem:[%s2505 + $0x70] sm:$0xff]
      %v2514 = vld [vmem:[%s2505 + $0xa0] sm:$0xff]
      %v2515 = vld [vmem:[%s2505 + $0xb0] sm:$0xff]
      %v2516 = vld [vmem:[%s2505 + $0xc0] sm:$0xff]
      %v2517 = vld [vmem:[%s2505 + $0xd0] sm:$0xff]
      %v2518 = vld [vmem:[%s2505 + $0xe0] sm:$0xff]
      %v2519 = vld [vmem:[%s2505 + $0xf0] sm:$0xff]
      %v2520 = vld [vmem:[%s2505 + $0x100] sm:$0xff]
      %v2521 = vld [vmem:[%s2505 + $0x110] sm:$0xff]
      %s2522 = scalar_lea.vmem %s1, 1536
      %v2523 = vld [vmem:[%s2522] sm:$0xff]
      %v2524 = vld [vmem:[%s2522 + $0x8] sm:$0xff]
      %v2525 = vld [vmem:[%s2522 + $0x10] sm:$0xff]
      %v2526 = vld [vmem:[%s2522 + $0x18] sm:$0xff]
      %v2527 = vld [vmem:[%s2522 + $0x20] sm:$0xff]
      %v2528 = vld [vmem:[%s2522 + $0x28] sm:$0xff]
      %v2529 = vld [vmem:[%s2522 + $0x30] sm:$0xff]
      %v2530 = vld [vmem:[%s2522 + $0x38] sm:$0xff]
      %v2531 = vld [vmem:[%s2522 + $0x40] sm:$0xff]
      %v2532 = vld [vmem:[%s2522 + $0x48] sm:$0xff]
      %v2533 = vld [vmem:[%s2522 + $0x50] sm:$0xff]
      %v2534 = vld [vmem:[%s2522 + $0x58] sm:$0xff]
      %v2535 = vld [vmem:[%s2522 + $0x60] sm:$0xff]
      %v2536 = vld [vmem:[%s2522 + $0x68] sm:$0xff]
      %v2537 = vld [vmem:[%s2522 + $0x70] sm:$0xff]
      %v2538 = vld [vmem:[%s2522 + $0x78] sm:$0xff]
      %2539 = vmatprep.subr.mxu0 0.0
      %2540 = vmatpush1.msra.mxu0 %v2523
      %2541 = vmatprep.subr.mxu0 0.0
      %2542 = vmatpush1.msra.mxu0 %v2524
      %2543 = vmatprep.subr.mxu0 0.0
      %2544 = vmatpush1.msra.mxu0 %v2525
      %2545 = vmatprep.subr.mxu0 0.0
      %2546 = vmatpush1.msra.mxu0 %v2526
      %2547 = vmatprep.subr.mxu0 0.0
      %2548 = vmatpush1.msra.mxu0 %v2527
      %2549 = vmatprep.subr.mxu0 0.0
      %2550 = vmatpush1.msra.mxu0 %v2528
      %2551 = vmatprep.subr.mxu0 0.0
      %2552 = vmatpush1.msra.mxu0 %v2529
      %2553 = vmatprep.subr.mxu0 0.0
      %2554 = vmatpush1.msra.mxu0 %v2530
      %2555 = vmatprep.subr.mxu0 0.0
      %2556 = vmatpush1.msra.mxu0 %v2531
      %2557 = vmatprep.subr.mxu0 0.0
      %2558 = vmatpush1.msra.mxu0 %v2532
      %2559 = vmatprep.subr.mxu0 0.0
      %2560 = vmatpush1.msra.mxu0 %v2533
      %2561 = vmatprep.subr.mxu0 0.0
      %2562 = vmatpush1.msra.mxu0 %v2534
      %2563 = vmatprep.subr.mxu0 0.0
      %2564 = vmatpush1.msra.mxu0 %v2535
      %2565 = vmatprep.subr.mxu0 0.0
      %2566 = vmatpush1.msra.mxu0 %v2536
      %2567 = vmatprep.subr.mxu0 0.0
      %2568 = vmatpush1.msra.mxu0 %v2537
      %2569 = vmatprep.subr.mxu0 0.0
      %2570 = vmatpush1.msra.mxu0 %v2538
      %2571 = vmatprep.subr.mxu0 0.0
      %2572 = vmatpush1.msra.mxu0 0.0
      %2573 = vmatprep.subr.mxu0 0.0
      %2574 = vmatpush1.msra.mxu0 0.0
      %2575 = vmatprep.subr.mxu0 0.0
      %2576 = vmatpush1.msra.mxu0 0.0
      %2577 = vmatprep.subr.mxu0 0.0
      %2578 = vmatpush1.msra.mxu0 0.0
      %2579 = vmatprep.subr.mxu0 0.0
      %2580 = vmatpush1.msra.mxu0 0.0
      %2581 = vmatprep.subr.mxu0 0.0
      %2582 = vmatpush1.msra.mxu0 0.0
      %2583 = vmatprep.subr.mxu0 0.0
      %2584 = vmatpush1.msra.mxu0 0.0
      %2585 = vmatprep.subr.mxu0 0.0
      %2586 = vmatpush1.msra.mxu0 0.0
      %2587 = vmatprep.subr.mxu0 0.0
      %2588 = vmatpush1.msra.mxu0 0.0
      %2589 = vmatprep.subr.mxu0 0.0
      %2590 = vmatpush1.msra.mxu0 0.0
      %2591 = vmatprep.subr.mxu0 0.0
      %2592 = vmatpush1.msra.mxu0 0.0
      %2593 = vmatprep.subr.mxu0 0.0
      %2594 = vmatpush1.msra.mxu0 0.0
      %2595 = vmatprep.subr.mxu0 0.0
      %2596 = vmatpush1.msra.mxu0 0.0
      %2597 = vmatprep.subr.mxu0 0.0
      %2598 = vmatpush1.msra.mxu0 0.0
      %2599 = vmatprep.subr.mxu0 0.0
      %2600 = vmatpush1.msra.mxu0 0.0
      %2601 = vmatprep.subr.mxu0 0.0
      %2602 = vmatpush1.msra.mxu0 0.0
      %2603 = vmatprep.mubr.f32.mxu0 0.0
      %2604 = vmatmul.mubr.f32.gmra.mrb[0].mxu0 %v2506
      %v2605 = vpop.f32.mrb[0].mxu0
      %v2606 = vadd.f32 0.0, %v2605
      %v2607 = vpop.f32.mrb[0].mxu0
      %2608 = vmatprep.mubr.f32.mxu0 0.0
      %2609 = vmatmul.mubr.f32.gmra.mrb[0].mxu0 %v2507
      %v2610 = vpop.f32.mrb[0].mxu0
      %v2611 = vadd.f32 0.0, %v2610
      %v2612 = vpop.f32.mrb[0].mxu0
      %2613 = vmatprep.mubr.f32.mxu0 0.0
      %2614 = vmatmul.mubr.f32.gmra.mrb[0].mxu0 %v2508
      %v2615 = vpop.f32.mrb[0].mxu0
      %v2616 = vadd.f32 0.0, %v2615
      %v2617 = vpop.f32.mrb[0].mxu0
      %2618 = vmatprep.mubr.f32.mxu0 0.0
      %2619 = vmatmul.mubr.f32.gmra.mrb[0].mxu0 %v2509
      %v2620 = vpop.f32.mrb[0].mxu0
      %v2621 = vadd.f32 0.0, %v2620
      %v2622 = vpop.f32.mrb[0].mxu0
      %2623 = vmatprep.mubr.f32.mxu0 0.0
      %2624 = vmatmul.mubr.f32.gmra.mrb[0].mxu0 %v2510
      %v2625 = vpop.f32.mrb[0].mxu0
      %v2626 = vadd.f32 0.0, %v2625
      %v2627 = vpop.f32.mrb[0].mxu0
      %2628 = vmatprep.mubr.f32.mxu0 0.0
      %2629 = vmatmul.mubr.f32.gmra.mrb[0].mxu0 %v2511
      %v2630 = vpop.f32.mrb[0].mxu0
      %v2631 = vadd.f32 0.0, %v2630
      %v2632 = vpop.f32.mrb[0].mxu0
      %2633 = vmatprep.mubr.f32.mxu0 0.0
      %2634 = vmatmul.mubr.f32.gmra.mrb[0].mxu0 %v2512
      %v2635 = vpop.f32.mrb[0].mxu0
      %v2636 = vadd.f32 0.0, %v2635
      %v2637 = vpop.f32.mrb[0].mxu0
      %2638 = vmatprep.mubr.f32.mxu0 0.0
      %2639 = vmatmul.mubr.f32.gmra.mrb[0].mxu0 %v2513
      %v2640 = vpop.f32.mrb[0].mxu0
      %v2641 = vadd.f32 0.0, %v2640
      %v2642 = vpop.f32.mrb[0].mxu0
      %2643 = vmatprep.mubr.f32.mxu0 0.0
      %2644 = vmatmul.mubr.f32.gmra.mrb[0].mxu0 %v2514
      %v2645 = vpop.f32.mrb[0].mxu0
      %v2646 = vadd.f32 0.0, %v2645
      %v2647 = vpop.f32.mrb[0].mxu0
      %2648 = vmatprep.mubr.f32.mxu0 0.0
      %2649 = vmatmul.mubr.f32.gmra.mrb[0].mxu0 %v2515
      %v2650 = vpop.f32.mrb[0].mxu0
      %v2651 = vadd.f32 0.0, %v2650
      %v2652 = vpop.f32.mrb[0].mxu0
      %2653 = vmatprep.mubr.f32.mxu0 0.0
      %2654 = vmatmul.mubr.f32.gmra.mrb[0].mxu0 %v2516
      %v2655 = vpop.f32.mrb[0].mxu0
      %v2656 = vadd.f32 0.0, %v2655
      %v2657 = vpop.f32.mrb[0].mxu0
      %2658 = vmatprep.mubr.f32.mxu0 0.0
      %2659 = vmatmul.mubr.f32.gmra.mrb[0].mxu0 %v2517
      %v2660 = vpop.f32.mrb[0].mxu0
      %v2661 = vadd.f32 0.0, %v2660
      %v2662 = vpop.f32.mrb[0].mxu0
      %2663 = vmatprep.mubr.f32.mxu0 0.0
      %2664 = vmatmul.mubr.f32.gmra.mrb[0].mxu0 %v2518
      %v2665 = vpop.f32.mrb[0].mxu0
      %v2666 = vadd.f32 0.0, %v2665
      %v2667 = vpop.f32.mrb[0].mxu0
      %2668 = vmatprep.mubr.f32.mxu0 0.0
      %2669 = vmatmul.mubr.f32.gmra.mrb[0].mxu0 %v2519
      %v2670 = vpop.f32.mrb[0].mxu0
      %v2671 = vadd.f32 0.0, %v2670
      %v2672 = vpop.f32.mrb[0].mxu0
      %2673 = vmatprep.mubr.f32.mxu0 0.0
      %2674 = vmatmul.mubr.f32.gmra.mrb[0].mxu0 %v2520
      %v2675 = vpop.f32.mrb[0].mxu0
      %v2676 = vadd.f32 0.0, %v2675
      %v2677 = vpop.f32.mrb[0].mxu0
      %2678 = vmatprep.mubr.f32.mxu0 0.0
      %2679 = vmatmul.mubr.f32.gmra.mrb[0].mxu0 %v2521
      %v2680 = vpop.f32.mrb[0].mxu0
      %v2681 = vadd.f32 0.0, %v2680
      %v2682 = vpop.f32.mrb[0].mxu0
      %2683 = vdwg.mxu0
      %v2684 = vadd.f32 %v2489, %v2606
      %v2685 = vadd.f32 %v2490, %v2611
      %v2686 = vadd.f32 %v2491, %v2616
      %v2687 = vadd.f32 %v2492, %v2621
      %v2688 = vadd.f32 %v2493, %v2626
      %v2689 = vadd.f32 %v2494, %v2631
      %v2690 = vadd.f32 %v2495, %v2636
      %v2691 = vadd.f32 %v2496, %v2641
      %v2692 = vadd.f32 %v2497, %v2646
      %v2693 = vadd.f32 %v2498, %v2651
      %v2694 = vadd.f32 %v2499, %v2656
      %v2695 = vadd.f32 %v2500, %v2661
      %v2696 = vadd.f32 %v2501, %v2666
      %v2697 = vadd.f32 %v2502, %v2671
      %v2698 = vadd.f32 %v2503, %v2676
      %v2699 = vadd.f32 %v2504, %v2681
      %v2700 = vld [vmem:[%s2505 + $0x1] sm:$0xff]
      %v2701 = vld [vmem:[%s2505 + $0x11] sm:$0xff]
      %v2702 = vld [vmem:[%s2505 + $0x21] sm:$0xff]
      %v2703 = vld [vmem:[%s2505 + $0x31] sm:$0xff]
      %v2704 = vld [vmem:[%s2505 + $0x41] sm:$0xff]
      %v2705 = vld [vmem:[%s2505 + $0x51] sm:$0xff]
      %v2706 = vld [vmem:[%s2505 + $0x61] sm:$0xff]
      %v2707 = vld [vmem:[%s2505 + $0x71] sm:$0xff]
      %v2708 = vld [vmem:[%s2505 + $0xa1] sm:$0xff]
      %v2709 = vld [vmem:[%s2505 + $0xb1] sm:$0xff]
      %v2710 = vld [vmem:[%s2505 + $0xc1] sm:$0xff]
      %v2711 = vld [vmem:[%s2505 + $0xd1] sm:$0xff]
      %v2712 = vld [vmem:[%s2505 + $0xe1] sm:$0xff]
      %v2713 = vld [vmem:[%s2505 + $0xf1] sm:$0xff]
      %v2714 = vld [vmem:[%s2505 + $0x101] sm:$0xff]
      %v2715 = vld [vmem:[%s2505 + $0x111] sm:$0xff]
      %s2716 = scalar_lea.vmem %s1, 1664
      %v2717 = vld [vmem:[%s2716] sm:$0xff]
      %v2718 = vld [vmem:[%s2716 + $0x8] sm:$0xff]
      %v2719 = vld [vmem:[%s2716 + $0x10] sm:$0xff]
      %v2720 = vld [vmem:[%s2716 + $0x18] sm:$0xff]
      %v2721 = vld [vmem:[%s2716 + $0x20] sm:$0xff]
      %v2722 = vld [vmem:[%s2716 + $0x28] sm:$0xff]
      %v2723 = vld [vmem:[%s2716 + $0x30] sm:$0xff]
      %v2724 = vld [vmem:[%s2716 + $0x38] sm:$0xff]
      %v2725 = vld [vmem:[%s2716 + $0x40] sm:$0xff]
      %v2726 = vld [vmem:[%s2716 + $0x48] sm:$0xff]
      %v2727 = vld [vmem:[%s2716 + $0x50] sm:$0xff]
      %v2728 = vld [vmem:[%s2716 + $0x58] sm:$0xff]
      %v2729 = vld [vmem:[%s2716 + $0x60] sm:$0xff]
      %v2730 = vld [vmem:[%s2716 + $0x68] sm:$0xff]
      %v2731 = vld [vmem:[%s2716 + $0x70] sm:$0xff]
      %v2732 = vld [vmem:[%s2716 + $0x78] sm:$0xff]
      %2733 = vmatprep.subr.mxu0 0.0
      %2734 = vmatpush1.msra.mxu0 %v2717
      %2735 = vmatprep.subr.mxu0 0.0
      %2736 = vmatpush1.msra.mxu0 %v2718
      %2737 = vmatprep.subr.mxu0 0.0
      %2738 = vmatpush1.msra.mxu0 %v2719
      %2739 = vmatprep.subr.mxu0 0.0
      %2740 = vmatpush1.msra.mxu0 %v2720
      %2741 = vmatprep.subr.mxu0 0.0
      %2742 = vmatpush1.msra.mxu0 %v2721
      %2743 = vmatprep.subr.mxu0 0.0
      %2744 = vmatpush1.msra.mxu0 %v2722
      %2745 = vmatprep.subr.mxu0 0.0
      %2746 = vmatpush1.msra.mxu0 %v2723
      %2747 = vmatprep.subr.mxu0 0.0
      %2748 = vmatpush1.msra.mxu0 %v2724
      %2749 = vmatprep.subr.mxu0 0.0
      %2750 = vmatpush1.msra.mxu0 %v2725
      %2751 = vmatprep.subr.mxu0 0.0
      %2752 = vmatpush1.msra.mxu0 %v2726
      %2753 = vmatprep.subr.mxu0 0.0
      %2754 = vmatpush1.msra.mxu0 %v2727
      %2755 = vmatprep.subr.mxu0 0.0
      %2756 = vmatpush1.msra.mxu0 %v2728
      %2757 = vmatprep.subr.mxu0 0.0
      %2758 = vmatpush1.msra.mxu0 %v2729
      %2759 = vmatprep.subr.mxu0 0.0
      %2760 = vmatpush1.msra.mxu0 %v2730
      %2761 = vmatprep.subr.mxu0 0.0
      %2762 = vmatpush1.msra.mxu0 %v2731
      %2763 = vmatprep.subr.mxu0 0.0
      %2764 = vmatpush1.msra.mxu0 %v2732
      %2765 = vmatprep.subr.mxu0 0.0
      %2766 = vmatpush1.msra.mxu0 0.0
      %2767 = vmatprep.subr.mxu0 0.0
      %2768 = vmatpush1.msra.mxu0 0.0
      %2769 = vmatprep.subr.mxu0 0.0
      %2770 = vmatpush1.msra.mxu0 0.0
      %2771 = vmatprep.subr.mxu0 0.0
      %2772 = vmatpush1.msra.mxu0 0.0
      %2773 = vmatprep.subr.mxu0 0.0
      %2774 = vmatpush1.msra.mxu0 0.0
      %2775 = vmatprep.subr.mxu0 0.0
      %2776 = vmatpush1.msra.mxu0 0.0
      %2777 = vmatprep.subr.mxu0 0.0
      %2778 = vmatpush1.msra.mxu0 0.0
      %2779 = vmatprep.subr.mxu0 0.0
      %2780 = vmatpush1.msra.mxu0 0.0
      %2781 = vmatprep.subr.mxu0 0.0
      %2782 = vmatpush1.msra.mxu0 0.0
      %2783 = vmatprep.subr.mxu0 0.0
      %2784 = vmatpush1.msra.mxu0 0.0
      %2785 = vmatprep.subr.mxu0 0.0
      %2786 = vmatpush1.msra.mxu0 0.0
      %2787 = vmatprep.subr.mxu0 0.0
      %2788 = vmatpush1.msra.mxu0 0.0
      %2789 = vmatprep.subr.mxu0 0.0
      %2790 = vmatpush1.msra.mxu0 0.0
      %2791 = vmatprep.subr.mxu0 0.0
      %2792 = vmatpush1.msra.mxu0 0.0
      %2793 = vmatprep.subr.mxu0 0.0
      %2794 = vmatpush1.msra.mxu0 0.0
      %2795 = vmatprep.subr.mxu0 0.0
      %2796 = vmatpush1.msra.mxu0 0.0
      %2797 = vmatprep.mubr.f32.mxu0 0.0
      %2798 = vmatmul.mubr.f32.gmra.mrb[0].mxu0 %v2700
      %v2799 = vpop.f32.mrb[0].mxu0
      %v2800 = vadd.f32 0.0, %v2799
      %v2801 = vpop.f32.mrb[0].mxu0
      %2802 = vmatprep.mubr.f32.mxu0 0.0
      %2803 = vmatmul.mubr.f32.gmra.mrb[0].mxu0 %v2701
      %v2804 = vpop.f32.mrb[0].mxu0
      %v2805 = vadd.f32 0.0, %v2804
      %v2806 = vpop.f32.mrb[0].mxu0
      %2807 = vmatprep.mubr.f32.mxu0 0.0
      %2808 = vmatmul.mubr.f32.gmra.mrb[0].mxu0 %v2702
      %v2809 = vpop.f32.mrb[0].mxu0
      %v2810 = vadd.f32 0.0, %v2809
      %v2811 = vpop.f32.mrb[0].mxu0
      %2812 = vmatprep.mubr.f32.mxu0 0.0
      %2813 = vmatmul.mubr.f32.gmra.mrb[0].mxu0 %v2703
      %v2814 = vpop.f32.mrb[0].mxu0
      %v2815 = vadd.f32 0.0, %v2814
      %v2816 = vpop.f32.mrb[0].mxu0
      %2817 = vmatprep.mubr.f32.mxu0 0.0
      %2818 = vmatmul.mubr.f32.gmra.mrb[0].mxu0 %v2704
      %v2819 = vpop.f32.mrb[0].mxu0
      %v2820 = vadd.f32 0.0, %v2819
      %v2821 = vpop.f32.mrb[0].mxu0
      %2822 = vmatprep.mubr.f32.mxu0 0.0
      %2823 = vmatmul.mubr.f32.gmra.mrb[0].mxu0 %v2705
      %v2824 = vpop.f32.mrb[0].mxu0
      %v2825 = vadd.f32 0.0, %v2824
      %v2826 = vpop.f32.mrb[0].mxu0
      %2827 = vmatprep.mubr.f32.mxu0 0.0
      %2828 = vmatmul.mubr.f32.gmra.mrb[0].mxu0 %v2706
      %v2829 = vpop.f32.mrb[0].mxu0
      %v2830 = vadd.f32 0.0, %v2829
      %v2831 = vpop.f32.mrb[0].mxu0
      %2832 = vmatprep.mubr.f32.mxu0 0.0
      %2833 = vmatmul.mubr.f32.gmra.mrb[0].mxu0 %v2707
      %v2834 = vpop.f32.mrb[0].mxu0
      %v2835 = vadd.f32 0.0, %v2834
      %v2836 = vpop.f32.mrb[0].mxu0
      %2837 = vmatprep.mubr.f32.mxu0 0.0
      %2838 = vmatmul.mubr.f32.gmra.mrb[0].mxu0 %v2708
      %v2839 = vpop.f32.mrb[0].mxu0
      %v2840 = vadd.f32 0.0, %v2839
      %v2841 = vpop.f32.mrb[0].mxu0
      %2842 = vmatprep.mubr.f32.mxu0 0.0
      %2843 = vmatmul.mubr.f32.gmra.mrb[0].mxu0 %v2709
      %v2844 = vpop.f32.mrb[0].mxu0
      %v2845 = vadd.f32 0.0, %v2844
      %v2846 = vpop.f32.mrb[0].mxu0
      %2847 = vmatprep.mubr.f32.mxu0 0.0
      %2848 = vmatmul.mubr.f32.gmra.mrb[0].mxu0 %v2710
      %v2849 = vpop.f32.mrb[0].mxu0
      %v2850 = vadd.f32 0.0, %v2849
      %v2851 = vpop.f32.mrb[0].mxu0
      %2852 = vmatprep.mubr.f32.mxu0 0.0
      %2853 = vmatmul.mubr.f32.gmra.mrb[0].mxu0 %v2711
      %v2854 = vpop.f32.mrb[0].mxu0
      %v2855 = vadd.f32 0.0, %v2854
      %v2856 = vpop.f32.mrb[0].mxu0
      %2857 = vmatprep.mubr.f32.mxu0 0.0
      %2858 = vmatmul.mubr.f32.gmra.mrb[0].mxu0 %v2712
      %v2859 = vpop.f32.mrb[0].mxu0
      %v2860 = vadd.f32 0.0, %v2859
      %v2861 = vpop.f32.mrb[0].mxu0
      %2862 = vmatprep.mubr.f32.mxu0 0.0
      %2863 = vmatmul.mubr.f32.gmra.mrb[0].mxu0 %v2713
      %v2864 = vpop.f32.mrb[0].mxu0
      %v2865 = vadd.f32 0.0, %v2864
      %v2866 = vpop.f32.mrb[0].mxu0
      %2867 = vmatprep.mubr.f32.mxu0 0.0
      %2868 = vmatmul.mubr.f32.gmra.mrb[0].mxu0 %v2714
      %v2869 = vpop.f32.mrb[0].mxu0
      %v2870 = vadd.f32 0.0, %v2869
      %v2871 = vpop.f32.mrb[0].mxu0
      %2872 = vmatprep.mubr.f32.mxu0 0.0
      %2873 = vmatmul.mubr.f32.gmra.mrb[0].mxu0 %v2715
      %v2874 = vpop.f32.mrb[0].mxu0
      %v2875 = vadd.f32 0.0, %v2874
      %v2876 = vpop.f32.mrb[0].mxu0
      %2877 = vdwg.mxu0
      %v2878 = vadd.f32 %v2684, %v2800
      %v2879 = vadd.f32 %v2685, %v2805
      %v2880 = vadd.f32 %v2686, %v2810
      %v2881 = vadd.f32 %v2687, %v2815
      %v2882 = vadd.f32 %v2688, %v2820
      %v2883 = vadd.f32 %v2689, %v2825
      %v2884 = vadd.f32 %v2690, %v2830
      %v2885 = vadd.f32 %v2691, %v2835
      %v2886 = vadd.f32 %v2692, %v2840
      %v2887 = vadd.f32 %v2693, %v2845
      %v2888 = vadd.f32 %v2694, %v2850
      %v2889 = vadd.f32 %v2695, %v2855
      %v2890 = vadd.f32 %v2696, %v2860
      %v2891 = vadd.f32 %v2697, %v2865
      %v2892 = vadd.f32 %v2698, %v2870
      %v2893 = vadd.f32 %v2699, %v2875
      %v2894 = vld [vmem:[%s2505 + $0x2] sm:$0xff]
      %v2895 = vld [vmem:[%s2505 + $0x12] sm:$0xff]
      %v2896 = vld [vmem:[%s2505 + $0x22] sm:$0xff]
      %v2897 = vld [vmem:[%s2505 + $0x32] sm:$0xff]
      %v2898 = vld [vmem:[%s2505 + $0x42] sm:$0xff]
      %v2899 = vld [vmem:[%s2505 + $0x52] sm:$0xff]
      %v2900 = vld [vmem:[%s2505 + $0x62] sm:$0xff]
      %v2901 = vld [vmem:[%s2505 + $0x72] sm:$0xff]
      %v2902 = vld [vmem:[%s2505 + $0xa2] sm:$0xff]
      %v2903 = vld [vmem:[%s2505 + $0xb2] sm:$0xff]
      %v2904 = vld [vmem:[%s2505 + $0xc2] sm:$0xff]
      %v2905 = vld [vmem:[%s2505 + $0xd2] sm:$0xff]
      %v2906 = vld [vmem:[%s2505 + $0xe2] sm:$0xff]
      %v2907 = vld [vmem:[%s2505 + $0xf2] sm:$0xff]
      %v2908 = vld [vmem:[%s2505 + $0x102] sm:$0xff]
      %v2909 = vld [vmem:[%s2505 + $0x112] sm:$0xff]
      %s2910 = scalar_lea.vmem %s1, 1792
      %v2911 = vld [vmem:[%s2910] sm:$0xff]
      %v2912 = vld [vmem:[%s2910 + $0x8] sm:$0xff]
      %v2913 = vld [vmem:[%s2910 + $0x10] sm:$0xff]
      %v2914 = vld [vmem:[%s2910 + $0x18] sm:$0xff]
      %v2915 = vld [vmem:[%s2910 + $0x20] sm:$0xff]
      %v2916 = vld [vmem:[%s2910 + $0x28] sm:$0xff]
      %v2917 = vld [vmem:[%s2910 + $0x30] sm:$0xff]
      %v2918 = vld [vmem:[%s2910 + $0x38] sm:$0xff]
      %v2919 = vld [vmem:[%s2910 + $0x40] sm:$0xff]
      %v2920 = vld [vmem:[%s2910 + $0x48] sm:$0xff]
      %v2921 = vld [vmem:[%s2910 + $0x50] sm:$0xff]
      %v2922 = vld [vmem:[%s2910 + $0x58] sm:$0xff]
      %v2923 = vld [vmem:[%s2910 + $0x60] sm:$0xff]
      %v2924 = vld [vmem:[%s2910 + $0x68] sm:$0xff]
      %v2925 = vld [vmem:[%s2910 + $0x70] sm:$0xff]
      %v2926 = vld [vmem:[%s2910 + $0x78] sm:$0xff]
      %2927 = vmatprep.subr.mxu0 0.0
      %2928 = vmatpush1.msra.mxu0 %v2911
      %2929 = vmatprep.subr.mxu0 0.0
      %2930 = vmatpush1.msra.mxu0 %v2912
      %2931 = vmatprep.subr.mxu0 0.0
      %2932 = vmatpush1.msra.mxu0 %v2913
      %2933 = vmatprep.subr.mxu0 0.0
      %2934 = vmatpush1.msra.mxu0 %v2914
      %2935 = vmatprep.subr.mxu0 0.0
      %2936 = vmatpush1.msra.mxu0 %v2915
      %2937 = vmatprep.subr.mxu0 0.0
      %2938 = vmatpush1.msra.mxu0 %v2916
      %2939 = vmatprep.subr.mxu0 0.0
      %2940 = vmatpush1.msra.mxu0 %v2917
      %2941 = vmatprep.subr.mxu0 0.0
      %2942 = vmatpush1.msra.mxu0 %v2918
      %2943 = vmatprep.subr.mxu0 0.0
      %2944 = vmatpush1.msra.mxu0 %v2919
      %2945 = vmatprep.subr.mxu0 0.0
      %2946 = vmatpush1.msra.mxu0 %v2920
      %2947 = vmatprep.subr.mxu0 0.0
      %2948 = vmatpush1.msra.mxu0 %v2921
      %2949 = vmatprep.subr.mxu0 0.0
      %2950 = vmatpush1.msra.mxu0 %v2922
      %2951 = vmatprep.subr.mxu0 0.0
      %2952 = vmatpush1.msra.mxu0 %v2923
      %2953 = vmatprep.subr.mxu0 0.0
      %2954 = vmatpush1.msra.mxu0 %v2924
      %2955 = vmatprep.subr.mxu0 0.0
      %2956 = vmatpush1.msra.mxu0 %v2925
      %2957 = vmatprep.subr.mxu0 0.0
      %2958 = vmatpush1.msra.mxu0 %v2926
      %2959 = vmatprep.subr.mxu0 0.0
      %2960 = vmatpush1.msra.mxu0 0.0
      %2961 = vmatprep.subr.mxu0 0.0
      %2962 = vmatpush1.msra.mxu0 0.0
      %2963 = vmatprep.subr.mxu0 0.0
      %2964 = vmatpush1.msra.mxu0 0.0
      %2965 = vmatprep.subr.mxu0 0.0
      %2966 = vmatpush1.msra.mxu0 0.0
      %2967 = vmatprep.subr.mxu0 0.0
      %2968 = vmatpush1.msra.mxu0 0.0
      %2969 = vmatprep.subr.mxu0 0.0
      %2970 = vmatpush1.msra.mxu0 0.0
      %2971 = vmatprep.subr.mxu0 0.0
      %2972 = vmatpush1.msra.mxu0 0.0
      %2973 = vmatprep.subr.mxu0 0.0
      %2974 = vmatpush1.msra.mxu0 0.0
      %2975 = vmatprep.subr.mxu0 0.0
      %2976 = vmatpush1.msra.mxu0 0.0
      %2977 = vmatprep.subr.mxu0 0.0
      %2978 = vmatpush1.msra.mxu0 0.0
      %2979 = vmatprep.subr.mxu0 0.0
      %2980 = vmatpush1.msra.mxu0 0.0
      %2981 = vmatprep.subr.mxu0 0.0
      %2982 = vmatpush1.msra.mxu0 0.0
      %2983 = vmatprep.subr.mxu0 0.0
      %2984 = vmatpush1.msra.mxu0 0.0
      %2985 = vmatprep.subr.mxu0 0.0
      %2986 = vmatpush1.msra.mxu0 0.0
      %2987 = vmatprep.subr.mxu0 0.0
      %2988 = vmatpush1.msra.mxu0 0.0
      %2989 = vmatprep.subr.mxu0 0.0
      %2990 = vmatpush1.msra.mxu0 0.0
      %2991 = vmatprep.mubr.f32.mxu0 0.0
      %2992 = vmatmul.mubr.f32.gmra.mrb[0].mxu0 %v2894
      %v2993 = vpop.f32.mrb[0].mxu0
      %v2994 = vadd.f32 0.0, %v2993
      %v2995 = vpop.f32.mrb[0].mxu0
      %2996 = vmatprep.mubr.f32.mxu0 0.0
      %2997 = vmatmul.mubr.f32.gmra.mrb[0].mxu0 %v2895
      %v2998 = vpop.f32.mrb[0].mxu0
      %v2999 = vadd.f32 0.0, %v2998
      %v3000 = vpop.f32.mrb[0].mxu0
      %3001 = vmatprep.mubr.f32.mxu0 0.0
      %3002 = vmatmul.mubr.f32.gmra.mrb[0].mxu0 %v2896
      %v3003 = vpop.f32.mrb[0].mxu0
      %v3004 = vadd.f32 0.0, %v3003
      %v3005 = vpop.f32.mrb[0].mxu0
      %3006 = vmatprep.mubr.f32.mxu0 0.0
      %3007 = vmatmul.mubr.f32.gmra.mrb[0].mxu0 %v2897
      %v3008 = vpop.f32.mrb[0].mxu0
      %v3009 = vadd.f32 0.0, %v3008
      %v3010 = vpop.f32.mrb[0].mxu0
      %3011 = vmatprep.mubr.f32.mxu0 0.0
      %3012 = vmatmul.mubr.f32.gmra.mrb[0].mxu0 %v2898
      %v3013 = vpop.f32.mrb[0].mxu0
      %v3014 = vadd.f32 0.0, %v3013
      %v3015 = vpop.f32.mrb[0].mxu0
      %3016 = vmatprep.mubr.f32.mxu0 0.0
      %3017 = vmatmul.mubr.f32.gmra.mrb[0].mxu0 %v2899
      %v3018 = vpop.f32.mrb[0].mxu0
      %v3019 = vadd.f32 0.0, %v3018
      %v3020 = vpop.f32.mrb[0].mxu0
      %3021 = vmatprep.mubr.f32.mxu0 0.0
      %3022 = vmatmul.mubr.f32.gmra.mrb[0].mxu0 %v2900
      %v3023 = vpop.f32.mrb[0].mxu0
      %v3024 = vadd.f32 0.0, %v3023
      %v3025 = vpop.f32.mrb[0].mxu0
      %3026 = vmatprep.mubr.f32.mxu0 0.0
      %3027 = vmatmul.mubr.f32.gmra.mrb[0].mxu0 %v2901
      %v3028 = vpop.f32.mrb[0].mxu0
      %v3029 = vadd.f32 0.0, %v3028
      %v3030 = vpop.f32.mrb[0].mxu0
      %3031 = vmatprep.mubr.f32.mxu0 0.0
      %3032 = vmatmul.mubr.f32.gmra.mrb[0].mxu0 %v2902
      %v3033 = vpop.f32.mrb[0].mxu0
      %v3034 = vadd.f32 0.0, %v3033
      %v3035 = vpop.f32.mrb[0].mxu0
      %3036 = vmatprep.mubr.f32.mxu0 0.0
      %3037 = vmatmul.mubr.f32.gmra.mrb[0].mxu0 %v2903
      %v3038 = vpop.f32.mrb[0].mxu0
      %v3039 = vadd.f32 0.0, %v3038
      %v3040 = vpop.f32.mrb[0].mxu0
      %3041 = vmatprep.mubr.f32.mxu0 0.0
      %3042 = vmatmul.mubr.f32.gmra.mrb[0].mxu0 %v2904
      %v3043 = vpop.f32.mrb[0].mxu0
      %v3044 = vadd.f32 0.0, %v3043
      %v3045 = vpop.f32.mrb[0].mxu0
      %3046 = vmatprep.mubr.f32.mxu0 0.0
      %3047 = vmatmul.mubr.f32.gmra.mrb[0].mxu0 %v2905
      %v3048 = vpop.f32.mrb[0].mxu0
      %v3049 = vadd.f32 0.0, %v3048
      %v3050 = vpop.f32.mrb[0].mxu0
      %3051 = vmatprep.mubr.f32.mxu0 0.0
      %3052 = vmatmul.mubr.f32.gmra.mrb[0].mxu0 %v2906
      %v3053 = vpop.f32.mrb[0].mxu0
      %v3054 = vadd.f32 0.0, %v3053
      %v3055 = vpop.f32.mrb[0].mxu0
      %3056 = vmatprep.mubr.f32.mxu0 0.0
      %3057 = vmatmul.mubr.f32.gmra.mrb[0].mxu0 %v2907
      %v3058 = vpop.f32.mrb[0].mxu0
      %v3059 = vadd.f32 0.0, %v3058
      %v3060 = vpop.f32.mrb[0].mxu0
      %3061 = vmatprep.mubr.f32.mxu0 0.0
      %3062 = vmatmul.mubr.f32.gmra.mrb[0].mxu0 %v2908
      %v3063 = vpop.f32.mrb[0].mxu0
      %v3064 = vadd.f32 0.0, %v3063
      %v3065 = vpop.f32.mrb[0].mxu0
      %3066 = vmatprep.mubr.f32.mxu0 0.0
      %3067 = vmatmul.mubr.f32.gmra.mrb[0].mxu0 %v2909
      %v3068 = vpop.f32.mrb[0].mxu0
      %v3069 = vadd.f32 0.0, %v3068
      %v3070 = vpop.f32.mrb[0].mxu0
      %3071 = vdwg.mxu0
      %v3072 = vadd.f32 %v2878, %v2994
      %v3073 = vadd.f32 %v2879, %v2999
      %v3074 = vadd.f32 %v2880, %v3004
      %v3075 = vadd.f32 %v2881, %v3009
      %v3076 = vadd.f32 %v2882, %v3014
      %v3077 = vadd.f32 %v2883, %v3019
      %v3078 = vadd.f32 %v2884, %v3024
      %v3079 = vadd.f32 %v2885, %v3029
      %v3080 = vadd.f32 %v2886, %v3034
      %v3081 = vadd.f32 %v2887, %v3039
      %v3082 = vadd.f32 %v2888, %v3044
      %v3083 = vadd.f32 %v2889, %v3049
      %v3084 = vadd.f32 %v2890, %v3054
      %v3085 = vadd.f32 %v2891, %v3059
      %v3086 = vadd.f32 %v2892, %v3064
      %v3087 = vadd.f32 %v2893, %v3069
      %s3088 = scalar_lea.vmem %s195, 192
      %v3089 = vld [vmem:[%s3088] sm:$0xff]
      %v3090 = vld [vmem:[%s3088 + $0x10] sm:$0xff]
      %v3091 = vld [vmem:[%s3088 + $0x20] sm:$0xff]
      %v3092 = vld [vmem:[%s3088 + $0x30] sm:$0xff]
      %v3093 = vld [vmem:[%s3088 + $0x40] sm:$0xff]
      %v3094 = vld [vmem:[%s3088 + $0x50] sm:$0xff]
      %v3095 = vld [vmem:[%s3088 + $0x60] sm:$0xff]
      %v3096 = vld [vmem:[%s3088 + $0x70] sm:$0xff]
      %v3097 = vld [vmem:[%s3088 + $0xa0] sm:$0xff]
      %v3098 = vld [vmem:[%s3088 + $0xb0] sm:$0xff]
      %v3099 = vld [vmem:[%s3088 + $0xc0] sm:$0xff]
      %v3100 = vld [vmem:[%s3088 + $0xd0] sm:$0xff]
      %v3101 = vld [vmem:[%s3088 + $0xe0] sm:$0xff]
      %v3102 = vld [vmem:[%s3088 + $0xf0] sm:$0xff]
      %v3103 = vld [vmem:[%s3088 + $0x100] sm:$0xff]
      %v3104 = vld [vmem:[%s3088 + $0x110] sm:$0xff]
      %s3105 = scalar_lea.vmem %s1, 1920
      %v3106 = vld [vmem:[%s3105] sm:$0xff]
      %v3107 = vld [vmem:[%s3105 + $0x8] sm:$0xff]
      %v3108 = vld [vmem:[%s3105 + $0x10] sm:$0xff]
      %v3109 = vld [vmem:[%s3105 + $0x18] sm:$0xff]
      %v3110 = vld [vmem:[%s3105 + $0x20] sm:$0xff]
      %v3111 = vld [vmem:[%s3105 + $0x28] sm:$0xff]
      %v3112 = vld [vmem:[%s3105 + $0x30] sm:$0xff]
      %v3113 = vld [vmem:[%s3105 + $0x38] sm:$0xff]
      %v3114 = vld [vmem:[%s3105 + $0x40] sm:$0xff]
      %v3115 = vld [vmem:[%s3105 + $0x48] sm:$0xff]
      %v3116 = vld [vmem:[%s3105 + $0x50] sm:$0xff]
      %v3117 = vld [vmem:[%s3105 + $0x58] sm:$0xff]
      %v3118 = vld [vmem:[%s3105 + $0x60] sm:$0xff]
      %v3119 = vld [vmem:[%s3105 + $0x68] sm:$0xff]
      %v3120 = vld [vmem:[%s3105 + $0x70] sm:$0xff]
      %v3121 = vld [vmem:[%s3105 + $0x78] sm:$0xff]
      %3122 = vmatprep.subr.mxu0 0.0
      %3123 = vmatpush1.msra.mxu0 %v3106
      %3124 = vmatprep.subr.mxu0 0.0
      %3125 = vmatpush1.msra.mxu0 %v3107
      %3126 = vmatprep.subr.mxu0 0.0
      %3127 = vmatpush1.msra.mxu0 %v3108
      %3128 = vmatprep.subr.mxu0 0.0
      %3129 = vmatpush1.msra.mxu0 %v3109
      %3130 = vmatprep.subr.mxu0 0.0
      %3131 = vmatpush1.msra.mxu0 %v3110
      %3132 = vmatprep.subr.mxu0 0.0
      %3133 = vmatpush1.msra.mxu0 %v3111
      %3134 = vmatprep.subr.mxu0 0.0
      %3135 = vmatpush1.msra.mxu0 %v3112
      %3136 = vmatprep.subr.mxu0 0.0
      %3137 = vmatpush1.msra.mxu0 %v3113
      %3138 = vmatprep.subr.mxu0 0.0
      %3139 = vmatpush1.msra.mxu0 %v3114
      %3140 = vmatprep.subr.mxu0 0.0
      %3141 = vmatpush1.msra.mxu0 %v3115
      %3142 = vmatprep.subr.mxu0 0.0
      %3143 = vmatpush1.msra.mxu0 %v3116
      %3144 = vmatprep.subr.mxu0 0.0
      %3145 = vmatpush1.msra.mxu0 %v3117
      %3146 = vmatprep.subr.mxu0 0.0
      %3147 = vmatpush1.msra.mxu0 %v3118
      %3148 = vmatprep.subr.mxu0 0.0
      %3149 = vmatpush1.msra.mxu0 %v3119
      %3150 = vmatprep.subr.mxu0 0.0
      %3151 = vmatpush1.msra.mxu0 %v3120
      %3152 = vmatprep.subr.mxu0 0.0
      %3153 = vmatpush1.msra.mxu0 %v3121
      %3154 = vmatprep.subr.mxu0 0.0
      %3155 = vmatpush1.msra.mxu0 0.0
      %3156 = vmatprep.subr.mxu0 0.0
      %3157 = vmatpush1.msra.mxu0 0.0
      %3158 = vmatprep.subr.mxu0 0.0
      %3159 = vmatpush1.msra.mxu0 0.0
      %3160 = vmatprep.subr.mxu0 0.0
      %3161 = vmatpush1.msra.mxu0 0.0
      %3162 = vmatprep.subr.mxu0 0.0
      %3163 = vmatpush1.msra.mxu0 0.0
      %3164 = vmatprep.subr.mxu0 0.0
      %3165 = vmatpush1.msra.mxu0 0.0
      %3166 = vmatprep.subr.mxu0 0.0
      %3167 = vmatpush1.msra.mxu0 0.0
      %3168 = vmatprep.subr.mxu0 0.0
      %3169 = vmatpush1.msra.mxu0 0.0
      %3170 = vmatprep.subr.mxu0 0.0
      %3171 = vmatpush1.msra.mxu0 0.0
      %3172 = vmatprep.subr.mxu0 0.0
      %3173 = vmatpush1.msra.mxu0 0.0
      %3174 = vmatprep.subr.mxu0 0.0
      %3175 = vmatpush1.msra.mxu0 0.0
      %3176 = vmatprep.subr.mxu0 0.0
      %3177 = vmatpush1.msra.mxu0 0.0
      %3178 = vmatprep.subr.mxu0 0.0
      %3179 = vmatpush1.msra.mxu0 0.0
      %3180 = vmatprep.subr.mxu0 0.0
      %3181 = vmatpush1.msra.mxu0 0.0
      %3182 = vmatprep.subr.mxu0 0.0
      %3183 = vmatpush1.msra.mxu0 0.0
      %3184 = vmatprep.subr.mxu0 0.0
      %3185 = vmatpush1.msra.mxu0 0.0
      %3186 = vmatprep.mubr.f32.mxu0 0.0
      %3187 = vmatmul.mubr.f32.gmra.mrb[0].mxu0 %v3089
      %v3188 = vpop.f32.mrb[0].mxu0
      %v3189 = vadd.f32 0.0, %v3188
      %v3190 = vpop.f32.mrb[0].mxu0
      %3191 = vmatprep.mubr.f32.mxu0 0.0
      %3192 = vmatmul.mubr.f32.gmra.mrb[0].mxu0 %v3090
      %v3193 = vpop.f32.mrb[0].mxu0
      %v3194 = vadd.f32 0.0, %v3193
      %v3195 = vpop.f32.mrb[0].mxu0
      %3196 = vmatprep.mubr.f32.mxu0 0.0
      %3197 = vmatmul.mubr.f32.gmra.mrb[0].mxu0 %v3091
      %v3198 = vpop.f32.mrb[0].mxu0
      %v3199 = vadd.f32 0.0, %v3198
      %v3200 = vpop.f32.mrb[0].mxu0
      %3201 = vmatprep.mubr.f32.mxu0 0.0
      %3202 = vmatmul.mubr.f32.gmra.mrb[0].mxu0 %v3092
      %v3203 = vpop.f32.mrb[0].mxu0
      %v3204 = vadd.f32 0.0, %v3203
      %v3205 = vpop.f32.mrb[0].mxu0
      %3206 = vmatprep.mubr.f32.mxu0 0.0
      %3207 = vmatmul.mubr.f32.gmra.mrb[0].mxu0 %v3093
      %v3208 = vpop.f32.mrb[0].mxu0
      %v3209 = vadd.f32 0.0, %v3208
      %v3210 = vpop.f32.mrb[0].mxu0
      %3211 = vmatprep.mubr.f32.mxu0 0.0
      %3212 = vmatmul.mubr.f32.gmra.mrb[0].mxu0 %v3094
      %v3213 = vpop.f32.mrb[0].mxu0
      %v3214 = vadd.f32 0.0, %v3213
      %v3215 = vpop.f32.mrb[0].mxu0
      %3216 = vmatprep.mubr.f32.mxu0 0.0
      %3217 = vmatmul.mubr.f32.gmra.mrb[0].mxu0 %v3095
      %v3218 = vpop.f32.mrb[0].mxu0
      %v3219 = vadd.f32 0.0, %v3218
      %v3220 = vpop.f32.mrb[0].mxu0
      %3221 = vmatprep.mubr.f32.mxu0 0.0
      %3222 = vmatmul.mubr.f32.gmra.mrb[0].mxu0 %v3096
      %v3223 = vpop.f32.mrb[0].mxu0
      %v3224 = vadd.f32 0.0, %v3223
      %v3225 = vpop.f32.mrb[0].mxu0
      %3226 = vmatprep.mubr.f32.mxu0 0.0
      %3227 = vmatmul.mubr.f32.gmra.mrb[0].mxu0 %v3097
      %v3228 = vpop.f32.mrb[0].mxu0
      %v3229 = vadd.f32 0.0, %v3228
      %v3230 = vpop.f32.mrb[0].mxu0
      %3231 = vmatprep.mubr.f32.mxu0 0.0
      %3232 = vmatmul.mubr.f32.gmra.mrb[0].mxu0 %v3098
      %v3233 = vpop.f32.mrb[0].mxu0
      %v3234 = vadd.f32 0.0, %v3233
      %v3235 = vpop.f32.mrb[0].mxu0
      %3236 = vmatprep.mubr.f32.mxu0 0.0
      %3237 = vmatmul.mubr.f32.gmra.mrb[0].mxu0 %v3099
      %v3238 = vpop.f32.mrb[0].mxu0
      %v3239 = vadd.f32 0.0, %v3238
      %v3240 = vpop.f32.mrb[0].mxu0
      %3241 = vmatprep.mubr.f32.mxu0 0.0
      %3242 = vmatmul.mubr.f32.gmra.mrb[0].mxu0 %v3100
      %v3243 = vpop.f32.mrb[0].mxu0
      %v3244 = vadd.f32 0.0, %v3243
      %v3245 = vpop.f32.mrb[0].mxu0
      %3246 = vmatprep.mubr.f32.mxu0 0.0
      %3247 = vmatmul.mubr.f32.gmra.mrb[0].mxu0 %v3101
      %v3248 = vpop.f32.mrb[0].mxu0
      %v3249 = vadd.f32 0.0, %v3248
      %v3250 = vpop.f32.mrb[0].mxu0
      %3251 = vmatprep.mubr.f32.mxu0 0.0
      %3252 = vmatmul.mubr.f32.gmra.mrb[0].mxu0 %v3102
      %v3253 = vpop.f32.mrb[0].mxu0
      %v3254 = vadd.f32 0.0, %v3253
      %v3255 = vpop.f32.mrb[0].mxu0
      %3256 = vmatprep.mubr.f32.mxu0 0.0
      %3257 = vmatmul.mubr.f32.gmra.mrb[0].mxu0 %v3103
      %v3258 = vpop.f32.mrb[0].mxu0
      %v3259 = vadd.f32 0.0, %v3258
      %v3260 = vpop.f32.mrb[0].mxu0
      %3261 = vmatprep.mubr.f32.mxu0 0.0
      %3262 = vmatmul.mubr.f32.gmra.mrb[0].mxu0 %v3104
      %v3263 = vpop.f32.mrb[0].mxu0
      %v3264 = vadd.f32 0.0, %v3263
      %v3265 = vpop.f32.mrb[0].mxu0
      %3266 = vdwg.mxu0
      %v3267 = vadd.f32 %v3072, %v3189
      %v3268 = vadd.f32 %v3073, %v3194
      %v3269 = vadd.f32 %v3074, %v3199
      %v3270 = vadd.f32 %v3075, %v3204
      %v3271 = vadd.f32 %v3076, %v3209
      %v3272 = vadd.f32 %v3077, %v3214
      %v3273 = vadd.f32 %v3078, %v3219
      %v3274 = vadd.f32 %v3079, %v3224
      %v3275 = vadd.f32 %v3080, %v3229
      %v3276 = vadd.f32 %v3081, %v3234
      %v3277 = vadd.f32 %v3082, %v3239
      %v3278 = vadd.f32 %v3083, %v3244
      %v3279 = vadd.f32 %v3084, %v3249
      %v3280 = vadd.f32 %v3085, %v3254
      %v3281 = vadd.f32 %v3086, %v3259
      %v3282 = vadd.f32 %v3087, %v3264
      %v3283 = vld [vmem:[%s3088 + $0x1] sm:$0xff]
      %v3284 = vld [vmem:[%s3088 + $0x11] sm:$0xff]
      %v3285 = vld [vmem:[%s3088 + $0x21] sm:$0xff]
      %v3286 = vld [vmem:[%s3088 + $0x31] sm:$0xff]
      %v3287 = vld [vmem:[%s3088 + $0x41] sm:$0xff]
      %v3288 = vld [vmem:[%s3088 + $0x51] sm:$0xff]
      %v3289 = vld [vmem:[%s3088 + $0x61] sm:$0xff]
      %v3290 = vld [vmem:[%s3088 + $0x71] sm:$0xff]
      %v3291 = vld [vmem:[%s3088 + $0xa1] sm:$0xff]
      %v3292 = vld [vmem:[%s3088 + $0xb1] sm:$0xff]
      %v3293 = vld [vmem:[%s3088 + $0xc1] sm:$0xff]
      %v3294 = vld [vmem:[%s3088 + $0xd1] sm:$0xff]
      %v3295 = vld [vmem:[%s3088 + $0xe1] sm:$0xff]
      %v3296 = vld [vmem:[%s3088 + $0xf1] sm:$0xff]
      %v3297 = vld [vmem:[%s3088 + $0x101] sm:$0xff]
      %v3298 = vld [vmem:[%s3088 + $0x111] sm:$0xff]
      %s3299 = scalar_lea.vmem %s1, 2048
      %v3300 = vld [vmem:[%s3299] sm:$0xff]
      %v3301 = vld [vmem:[%s3299 + $0x8] sm:$0xff]
      %v3302 = vld [vmem:[%s3299 + $0x10] sm:$0xff]
      %v3303 = vld [vmem:[%s3299 + $0x18] sm:$0xff]
      %v3304 = vld [vmem:[%s3299 + $0x20] sm:$0xff]
      %v3305 = vld [vmem:[%s3299 + $0x28] sm:$0xff]
      %v3306 = vld [vmem:[%s3299 + $0x30] sm:$0xff]
      %v3307 = vld [vmem:[%s3299 + $0x38] sm:$0xff]
      %v3308 = vld [vmem:[%s3299 + $0x40] sm:$0xff]
      %v3309 = vld [vmem:[%s3299 + $0x48] sm:$0xff]
      %v3310 = vld [vmem:[%s3299 + $0x50] sm:$0xff]
      %v3311 = vld [vmem:[%s3299 + $0x58] sm:$0xff]
      %v3312 = vld [vmem:[%s3299 + $0x60] sm:$0xff]
      %v3313 = vld [vmem:[%s3299 + $0x68] sm:$0xff]
      %v3314 = vld [vmem:[%s3299 + $0x70] sm:$0xff]
      %v3315 = vld [vmem:[%s3299 + $0x78] sm:$0xff]
      %3316 = vmatprep.subr.mxu0 0.0
      %3317 = vmatpush1.msra.mxu0 %v3300
      %3318 = vmatprep.subr.mxu0 0.0
      %3319 = vmatpush1.msra.mxu0 %v3301
      %3320 = vmatprep.subr.mxu0 0.0
      %3321 = vmatpush1.msra.mxu0 %v3302
      %3322 = vmatprep.subr.mxu0 0.0
      %3323 = vmatpush1.msra.mxu0 %v3303
      %3324 = vmatprep.subr.mxu0 0.0
      %3325 = vmatpush1.msra.mxu0 %v3304
      %3326 = vmatprep.subr.mxu0 0.0
      %3327 = vmatpush1.msra.mxu0 %v3305
      %3328 = vmatprep.subr.mxu0 0.0
      %3329 = vmatpush1.msra.mxu0 %v3306
      %3330 = vmatprep.subr.mxu0 0.0
      %3331 = vmatpush1.msra.mxu0 %v3307
      %3332 = vmatprep.subr.mxu0 0.0
      %3333 = vmatpush1.msra.mxu0 %v3308
      %3334 = vmatprep.subr.mxu0 0.0
      %3335 = vmatpush1.msra.mxu0 %v3309
      %3336 = vmatprep.subr.mxu0 0.0
      %3337 = vmatpush1.msra.mxu0 %v3310
      %3338 = vmatprep.subr.mxu0 0.0
      %3339 = vmatpush1.msra.mxu0 %v3311
      %3340 = vmatprep.subr.mxu0 0.0
      %3341 = vmatpush1.msra.mxu0 %v3312
      %3342 = vmatprep.subr.mxu0 0.0
      %3343 = vmatpush1.msra.mxu0 %v3313
      %3344 = vmatprep.subr.mxu0 0.0
      %3345 = vmatpush1.msra.mxu0 %v3314
      %3346 = vmatprep.subr.mxu0 0.0
      %3347 = vmatpush1.msra.mxu0 %v3315
      %3348 = vmatprep.subr.mxu0 0.0
      %3349 = vmatpush1.msra.mxu0 0.0
      %3350 = vmatprep.subr.mxu0 0.0
      %3351 = vmatpush1.msra.mxu0 0.0
      %3352 = vmatprep.subr.mxu0 0.0
      %3353 = vmatpush1.msra.mxu0 0.0
      %3354 = vmatprep.subr.mxu0 0.0
      %3355 = vmatpush1.msra.mxu0 0.0
      %3356 = vmatprep.subr.mxu0 0.0
      %3357 = vmatpush1.msra.mxu0 0.0
      %3358 = vmatprep.subr.mxu0 0.0
      %3359 = vmatpush1.msra.mxu0 0.0
      %3360 = vmatprep.subr.mxu0 0.0
      %3361 = vmatpush1.msra.mxu0 0.0
      %3362 = vmatprep.subr.mxu0 0.0
      %3363 = vmatpush1.msra.mxu0 0.0
      %3364 = vmatprep.subr.mxu0 0.0
      %3365 = vmatpush1.msra.mxu0 0.0
      %3366 = vmatprep.subr.mxu0 0.0
      %3367 = vmatpush1.msra.mxu0 0.0
      %3368 = vmatprep.subr.mxu0 0.0
      %3369 = vmatpush1.msra.mxu0 0.0
      %3370 = vmatprep.subr.mxu0 0.0
      %3371 = vmatpush1.msra.mxu0 0.0
      %3372 = vmatprep.subr.mxu0 0.0
      %3373 = vmatpush1.msra.mxu0 0.0
      %3374 = vmatprep.subr.mxu0 0.0
      %3375 = vmatpush1.msra.mxu0 0.0
      %3376 = vmatprep.subr.mxu0 0.0
      %3377 = vmatpush1.msra.mxu0 0.0
      %3378 = vmatprep.subr.mxu0 0.0
      %3379 = vmatpush1.msra.mxu0 0.0
      %3380 = vmatprep.mubr.f32.mxu0 0.0
      %3381 = vmatmul.mubr.f32.gmra.mrb[0].mxu0 %v3283
      %v3382 = vpop.f32.mrb[0].mxu0
      %v3383 = vadd.f32 0.0, %v3382
      %v3384 = vpop.f32.mrb[0].mxu0
      %3385 = vmatprep.mubr.f32.mxu0 0.0
      %3386 = vmatmul.mubr.f32.gmra.mrb[0].mxu0 %v3284
      %v3387 = vpop.f32.mrb[0].mxu0
      %v3388 = vadd.f32 0.0, %v3387
      %v3389 = vpop.f32.mrb[0].mxu0
      %3390 = vmatprep.mubr.f32.mxu0 0.0
      %3391 = vmatmul.mubr.f32.gmra.mrb[0].mxu0 %v3285
      %v3392 = vpop.f32.mrb[0].mxu0
      %v3393 = vadd.f32 0.0, %v3392
      %v3394 = vpop.f32.mrb[0].mxu0
      %3395 = vmatprep.mubr.f32.mxu0 0.0
      %3396 = vmatmul.mubr.f32.gmra.mrb[0].mxu0 %v3286
      %v3397 = vpop.f32.mrb[0].mxu0
      %v3398 = vadd.f32 0.0, %v3397
      %v3399 = vpop.f32.mrb[0].mxu0
      %3400 = vmatprep.mubr.f32.mxu0 0.0
      %3401 = vmatmul.mubr.f32.gmra.mrb[0].mxu0 %v3287
      %v3402 = vpop.f32.mrb[0].mxu0
      %v3403 = vadd.f32 0.0, %v3402
      %v3404 = vpop.f32.mrb[0].mxu0
      %3405 = vmatprep.mubr.f32.mxu0 0.0
      %3406 = vmatmul.mubr.f32.gmra.mrb[0].mxu0 %v3288
      %v3407 = vpop.f32.mrb[0].mxu0
      %v3408 = vadd.f32 0.0, %v3407
      %v3409 = vpop.f32.mrb[0].mxu0
      %3410 = vmatprep.mubr.f32.mxu0 0.0
      %3411 = vmatmul.mubr.f32.gmra.mrb[0].mxu0 %v3289
      %v3412 = vpop.f32.mrb[0].mxu0
      %v3413 = vadd.f32 0.0, %v3412
      %v3414 = vpop.f32.mrb[0].mxu0
      %3415 = vmatprep.mubr.f32.mxu0 0.0
      %3416 = vmatmul.mubr.f32.gmra.mrb[0].mxu0 %v3290
      %v3417 = vpop.f32.mrb[0].mxu0
      %v3418 = vadd.f32 0.0, %v3417
      %v3419 = vpop.f32.mrb[0].mxu0
      %3420 = vmatprep.mubr.f32.mxu0 0.0
      %3421 = vmatmul.mubr.f32.gmra.mrb[0].mxu0 %v3291
      %v3422 = vpop.f32.mrb[0].mxu0
      %v3423 = vadd.f32 0.0, %v3422
      %v3424 = vpop.f32.mrb[0].mxu0
      %3425 = vmatprep.mubr.f32.mxu0 0.0
      %3426 = vmatmul.mubr.f32.gmra.mrb[0].mxu0 %v3292
      %v3427 = vpop.f32.mrb[0].mxu0
      %v3428 = vadd.f32 0.0, %v3427
      %v3429 = vpop.f32.mrb[0].mxu0
      %3430 = vmatprep.mubr.f32.mxu0 0.0
      %3431 = vmatmul.mubr.f32.gmra.mrb[0].mxu0 %v3293
      %v3432 = vpop.f32.mrb[0].mxu0
      %v3433 = vadd.f32 0.0, %v3432
      %v3434 = vpop.f32.mrb[0].mxu0
      %3435 = vmatprep.mubr.f32.mxu0 0.0
      %3436 = vmatmul.mubr.f32.gmra.mrb[0].mxu0 %v3294
      %v3437 = vpop.f32.mrb[0].mxu0
      %v3438 = vadd.f32 0.0, %v3437
      %v3439 = vpop.f32.mrb[0].mxu0
      %3440 = vmatprep.mubr.f32.mxu0 0.0
      %3441 = vmatmul.mubr.f32.gmra.mrb[0].mxu0 %v3295
      %v3442 = vpop.f32.mrb[0].mxu0
      %v3443 = vadd.f32 0.0, %v3442
      %v3444 = vpop.f32.mrb[0].mxu0
      %3445 = vmatprep.mubr.f32.mxu0 0.0
      %3446 = vmatmul.mubr.f32.gmra.mrb[0].mxu0 %v3296
      %v3447 = vpop.f32.mrb[0].mxu0
      %v3448 = vadd.f32 0.0, %v3447
      %v3449 = vpop.f32.mrb[0].mxu0
      %3450 = vmatprep.mubr.f32.mxu0 0.0
      %3451 = vmatmul.mubr.f32.gmra.mrb[0].mxu0 %v3297
      %v3452 = vpop.f32.mrb[0].mxu0
      %v3453 = vadd.f32 0.0, %v3452
      %v3454 = vpop.f32.mrb[0].mxu0
      %3455 = vmatprep.mubr.f32.mxu0 0.0
      %3456 = vmatmul.mubr.f32.gmra.mrb[0].mxu0 %v3298
      %v3457 = vpop.f32.mrb[0].mxu0
      %v3458 = vadd.f32 0.0, %v3457
      %v3459 = vpop.f32.mrb[0].mxu0
      %3460 = vdwg.mxu0
      %v3461 = vadd.f32 %v3267, %v3383
      %v3462 = vadd.f32 %v3268, %v3388
      %v3463 = vadd.f32 %v3269, %v3393
      %v3464 = vadd.f32 %v3270, %v3398
      %v3465 = vadd.f32 %v3271, %v3403
      %v3466 = vadd.f32 %v3272, %v3408
      %v3467 = vadd.f32 %v3273, %v3413
      %v3468 = vadd.f32 %v3274, %v3418
      %v3469 = vadd.f32 %v3275, %v3423
      %v3470 = vadd.f32 %v3276, %v3428
      %v3471 = vadd.f32 %v3277, %v3433
      %v3472 = vadd.f32 %v3278, %v3438
      %v3473 = vadd.f32 %v3279, %v3443
      %v3474 = vadd.f32 %v3280, %v3448
      %v3475 = vadd.f32 %v3281, %v3453
      %v3476 = vadd.f32 %v3282, %v3458
      %v3477 = vld [vmem:[%s3088 + $0x2] sm:$0xff]
      %v3478 = vld [vmem:[%s3088 + $0x12] sm:$0xff]
      %v3479 = vld [vmem:[%s3088 + $0x22] sm:$0xff]
      %v3480 = vld [vmem:[%s3088 + $0x32] sm:$0xff]
      %v3481 = vld [vmem:[%s3088 + $0x42] sm:$0xff]
      %v3482 = vld [vmem:[%s3088 + $0x52] sm:$0xff]
      %v3483 = vld [vmem:[%s3088 + $0x62] sm:$0xff]
      %v3484 = vld [vmem:[%s3088 + $0x72] sm:$0xff]
      %v3485 = vld [vmem:[%s3088 + $0xa2] sm:$0xff]
      %v3486 = vld [vmem:[%s3088 + $0xb2] sm:$0xff]
      %v3487 = vld [vmem:[%s3088 + $0xc2] sm:$0xff]
      %v3488 = vld [vmem:[%s3088 + $0xd2] sm:$0xff]
      %v3489 = vld [vmem:[%s3088 + $0xe2] sm:$0xff]
      %v3490 = vld [vmem:[%s3088 + $0xf2] sm:$0xff]
      %v3491 = vld [vmem:[%s3088 + $0x102] sm:$0xff]
      %v3492 = vld [vmem:[%s3088 + $0x112] sm:$0xff]
      %s3493 = scalar_lea.vmem %s1, 2176
      %v3494 = vld [vmem:[%s3493] sm:$0xff]
      %v3495 = vld [vmem:[%s3493 + $0x8] sm:$0xff]
      %v3496 = vld [vmem:[%s3493 + $0x10] sm:$0xff]
      %v3497 = vld [vmem:[%s3493 + $0x18] sm:$0xff]
      %v3498 = vld [vmem:[%s3493 + $0x20] sm:$0xff]
      %v3499 = vld [vmem:[%s3493 + $0x28] sm:$0xff]
      %v3500 = vld [vmem:[%s3493 + $0x30] sm:$0xff]
      %v3501 = vld [vmem:[%s3493 + $0x38] sm:$0xff]
      %v3502 = vld [vmem:[%s3493 + $0x40] sm:$0xff]
      %v3503 = vld [vmem:[%s3493 + $0x48] sm:$0xff]
      %v3504 = vld [vmem:[%s3493 + $0x50] sm:$0xff]
      %v3505 = vld [vmem:[%s3493 + $0x58] sm:$0xff]
      %v3506 = vld [vmem:[%s3493 + $0x60] sm:$0xff]
      %v3507 = vld [vmem:[%s3493 + $0x68] sm:$0xff]
      %v3508 = vld [vmem:[%s3493 + $0x70] sm:$0xff]
      %v3509 = vld [vmem:[%s3493 + $0x78] sm:$0xff]
      %3510 = vmatprep.subr.mxu0 0.0
      %3511 = vmatpush1.msra.mxu0 %v3494
      %3512 = vmatprep.subr.mxu0 0.0
      %3513 = vmatpush1.msra.mxu0 %v3495
      %3514 = vmatprep.subr.mxu0 0.0
      %3515 = vmatpush1.msra.mxu0 %v3496
      %3516 = vmatprep.subr.mxu0 0.0
      %3517 = vmatpush1.msra.mxu0 %v3497
      %3518 = vmatprep.subr.mxu0 0.0
      %3519 = vmatpush1.msra.mxu0 %v3498
      %3520 = vmatprep.subr.mxu0 0.0
      %3521 = vmatpush1.msra.mxu0 %v3499
      %3522 = vmatprep.subr.mxu0 0.0
      %3523 = vmatpush1.msra.mxu0 %v3500
      %3524 = vmatprep.subr.mxu0 0.0
      %3525 = vmatpush1.msra.mxu0 %v3501
      %3526 = vmatprep.subr.mxu0 0.0
      %3527 = vmatpush1.msra.mxu0 %v3502
      %3528 = vmatprep.subr.mxu0 0.0
      %3529 = vmatpush1.msra.mxu0 %v3503
      %3530 = vmatprep.subr.mxu0 0.0
      %3531 = vmatpush1.msra.mxu0 %v3504
      %3532 = vmatprep.subr.mxu0 0.0
      %3533 = vmatpush1.msra.mxu0 %v3505
      %3534 = vmatprep.subr.mxu0 0.0
      %3535 = vmatpush1.msra.mxu0 %v3506
      %3536 = vmatprep.subr.mxu0 0.0
      %3537 = vmatpush1.msra.mxu0 %v3507
      %3538 = vmatprep.subr.mxu0 0.0
      %3539 = vmatpush1.msra.mxu0 %v3508
      %3540 = vmatprep.subr.mxu0 0.0
      %3541 = vmatpush1.msra.mxu0 %v3509
      %3542 = vmatprep.subr.mxu0 0.0
      %3543 = vmatpush1.msra.mxu0 0.0
      %3544 = vmatprep.subr.mxu0 0.0
      %3545 = vmatpush1.msra.mxu0 0.0
      %3546 = vmatprep.subr.mxu0 0.0
      %3547 = vmatpush1.msra.mxu0 0.0
      %3548 = vmatprep.subr.mxu0 0.0
      %3549 = vmatpush1.msra.mxu0 0.0
      %3550 = vmatprep.subr.mxu0 0.0
      %3551 = vmatpush1.msra.mxu0 0.0
      %3552 = vmatprep.subr.mxu0 0.0
      %3553 = vmatpush1.msra.mxu0 0.0
      %3554 = vmatprep.subr.mxu0 0.0
      %3555 = vmatpush1.msra.mxu0 0.0
      %3556 = vmatprep.subr.mxu0 0.0
      %3557 = vmatpush1.msra.mxu0 0.0
      %3558 = vmatprep.subr.mxu0 0.0
      %3559 = vmatpush1.msra.mxu0 0.0
      %3560 = vmatprep.subr.mxu0 0.0
      %3561 = vmatpush1.msra.mxu0 0.0
      %3562 = vmatprep.subr.mxu0 0.0
      %3563 = vmatpush1.msra.mxu0 0.0
      %3564 = vmatprep.subr.mxu0 0.0
      %3565 = vmatpush1.msra.mxu0 0.0
      %3566 = vmatprep.subr.mxu0 0.0
      %3567 = vmatpush1.msra.mxu0 0.0
      %3568 = vmatprep.subr.mxu0 0.0
      %3569 = vmatpush1.msra.mxu0 0.0
      %3570 = vmatprep.subr.mxu0 0.0
      %3571 = vmatpush1.msra.mxu0 0.0
      %3572 = vmatprep.subr.mxu0 0.0
      %3573 = vmatpush1.msra.mxu0 0.0
      %3574 = vmatprep.mubr.f32.mxu0 0.0
      %3575 = vmatmul.mubr.f32.gmra.mrb[0].mxu0 %v3477
      %v3576 = vpop.f32.mrb[0].mxu0
      %v3577 = vadd.f32 0.0, %v3576
      %v3578 = vpop.f32.mrb[0].mxu0
      %3579 = vmatprep.mubr.f32.mxu0 0.0
      %3580 = vmatmul.mubr.f32.gmra.mrb[0].mxu0 %v3478
      %v3581 = vpop.f32.mrb[0].mxu0
      %v3582 = vadd.f32 0.0, %v3581
      %v3583 = vpop.f32.mrb[0].mxu0
      %3584 = vmatprep.mubr.f32.mxu0 0.0
      %3585 = vmatmul.mubr.f32.gmra.mrb[0].mxu0 %v3479
      %v3586 = vpop.f32.mrb[0].mxu0
      %v3587 = vadd.f32 0.0, %v3586
      %v3588 = vpop.f32.mrb[0].mxu0
      %3589 = vmatprep.mubr.f32.mxu0 0.0
      %3590 = vmatmul.mubr.f32.gmra.mrb[0].mxu0 %v3480
      %v3591 = vpop.f32.mrb[0].mxu0
      %v3592 = vadd.f32 0.0, %v3591
      %v3593 = vpop.f32.mrb[0].mxu0
      %3594 = vmatprep.mubr.f32.mxu0 0.0
      %3595 = vmatmul.mubr.f32.gmra.mrb[0].mxu0 %v3481
      %v3596 = vpop.f32.mrb[0].mxu0
      %v3597 = vadd.f32 0.0, %v3596
      %v3598 = vpop.f32.mrb[0].mxu0
      %3599 = vmatprep.mubr.f32.mxu0 0.0
      %3600 = vmatmul.mubr.f32.gmra.mrb[0].mxu0 %v3482
      %v3601 = vpop.f32.mrb[0].mxu0
      %v3602 = vadd.f32 0.0, %v3601
      %v3603 = vpop.f32.mrb[0].mxu0
      %3604 = vmatprep.mubr.f32.mxu0 0.0
      %3605 = vmatmul.mubr.f32.gmra.mrb[0].mxu0 %v3483
      %v3606 = vpop.f32.mrb[0].mxu0
      %v3607 = vadd.f32 0.0, %v3606
      %v3608 = vpop.f32.mrb[0].mxu0
      %3609 = vmatprep.mubr.f32.mxu0 0.0
      %3610 = vmatmul.mubr.f32.gmra.mrb[0].mxu0 %v3484
      %v3611 = vpop.f32.mrb[0].mxu0
      %v3612 = vadd.f32 0.0, %v3611
      %v3613 = vpop.f32.mrb[0].mxu0
      %3614 = vmatprep.mubr.f32.mxu0 0.0
      %3615 = vmatmul.mubr.f32.gmra.mrb[0].mxu0 %v3485
      %v3616 = vpop.f32.mrb[0].mxu0
      %v3617 = vadd.f32 0.0, %v3616
      %v3618 = vpop.f32.mrb[0].mxu0
      %3619 = vmatprep.mubr.f32.mxu0 0.0
      %3620 = vmatmul.mubr.f32.gmra.mrb[0].mxu0 %v3486
      %v3621 = vpop.f32.mrb[0].mxu0
      %v3622 = vadd.f32 0.0, %v3621
      %v3623 = vpop.f32.mrb[0].mxu0
      %3624 = vmatprep.mubr.f32.mxu0 0.0
      %3625 = vmatmul.mubr.f32.gmra.mrb[0].mxu0 %v3487
      %v3626 = vpop.f32.mrb[0].mxu0
      %v3627 = vadd.f32 0.0, %v3626
      %v3628 = vpop.f32.mrb[0].mxu0
      %3629 = vmatprep.mubr.f32.mxu0 0.0
      %3630 = vmatmul.mubr.f32.gmra.mrb[0].mxu0 %v3488
      %v3631 = vpop.f32.mrb[0].mxu0
      %v3632 = vadd.f32 0.0, %v3631
      %v3633 = vpop.f32.mrb[0].mxu0
      %3634 = vmatprep.mubr.f32.mxu0 0.0
      %3635 = vmatmul.mubr.f32.gmra.mrb[0].mxu0 %v3489
      %v3636 = vpop.f32.mrb[0].mxu0
      %v3637 = vadd.f32 0.0, %v3636
      %v3638 = vpop.f32.mrb[0].mxu0
      %3639 = vmatprep.mubr.f32.mxu0 0.0
      %3640 = vmatmul.mubr.f32.gmra.mrb[0].mxu0 %v3490
      %v3641 = vpop.f32.mrb[0].mxu0
      %v3642 = vadd.f32 0.0, %v3641
      %v3643 = vpop.f32.mrb[0].mxu0
      %3644 = vmatprep.mubr.f32.mxu0 0.0
      %3645 = vmatmul.mubr.f32.gmra.mrb[0].mxu0 %v3491
      %v3646 = vpop.f32.mrb[0].mxu0
      %v3647 = vadd.f32 0.0, %v3646
      %v3648 = vpop.f32.mrb[0].mxu0
      %3649 = vmatprep.mubr.f32.mxu0 0.0
      %3650 = vmatmul.mubr.f32.gmra.mrb[0].mxu0 %v3492
      %v3651 = vpop.f32.mrb[0].mxu0
      %v3652 = vadd.f32 0.0, %v3651
      %v3653 = vpop.f32.mrb[0].mxu0
      %3654 = vdwg.mxu0
      %v3655 = vadd.f32 %v3461, %v3577
      %v3656 = vadd.f32 %v3462, %v3582
      %v3657 = vadd.f32 %v3463, %v3587
      %v3658 = vadd.f32 %v3464, %v3592
      %v3659 = vadd.f32 %v3465, %v3597
      %v3660 = vadd.f32 %v3466, %v3602
      %v3661 = vadd.f32 %v3467, %v3607
      %v3662 = vadd.f32 %v3468, %v3612
      %v3663 = vadd.f32 %v3469, %v3617
      %v3664 = vadd.f32 %v3470, %v3622
      %v3665 = vadd.f32 %v3471, %v3627
      %v3666 = vadd.f32 %v3472, %v3632
      %v3667 = vadd.f32 %v3473, %v3637
      %v3668 = vadd.f32 %v3474, %v3642
      %v3669 = vadd.f32 %v3475, %v3647
      %v3670 = vadd.f32 %v3476, %v3652
      %v3671 = vld [vmem:[%s2] sm:$0x1]
      %v3673 = vlaneseq
      %v3674 = vshrl.u32 %v3673, 7
      %v3675 = vsub.s32 0, %v3674
      %v3676 = vrot.slane %v3671, %v3675
      %v3678 = vadd.f32 %v3655, %v3676
      %v3679 = vadd.f32 %v3656, %v3676
      %v3680 = vadd.f32 %v3657, %v3676
      %v3681 = vadd.f32 %v3658, %v3676
      %v3682 = vadd.f32 %v3659, %v3676
      %v3683 = vadd.f32 %v3660, %v3676
      %v3684 = vadd.f32 %v3661, %v3676
      %v3685 = vadd.f32 %v3662, %v3676
      %v3686 = vadd.f32 %v3663, %v3676
      %v3687 = vadd.f32 %v3664, %v3676
      %v3688 = vadd.f32 %v3665, %v3676
      %v3689 = vadd.f32 %v3666, %v3676
      %v3690 = vadd.f32 %v3667, %v3676
      %v3691 = vadd.f32 %v3668, %v3676
      %v3692 = vadd.f32 %v3669, %v3676
      %v3693 = vadd.f32 %v3670, %v3676
      %3694 = vst [vmem:[%s204] sm:$0xff] %v3678
      %3695 = vst [vmem:[%s204 + $0x8] sm:$0xff] %v3679
      %3696 = vst [vmem:[%s204 + $0x10] sm:$0xff] %v3680
      %3697 = vst [vmem:[%s204 + $0x18] sm:$0xff] %v3681
      %3698 = vst [vmem:[%s204 + $0x20] sm:$0xff] %v3682
      %3699 = vst [vmem:[%s204 + $0x28] sm:$0xff] %v3683
      %3700 = vst [vmem:[%s204 + $0x30] sm:$0xff] %v3684
      %3701 = vst [vmem:[%s204 + $0x38] sm:$0xff] %v3685
      %3702 = vst [vmem:[%s204 + $0x40] sm:$0xff] %v3686
      %3703 = vst [vmem:[%s204 + $0x48] sm:$0xff] %v3687
      %3704 = vst [vmem:[%s204 + $0x50] sm:$0xff] %v3688
      %3705 = vst [vmem:[%s204 + $0x58] sm:$0xff] %v3689
      %3706 = vst [vmem:[%s204 + $0x60] sm:$0xff] %v3690
      %3707 = vst [vmem:[%s204 + $0x68] sm:$0xff] %v3691
      %3708 = vst [vmem:[%s204 + $0x70] sm:$0xff] %v3692
      %3709 = vst [vmem:[%s204 + $0x78] sm:$0xff] %v3693
      %s3710 = smul.u32 %s18, 2
      %s3711 = sadd.s32 %s3710, %s19
      %p3712 = scmp.lt.s32.totalorder %s3711, 3
      %s3713 = scalar_select %p3712, %s3711, 3
      %s3714 = smul.addr %s3713, 16
      %s3715 = smul.addr %s3714, 8
      %s3716 = scalar_lea.vmem %s3, %s3715
      // Predicated region
      $region33: #{_my_conv3d.1} parent=31 // pred_check
        %p3717 = pneg %p120
      $region34: #{_my_conv3d.1} parent=31 // pred_check_branch
        %3719 = sbr.rel (%p3717) target = $region36
      $region35: #{_my_conv3d.1} parent=31 // pred_region
        %s3720 = smul.u32 %s18, 2
        %s3721 = sadd.s32 %s3720, %s19
      $region36: #{_my_conv3d.1} parent=31 // pred_fallthru
        _
    $region32: #{_my_conv3d.1} parent=5 // pred_fallthru
      _
    %p3722 = scmp.le.s32.totalorder 2, %s9
    // Predicated region
    $region37: #{_my_conv3d.1} parent=5 // pred_check
      %p3723 = pneg %p3722
    $region38: #{_my_conv3d.1} parent=5 // pred_check_branch
      %3725 = sbr.rel (%p3723) target = $region40
    $region39: #{_my_conv3d.1} parent=5 // pred_region
      %s3726 = ssub.s32 %s9, 2
      // Predicated region
      $region41: #{_my_conv3d.1} parent=39 // pred_check
        %p3727 = pneg %p126
      $region42: #{_my_conv3d.1} parent=39 // pred_check_branch
        %3729 = sbr.rel (%p3727) target = $region44
      $region43: #{_my_conv3d.1} parent=39 // pred_region
        %s3730 = smul.u32 %s20, 2
        %s3731 = sadd.s32 %s3730, %s21
        %p3732 = scmp.lt.s32.totalorder %s3731, 3
        %s3733 = scalar_select %p3732, %s3731, 3
        %s3734 = smul.addr %s3733, 16
        %s3735 = smul.addr %s3734, 8
        %s3736 = scalar_lea.vmem %s3, %s3735
      $region44: #{_my_conv3d.1} parent=39 // pred_fallthru
        _
    $region40: #{_my_conv3d.1} parent=5 // pred_fallthru
      _
  $region6: #{_my_conv3d.1} parent=0 // loop_footer
    %s13 = sadd.s32 1, %s9
  $region7: #{_my_conv3d.1} parent=0 // loop_footer_branch
    %8 = sbr.rel target = $region3
  $region8: #{_my_conv3d.1} parent=0 // loop_exit
    _

</llo_original>
